<compile_context>
chip_gen: v5e
topology: v5e:2x2
jax: 0.10.0
libtpu: 0.0.40
codegen_flags: <defaults>
</compile_context>

<pallas_src>
from functools import partial

import jax
import jax.numpy as jnp
from jax import lax
from jax.experimental import pallas as pl
from jax.experimental.pallas import tpu as pltpu


# --------------------------- fused LSTM + head kernel ------------------------
def _lstm_head_kernel(classes, ids_ref, wih_ref, whh_ref, b_ref,
                      wfc_ref, bfc_ref, o_ref, xp_ref):
    # ids_ref: (B, T) int32 in SMEM (scalar prefetch)
    # wih_ref: (Cp, 4*Hp) f32   input->gates weights, gate order [i, f, g, o]
    # whh_ref: (Hp, 4*Hp) bf16  hidden->gates weights
    # b_ref:   (1, 4*Hp)  f32   combined b_ih + b_hh
    # wfc_ref: (Hp, Wc)   bf16  classifier weights, zero-padded to 128 lanes
    # bfc_ref: (1, Wc)    f32   classifier bias, zero-padded
    # o_ref:   (1, Bb, Wc) f32  lane-dense log-prob block for this batch tile
    # xp_ref:  (T, Bb, 4*Hp) f32 VMEM scratch for the gathered input projections
    T, Bb, _ = xp_ref.shape
    Hp = whh_ref.shape[0]
    base = pl.program_id(0) * Bb
    bias = b_ref[...]                                     # (1, 4*Hp)

    # ---- Stage 1: one-hot input projection as SMEM-indexed row gathers -------
    # xp[t, b, :] = w_ih[ids[b, t], :] + (b_ih + b_hh)
    for t in range(T):
        for b in range(Bb):
            idx = ids_ref[base + b, t]
            row = wih_ref[pl.ds(idx, 1), :]               # (1, 4*Hp) dynamic row
            xp_ref[t, pl.ds(b, 1), :] = row + bias

    # ---- Stage 2: T-step LSTM recurrence, state (h, c) kept in vregs ---------
    def sig(v):
        # exp on the EUP + approx reciprocal on the EUP -> frees VALU slots.
        return pl.reciprocal(1.0 + jnp.exp(-v), approx=True)

    h = jnp.zeros((Bb, Hp), jnp.float32)
    c = jnp.zeros((Bb, Hp), jnp.float32)
    for t in range(T):                                    # T static -> unrolled
        gates = xp_ref[t] + jnp.dot(h.astype(jnp.bfloat16), whh_ref[...],
                                    preferred_element_type=jnp.float32)
        i = sig(gates[:, 0 * Hp:1 * Hp])
        f = sig(gates[:, 1 * Hp:2 * Hp])
        g = jnp.tanh(gates[:, 2 * Hp:3 * Hp])
        o = sig(gates[:, 3 * Hp:4 * Hp])
        c = f * c + i * g
        h = o * jnp.tanh(c)

    # ---- Stage 3: classifier + masked log_softmax, lane-dense 128-wide store --
    logits = jnp.dot(h.astype(jnp.bfloat16), wfc_ref[...],
                     preferred_element_type=jnp.float32) + bfc_ref[...]
    lane = lax.broadcasted_iota(jnp.int32, logits.shape, 1)
    logits = jnp.where(lane < classes, logits, -1e30)     # softmax over real classes only
    m = jnp.max(logits, axis=-1, keepdims=True)
    z = logits - m
    logp = z - jnp.log(jnp.sum(jnp.exp(z), axis=-1, keepdims=True))
    o_ref[0] = logp.astype(o_ref.dtype)                   # full 128-lane store


# ------------------------------- wrapper --------------------------------------
def _num_parallel_blocks(batch):
    """Grid sized to TensorCores: 2 blocks on v7x / megacore parts, else 1."""
    try:
        kind = jax.devices()[0].device_kind.lower()
    except Exception:
        kind = ""
    cores = 2 if any(tag in kind for tag in ("v7", "7x", "v4", "v5p")) else 1
    if batch % cores != 0:
        cores = 1
    return max(1, min(cores, batch))


@partial(jax.jit, static_argnames=("classes", "num_blocks"))
def smallchar_rnn_forward(params, ids, classes=4, num_blocks=1):
    """Forward pass. `ids` is the (B, L) int32 character-id sequence (the
    character one-hot input of the PyTorch module, expressed by index)."""
    B, L = ids.shape
    Cp = params["w_ih"].shape[0]
    Hp = params["w_hh"].shape[0]
    Wc = params["w_fc"].shape[1]            # lane-padded classifier width (128)
    G = num_blocks
    assert B % G == 0, (B, G)
    Bb = B // G

    out = pl.pallas_call(
        partial(_lstm_head_kernel, classes),
        out_shape=jax.ShapeDtypeStruct((G, Bb, Wc), jnp.float32),
        grid_spec=pltpu.PrefetchScalarGridSpec(
            num_scalar_prefetch=1,
            grid=(G,),
            in_specs=[
                pl.BlockSpec((Cp, 4 * Hp), lambda g, ids_ref: (0, 0)),
                pl.BlockSpec((Hp, 4 * Hp), lambda g, ids_ref: (0, 0)),
                pl.BlockSpec((1, 4 * Hp), lambda g, ids_ref: (0, 0)),
                pl.BlockSpec((Hp, Wc), lambda g, ids_ref: (0, 0)),
                pl.BlockSpec((1, Wc), lambda g, ids_ref: (0, 0)),
            ],
            out_specs=pl.BlockSpec((1, Bb, Wc), lambda g, ids_ref: (g, 0, 0)),
            scratch_shapes=[pltpu.VMEM((L, Bb, 4 * Hp), jnp.float32)],
        ),
        compiler_params=pltpu.CompilerParams(
            dimension_semantics=("parallel",)),
    )(ids.astype(jnp.int32), params["w_ih"], params["w_hh"], params["b"],
      params["w_fc"], params["b_fc"])
    return out.reshape(B, Wc)[:, :classes]


def smallchar_rnn_forward_from_onehot(params, x, classes=4, num_blocks=1):
    """Accepts the PyTorch-layout one-hot input (B, char_size, L)."""
    ids = jnp.argmax(x, axis=1).astype(jnp.int32)          # (B, L)
    return smallchar_rnn_forward(params, ids, classes=classes,
                                 num_blocks=num_blocks)


# --------------------------------- params -------------------------------------
def init_params(key, char_size=69, hidden=100, classes=4, cp=128, hp=128, wc=128):
    """Random params in PyTorch layout (`raw`) plus the padded kernel layout.

    Padding is explicit zeros, so padded hidden/cell lanes stay exactly zero and
    the recurrence matches the unpadded one (up to bf16 MXU-operand rounding).
    """
    ks = jax.random.split(key, 6)
    lim = 1.0 / float(hidden) ** 0.5

    def u(k, shape):
        return jax.random.uniform(k, shape, jnp.float32, -lim, lim)

    raw = {
        "w_ih": u(ks[0], (4 * hidden, char_size)),   # gate order [i, f, g, o]
        "w_hh": u(ks[1], (4 * hidden, hidden)),
        "b_ih": u(ks[2], (4 * hidden,)),
        "b_hh": u(ks[3], (4 * hidden,)),
        "w_fc": u(ks[4], (classes, hidden)),
        "b_fc": u(ks[5], (classes,)),
    }

    wih_p = jnp.zeros((cp, 4 * hp), jnp.float32)
    whh_p = jnp.zeros((hp, 4 * hp), jnp.float32)
    b_p = jnp.zeros((1, 4 * hp), jnp.float32)
    for g in range(4):
        wih_p = wih_p.at[:char_size, g * hp:g * hp + hidden].set(
            raw["w_ih"][g * hidden:(g + 1) * hidden, :].T)
        whh_p = whh_p.at[:hidden, g * hp:g * hp + hidden].set(
            raw["w_hh"][g * hidden:(g + 1) * hidden, :].T)
        b_p = b_p.at[0, g * hp:g * hp + hidden].set(
            raw["b_ih"][g * hidden:(g + 1) * hidden]
            + raw["b_hh"][g * hidden:(g + 1) * hidden])
    wfc_p = jnp.zeros((hp, wc), jnp.float32).at[:hidden, :classes].set(raw["w_fc"].T)
    bfc_p = jnp.zeros((1, wc), jnp.float32).at[0, :classes].set(raw["b_fc"])

    params = {
        "w_ih": wih_p,                          # f32: gather source (no MXU use)
        "w_hh": whh_p.astype(jnp.bfloat16),     # bf16 MXU operand
        "b": b_p,
        "w_fc": wfc_p.astype(jnp.bfloat16),     # bf16 MXU operand
        "b_fc": bfc_p,
    }
    return params, raw


# ------------------------------ pure-JAX reference ----------------------------
def reference_forward(raw, x):
    # Mirrors the PyTorch forward exactly (unpadded f32 weights, HIGHEST precision).
    B, C, L = x.shape
    xs = jnp.transpose(x, (2, 0, 1))                     # (L, B, C)
    H = raw["w_hh"].shape[1]

    def cell(carry, xt):
        h, c = carry
        z = (jnp.dot(xt, raw["w_ih"].T, precision=lax.Precision.HIGHEST)
             + raw["b_ih"]
             + jnp.dot(h, raw["w_hh"].T, precision=lax.Precision.HIGHEST)
             + raw["b_hh"])
        i, f, g, o = jnp.split(z, 4, axis=-1)
        i = jax.nn.sigmoid(i)
        f = jax.nn.sigmoid(f)
        g = jnp.tanh(g)
        o = jax.nn.sigmoid(o)
        c = f * c + i * g
        h = o * jnp.tanh(c)
        return (h, c), None

    h0 = jnp.zeros((B, H), jnp.float32)
    c0 = jnp.zeros((B, H), jnp.float32)
    (h, _), _ = lax.scan(cell, (h0, c0), xs)
    logits = jnp.dot(h, raw["w_fc"].T,
                     precision=lax.Precision.HIGHEST) + raw["b_fc"]
    return jax.nn.log_softmax(logits, axis=-1)


# ----------------------------------- main --------------------------------------
if __name__ == "__main__":
    B, char_size, L = 2, 69, 16          # small shapes consistent with the module
    hidden, classes = 100, 4             # module defaults (unidirectional, 1 layer)

    key = jax.random.PRNGKey(0)
    pkey, ikey = jax.random.split(key)
    params, raw = init_params(pkey, char_size=char_size,
                              hidden=hidden, classes=classes)

    # Character-id sequence and its one-hot PyTorch-layout counterpart (B, C, L).
    ids = jax.random.randint(ikey, (B, L), 0, char_size, dtype=jnp.int32)
    x = jnp.transpose(jax.nn.one_hot(ids, char_size, dtype=jnp.float32), (0, 2, 1))

    nb = _num_parallel_blocks(B)
    logp = smallchar_rnn_forward(params, ids, classes=classes, num_blocks=nb)
    jax.block_until_ready(logp)

    assert logp.shape == (B, classes), logp.shape
    assert bool(jnp.all(jnp.isfinite(logp)))
    # log_softmax rows should exponentiate-sum to ~1.
    assert bool(jnp.all(jnp.abs(jnp.sum(jnp.exp(logp), axis=-1) - 1.0) < 1e-4))
    # Match the pure-JAX (PyTorch-equivalent) f32 LSTM reference.  Tolerance is
    # loosened (2e-2) because the kernel uses bf16 MXU operands + approx recip.
    ref = reference_forward(raw, x)
    assert bool(jnp.all(jnp.abs(logp - ref) < 2e-2)), (logp, ref)

    print("KERNEL_OK")
</pallas_src>

<mosaic_0001>
module attributes {stable_mosaic.version = 11 : i64} {
  func.func @_lstm_head_kernel(%arg0: i32, %arg1: memref<2x16xi32, #tpu.memory_space<smem>>, %arg2: memref<128x512xf32, #tpu.memory_space<vmem>>, %arg3: memref<128x512xbf16, #tpu.memory_space<vmem>>, %arg4: memref<1x512xf32, #tpu.memory_space<vmem>>, %arg5: memref<128x128xbf16, #tpu.memory_space<vmem>>, %arg6: memref<1x128xf32, #tpu.memory_space<vmem>>, %arg7: memref<1x2x128xf32, #tpu.memory_space<vmem>>, %arg8: memref<16x2x512xf32, #tpu.memory_space<vmem>>) attributes {dimension_semantics = [#tpu.dimension_semantics<parallel>], iteration_bounds = array<i64: 1>, scalar_prefetch = 1 : i64, scratch_operands = 1 : i64, tpu.core_type = #tpu.core_type<tc>, window_params = [{pipeline_mode = #tpu.pipeline_mode<synchronous>, transform_indices = @transform_0, window_bounds = array<i64: 128, 512>}, {pipeline_mode = #tpu.pipeline_mode<synchronous>, transform_indices = @transform_1, window_bounds = array<i64: 128, 512>}, {pipeline_mode = #tpu.pipeline_mode<synchronous>, transform_indices = @transform_2, window_bounds = array<i64: 1, 512>}, {pipeline_mode = #tpu.pipeline_mode<synchronous>, transform_indices = @transform_3, window_bounds = array<i64: 128, 128>}, {pipeline_mode = #tpu.pipeline_mode<synchronous>, transform_indices = @transform_4, window_bounds = array<i64: 1, 128>}, {transform_indices = @transform_5, window_bounds = array<i64: 1, 2, 128>}]} {
    %c2_i32 = arith.constant 2 : i32
    %0 = arith.muli %arg0, %c2_i32 : i32
    %c0 = arith.constant 0 : index
    %c0_0 = arith.constant 0 : index
    %1 = vector.load %arg4[%c0, %c0_0] : memref<1x512xf32, #tpu.memory_space<vmem>>, vector<1x512xf32>
    %c0_i32 = arith.constant 0 : i32
    %2 = arith.addi %0, %c0_i32 : i32
    %3 = arith.index_cast %2 : i32 to index
    %c0_1 = arith.constant 0 : index
    %4 = memref.load %arg1[%3, %c0_1] : memref<2x16xi32, #tpu.memory_space<smem>>
    %5 = arith.index_cast %4 : i32 to index
    %c0_2 = arith.constant 0 : index
    %6 = vector.load %arg2[%5, %c0_2] : memref<128x512xf32, #tpu.memory_space<vmem>>, vector<1x512xf32>
    %7 = arith.addf %6, %1 : vector<1x512xf32>
    %c0_3 = arith.constant 0 : index
    %c0_4 = arith.constant 0 : index
    %c0_5 = arith.constant 0 : index
    %8 = vector.load %arg8[%c0_3, %c0_4, %c0_5] : memref<16x2x512xf32, #tpu.memory_space<vmem>>, vector<1x1x512xf32>
    %9 = vector.shape_cast %8 : vector<1x1x512xf32> to vector<1x512xf32>
    %10 = vector.shape_cast %7 : vector<1x512xf32> to vector<1x1x512xf32>
    tpu.vector_store %arg8[%c0_3, %c0_4, %c0_5], %10 {strides = array<i32>} : memref<16x2x512xf32, #tpu.memory_space<vmem>>, vector<1x1x512xf32>,
    %c1_i32 = arith.constant 1 : i32
    %11 = arith.addi %0, %c1_i32 : i32
    %12 = arith.index_cast %11 : i32 to index
    %c0_6 = arith.constant 0 : index
    %13 = memref.load %arg1[%12, %c0_6] : memref<2x16xi32, #tpu.memory_space<smem>>
    %14 = arith.index_cast %13 : i32 to index
    %c0_7 = arith.constant 0 : index
    %15 = vector.load %arg2[%14, %c0_7] : memref<128x512xf32, #tpu.memory_space<vmem>>, vector<1x512xf32>
    %16 = arith.addf %15, %1 : vector<1x512xf32>
    %c0_8 = arith.constant 0 : index
    %c1 = arith.constant 1 : index
    %c0_9 = arith.constant 0 : index
    %17 = vector.load %arg8[%c0_8, %c1, %c0_9] : memref<16x2x512xf32, #tpu.memory_space<vmem>>, vector<1x1x512xf32>
    %18 = vector.shape_cast %17 : vector<1x1x512xf32> to vector<1x512xf32>
    %19 = vector.shape_cast %16 : vector<1x512xf32> to vector<1x1x512xf32>
    tpu.vector_store %arg8[%c0_8, %c1, %c0_9], %19 {strides = array<i32>} : memref<16x2x512xf32, #tpu.memory_space<vmem>>, vector<1x1x512xf32>,
    %c0_i32_10 = arith.constant 0 : i32
    %20 = arith.addi %0, %c0_i32_10 : i32
    %21 = arith.index_cast %20 : i32 to index
    %c1_11 = arith.constant 1 : index
    %22 = memref.load %arg1[%21, %c1_11] : memref<2x16xi32, #tpu.memory_space<smem>>
    %23 = arith.index_cast %22 : i32 to index
    %c0_12 = arith.constant 0 : index
    %24 = vector.load %arg2[%23, %c0_12] : memref<128x512xf32, #tpu.memory_space<vmem>>, vector<1x512xf32>
    %25 = arith.addf %24, %1 : vector<1x512xf32>
    %c1_13 = arith.constant 1 : index
    %c0_14 = arith.constant 0 : index
    %c0_15 = arith.constant 0 : index
    %26 = vector.load %arg8[%c1_13, %c0_14, %c0_15] : memref<16x2x512xf32, #tpu.memory_space<vmem>>, vector<1x1x512xf32>
    %27 = vector.shape_cast %26 : vector<1x1x512xf32> to vector<1x512xf32>
    %28 = vector.shape_cast %25 : vector<1x512xf32> to vector<1x1x512xf32>
    tpu.vector_store %arg8[%c1_13, %c0_14, %c0_15], %28 {strides = array<i32>} : memref<16x2x512xf32, #tpu.memory_space<vmem>>, vector<1x1x512xf32>,
    %c1_i32_16 = arith.constant 1 : i32
    %29 = arith.addi %0, %c1_i32_16 : i32
    %30 = arith.index_cast %29 : i32 to index
    %c1_17 = arith.constant 1 : index
    %31 = memref.load %arg1[%30, %c1_17] : memref<2x16xi32, #tpu.memory_space<smem>>
    %32 = arith.index_cast %31 : i32 to index
    %c0_18 = arith.constant 0 : index
    %33 = vector.load %arg2[%32, %c0_18] : memref<128x512xf32, #tpu.memory_space<vmem>>, vector<1x512xf32>
    %34 = arith.addf %33, %1 : vector<1x512xf32>
    %c1_19 = arith.constant 1 : index
    %c1_20 = arith.constant 1 : index
    %c0_21 = arith.constant 0 : index
    %35 = vector.load %arg8[%c1_19, %c1_20, %c0_21] : memref<16x2x512xf32, #tpu.memory_space<vmem>>, vector<1x1x512xf32>
    %36 = vector.shape_cast %35 : vector<1x1x512xf32> to vector<1x512xf32>
    %37 = vector.shape_cast %34 : vector<1x512xf32> to vector<1x1x512xf32>
    tpu.vector_store %arg8[%c1_19, %c1_20, %c0_21], %37 {strides = array<i32>} : memref<16x2x512xf32, #tpu.memory_space<vmem>>, vector<1x1x512xf32>,
    %c0_i32_22 = arith.constant 0 : i32
    %38 = arith.addi %0, %c0_i32_22 : i32
    %39 = arith.index_cast %38 : i32 to index
    %c2 = arith.constant 2 : index
    %40 = memref.load %arg1[%39, %c2] : memref<2x16xi32, #tpu.memory_space<smem>>
    %41 = arith.index_cast %40 : i32 to index
    %c0_23 = arith.constant 0 : index
    %42 = vector.load %arg2[%41, %c0_23] : memref<128x512xf32, #tpu.memory_space<vmem>>, vector<1x512xf32>
    %43 = arith.addf %42, %1 : vector<1x512xf32>
    %c2_24 = arith.constant 2 : index
    %c0_25 = arith.constant 0 : index
    %c0_26 = arith.constant 0 : index
    %44 = vector.load %arg8[%c2_24, %c0_25, %c0_26] : memref<16x2x512xf32, #tpu.memory_space<vmem>>, vector<1x1x512xf32>
    %45 = vector.shape_cast %44 : vector<1x1x512xf32> to vector<1x512xf32>
    %46 = vector.shape_cast %43 : vector<1x512xf32> to vector<1x1x512xf32>
    tpu.vector_store %arg8[%c2_24, %c0_25, %c0_26], %46 {strides = array<i32>} : memref<16x2x512xf32, #tpu.memory_space<vmem>>, vector<1x1x512xf32>,
    %c1_i32_27 = arith.constant 1 : i32
    %47 = arith.addi %0, %c1_i32_27 : i32
    %48 = arith.index_cast %47 : i32 to index
    %c2_28 = arith.constant 2 : index
    %49 = memref.load %arg1[%48, %c2_28] : memref<2x16xi32, #tpu.memory_space<smem>>
    %50 = arith.index_cast %49 : i32 to index
    %c0_29 = arith.constant 0 : index
    %51 = vector.load %arg2[%50, %c0_29] : memref<128x512xf32, #tpu.memory_space<vmem>>, vector<1x512xf32>
    %52 = arith.addf %51, %1 : vector<1x512xf32>
    %c2_30 = arith.constant 2 : index
    %c1_31 = arith.constant 1 : index
    %c0_32 = arith.constant 0 : index
    %53 = vector.load %arg8[%c2_30, %c1_31, %c0_32] : memref<16x2x512xf32, #tpu.memory_space<vmem>>, vector<1x1x512xf32>
    %54 = vector.shape_cast %53 : vector<1x1x512xf32> to vector<1x512xf32>
    %55 = vector.shape_cast %52 : vector<1x512xf32> to vector<1x1x512xf32>
    tpu.vector_store %arg8[%c2_30, %c1_31, %c0_32], %55 {strides = array<i32>} : memref<16x2x512xf32, #tpu.memory_space<vmem>>, vector<1x1x512xf32>,
    %c0_i32_33 = arith.constant 0 : i32
    %56 = arith.addi %0, %c0_i32_33 : i32
    %57 = arith.index_cast %56 : i32 to index
    %c3 = arith.constant 3 : index
    %58 = memref.load %arg1[%57, %c3] : memref<2x16xi32, #tpu.memory_space<smem>>
    %59 = arith.index_cast %58 : i32 to index
    %c0_34 = arith.constant 0 : index
    %60 = vector.load %arg2[%59, %c0_34] : memref<128x512xf32, #tpu.memory_space<vmem>>, vector<1x512xf32>
    %61 = arith.addf %60, %1 : vector<1x512xf32>
    %c3_35 = arith.constant 3 : index
    %c0_36 = arith.constant 0 : index
    %c0_37 = arith.constant 0 : index
    %62 = vector.load %arg8[%c3_35, %c0_36, %c0_37] : memref<16x2x512xf32, #tpu.memory_space<vmem>>, vector<1x1x512xf32>
    %63 = vector.shape_cast %62 : vector<1x1x512xf32> to vector<1x512xf32>
    %64 = vector.shape_cast %61 : vector<1x512xf32> to vector<1x1x512xf32>
    tpu.vector_store %arg8[%c3_35, %c0_36, %c0_37], %64 {strides = array<i32>} : memref<16x2x512xf32, #tpu.memory_space<vmem>>, vector<1x1x512xf32>,
    %c1_i32_38 = arith.constant 1 : i32
    %65 = arith.addi %0, %c1_i32_38 : i32
    %66 = arith.index_cast %65 : i32 to index
    %c3_39 = arith.constant 3 : index
    %67 = memref.load %arg1[%66, %c3_39] : memref<2x16xi32, #tpu.memory_space<smem>>
    %68 = arith.index_cast %67 : i32 to index
    %c0_40 = arith.constant 0 : index
    %69 = vector.load %arg2[%68, %c0_40] : memref<128x512xf32, #tpu.memory_space<vmem>>, vector<1x512xf32>
    %70 = arith.addf %69, %1 : vector<1x512xf32>
    %c3_41 = arith.constant 3 : index
    %c1_42 = arith.constant 1 : index
    %c0_43 = arith.constant 0 : index
    %71 = vector.load %arg8[%c3_41, %c1_42, %c0_43] : memref<16x2x512xf32, #tpu.memory_space<vmem>>, vector<1x1x512xf32>
    %72 = vector.shape_cast %71 : vector<1x1x512xf32> to vector<1x512xf32>
    %73 = vector.shape_cast %70 : vector<1x512xf32> to vector<1x1x512xf32>
    tpu.vector_store %arg8[%c3_41, %c1_42, %c0_43], %73 {strides = array<i32>} : memref<16x2x512xf32, #tpu.memory_space<vmem>>, vector<1x1x512xf32>,
    %c0_i32_44 = arith.constant 0 : i32
    %74 = arith.addi %0, %c0_i32_44 : i32
    %75 = arith.index_cast %74 : i32 to index
    %c4 = arith.constant 4 : index
    %76 = memref.load %arg1[%75, %c4] : memref<2x16xi32, #tpu.memory_space<smem>>
    %77 = arith.index_cast %76 : i32 to index
    %c0_45 = arith.constant 0 : index
    %78 = vector.load %arg2[%77, %c0_45] : memref<128x512xf32, #tpu.memory_space<vmem>>, vector<1x512xf32>
    %79 = arith.addf %78, %1 : vector<1x512xf32>
    %c4_46 = arith.constant 4 : index
    %c0_47 = arith.constant 0 : index
    %c0_48 = arith.constant 0 : index
    %80 = vector.load %arg8[%c4_46, %c0_47, %c0_48] : memref<16x2x512xf32, #tpu.memory_space<vmem>>, vector<1x1x512xf32>
    %81 = vector.shape_cast %80 : vector<1x1x512xf32> to vector<1x512xf32>
    %82 = vector.shape_cast %79 : vector<1x512xf32> to vector<1x1x512xf32>
    tpu.vector_store %arg8[%c4_46, %c0_47, %c0_48], %82 {strides = array<i32>} : memref<16x2x512xf32, #tpu.memory_space<vmem>>, vector<1x1x512xf32>,
    %c1_i32_49 = arith.constant 1 : i32
    %83 = arith.addi %0, %c1_i32_49 : i32
    %84 = arith.index_cast %83 : i32 to index
    %c4_50 = arith.constant 4 : index
    %85 = memref.load %arg1[%84, %c4_50] : memref<2x16xi32, #tpu.memory_space<smem>>
    %86 = arith.index_cast %85 : i32 to index
    %c0_51 = arith.constant 0 : index
    %87 = vector.load %arg2[%86, %c0_51] : memref<128x512xf32, #tpu.memory_space<vmem>>, vector<1x512xf32>
    %88 = arith.addf %87, %1 : vector<1x512xf32>
    %c4_52 = arith.constant 4 : index
    %c1_53 = arith.constant 1 : index
    %c0_54 = arith.constant 0 : index
    %89 = vector.load %arg8[%c4_52, %c1_53, %c0_54] : memref<16x2x512xf32, #tpu.memory_space<vmem>>, vector<1x1x512xf32>
    %90 = vector.shape_cast %89 : vector<1x1x512xf32> to vector<1x512xf32>
    %91 = vector.shape_cast %88 : vector<1x512xf32> to vector<1x1x512xf32>
    tpu.vector_store %arg8[%c4_52, %c1_53, %c0_54], %91 {strides = array<i32>} : memref<16x2x512xf32, #tpu.memory_space<vmem>>, vector<1x1x512xf32>,
    %c0_i32_55 = arith.constant 0 : i32
    %92 = arith.addi %0, %c0_i32_55 : i32
    %93 = arith.index_cast %92 : i32 to index
    %c5 = arith.constant 5 : index
    %94 = memref.load %arg1[%93, %c5] : memref<2x16xi32, #tpu.memory_space<smem>>
    %95 = arith.index_cast %94 : i32 to index
    %c0_56 = arith.constant 0 : index
    %96 = vector.load %arg2[%95, %c0_56] : memref<128x512xf32, #tpu.memory_space<vmem>>, vector<1x512xf32>
    %97 = arith.addf %96, %1 : vector<1x512xf32>
    %c5_57 = arith.constant 5 : index
    %c0_58 = arith.constant 0 : index
    %c0_59 = arith.constant 0 : index
    %98 = vector.load %arg8[%c5_57, %c0_58, %c0_59] : memref<16x2x512xf32, #tpu.memory_space<vmem>>, vector<1x1x512xf32>
    %99 = vector.shape_cast %98 : vector<1x1x512xf32> to vector<1x512xf32>
    %100 = vector.shape_cast %97 : vector<1x512xf32> to vector<1x1x512xf32>
    tpu.vector_store %arg8[%c5_57, %c0_58, %c0_59], %100 {strides = array<i32>} : memref<16x2x512xf32, #tpu.memory_space<vmem>>, vector<1x1x512xf32>,
    %c1_i32_60 = arith.constant 1 : i32
    %101 = arith.addi %0, %c1_i32_60 : i32
    %102 = arith.index_cast %101 : i32 to index
    %c5_61 = arith.constant 5 : index
    %103 = memref.load %arg1[%102, %c5_61] : memref<2x16xi32, #tpu.memory_space<smem>>
    %104 = arith.index_cast %103 : i32 to index
    %c0_62 = arith.constant 0 : index
    %105 = vector.load %arg2[%104, %c0_62] : memref<128x512xf32, #tpu.memory_space<vmem>>, vector<1x512xf32>
    %106 = arith.addf %105, %1 : vector<1x512xf32>
    %c5_63 = arith.constant 5 : index
    %c1_64 = arith.constant 1 : index
    %c0_65 = arith.constant 0 : index
    %107 = vector.load %arg8[%c5_63, %c1_64, %c0_65] : memref<16x2x512xf32, #tpu.memory_space<vmem>>, vector<1x1x512xf32>
    %108 = vector.shape_cast %107 : vector<1x1x512xf32> to vector<1x512xf32>
    %109 = vector.shape_cast %106 : vector<1x512xf32> to vector<1x1x512xf32>
    tpu.vector_store %arg8[%c5_63, %c1_64, %c0_65], %109 {strides = array<i32>} : memref<16x2x512xf32, #tpu.memory_space<vmem>>, vector<1x1x512xf32>,
    %c0_i32_66 = arith.constant 0 : i32
    %110 = arith.addi %0, %c0_i32_66 : i32
    %111 = arith.index_cast %110 : i32 to index
    %c6 = arith.constant 6 : index
    %112 = memref.load %arg1[%111, %c6] : memref<2x16xi32, #tpu.memory_space<smem>>
    %113 = arith.index_cast %112 : i32 to index
    %c0_67 = arith.constant 0 : index
    %114 = vector.load %arg2[%113, %c0_67] : memref<128x512xf32, #tpu.memory_space<vmem>>, vector<1x512xf32>
    %115 = arith.addf %114, %1 : vector<1x512xf32>
    %c6_68 = arith.constant 6 : index
    %c0_69 = arith.constant 0 : index
    %c0_70 = arith.constant 0 : index
    %116 = vector.load %arg8[%c6_68, %c0_69, %c0_70] : memref<16x2x512xf32, #tpu.memory_space<vmem>>, vector<1x1x512xf32>
    %117 = vector.shape_cast %116 : vector<1x1x512xf32> to vector<1x512xf32>
    %118 = vector.shape_cast %115 : vector<1x512xf32> to vector<1x1x512xf32>
    tpu.vector_store %arg8[%c6_68, %c0_69, %c0_70], %118 {strides = array<i32>} : memref<16x2x512xf32, #tpu.memory_space<vmem>>, vector<1x1x512xf32>,
    %c1_i32_71 = arith.constant 1 : i32
    %119 = arith.addi %0, %c1_i32_71 : i32
    %120 = arith.index_cast %119 : i32 to index
    %c6_72 = arith.constant 6 : index
    %121 = memref.load %arg1[%120, %c6_72] : memref<2x16xi32, #tpu.memory_space<smem>>
    %122 = arith.index_cast %121 : i32 to index
    %c0_73 = arith.constant 0 : index
    %123 = vector.load %arg2[%122, %c0_73] : memref<128x512xf32, #tpu.memory_space<vmem>>, vector<1x512xf32>
    %124 = arith.addf %123, %1 : vector<1x512xf32>
    %c6_74 = arith.constant 6 : index
    %c1_75 = arith.constant 1 : index
    %c0_76 = arith.constant 0 : index
    %125 = vector.load %arg8[%c6_74, %c1_75, %c0_76] : memref<16x2x512xf32, #tpu.memory_space<vmem>>, vector<1x1x512xf32>
    %126 = vector.shape_cast %125 : vector<1x1x512xf32> to vector<1x512xf32>
    %127 = vector.shape_cast %124 : vector<1x512xf32> to vector<1x1x512xf32>
    tpu.vector_store %arg8[%c6_74, %c1_75, %c0_76], %127 {strides = array<i32>} : memref<16x2x512xf32, #tpu.memory_space<vmem>>, vector<1x1x512xf32>,
    %c0_i32_77 = arith.constant 0 : i32
    %128 = arith.addi %0, %c0_i32_77 : i32
    %129 = arith.index_cast %128 : i32 to index
    %c7 = arith.constant 7 : index
    %130 = memref.load %arg1[%129, %c7] : memref<2x16xi32, #tpu.memory_space<smem>>
    %131 = arith.index_cast %130 : i32 to index
    %c0_78 = arith.constant 0 : index
    %132 = vector.load %arg2[%131, %c0_78] : memref<128x512xf32, #tpu.memory_space<vmem>>, vector<1x512xf32>
    %133 = arith.addf %132, %1 : vector<1x512xf32>
    %c7_79 = arith.constant 7 : index
    %c0_80 = arith.constant 0 : index
    %c0_81 = arith.constant 0 : index
    %134 = vector.load %arg8[%c7_79, %c0_80, %c0_81] : memref<16x2x512xf32, #tpu.memory_space<vmem>>, vector<1x1x512xf32>
    %135 = vector.shape_cast %134 : vector<1x1x512xf32> to vector<1x512xf32>
    %136 = vector.shape_cast %133 : vector<1x512xf32> to vector<1x1x512xf32>
    tpu.vector_store %arg8[%c7_79, %c0_80, %c0_81], %136 {strides = array<i32>} : memref<16x2x512xf32, #tpu.memory_space<vmem>>, vector<1x1x512xf32>,
    %c1_i32_82 = arith.constant 1 : i32
    %137 = arith.addi %0, %c1_i32_82 : i32
    %138 = arith.index_cast %137 : i32 to index
    %c7_83 = arith.constant 7 : index
    %139 = memref.load %arg1[%138, %c7_83] : memref<2x16xi32, #tpu.memory_space<smem>>
    %140 = arith.index_cast %139 : i32 to index
    %c0_84 = arith.constant 0 : index
    %141 = vector.load %arg2[%140, %c0_84] : memref<128x512xf32, #tpu.memory_space<vmem>>, vector<1x512xf32>
    %142 = arith.addf %141, %1 : vector<1x512xf32>
    %c7_85 = arith.constant 7 : index
    %c1_86 = arith.constant 1 : index
    %c0_87 = arith.constant 0 : index
    %143 = vector.load %arg8[%c7_85, %c1_86, %c0_87] : memref<16x2x512xf32, #tpu.memory_space<vmem>>, vector<1x1x512xf32>
    %144 = vector.shape_cast %143 : vector<1x1x512xf32> to vector<1x512xf32>
    %145 = vector.shape_cast %142 : vector<1x512xf32> to vector<1x1x512xf32>
    tpu.vector_store %arg8[%c7_85, %c1_86, %c0_87], %145 {strides = array<i32>} : memref<16x2x512xf32, #tpu.memory_space<vmem>>, vector<1x1x512xf32>,
    %c0_i32_88 = arith.constant 0 : i32
    %146 = arith.addi %0, %c0_i32_88 : i32
    %147 = arith.index_cast %146 : i32 to index
    %c8 = arith.constant 8 : index
    %148 = memref.load %arg1[%147, %c8] : memref<2x16xi32, #tpu.memory_space<smem>>
    %149 = arith.index_cast %148 : i32 to index
    %c0_89 = arith.constant 0 : index
    %150 = vector.load %arg2[%149, %c0_89] : memref<128x512xf32, #tpu.memory_space<vmem>>, vector<1x512xf32>
    %151 = arith.addf %150, %1 : vector<1x512xf32>
    %c8_90 = arith.constant 8 : index
    %c0_91 = arith.constant 0 : index
    %c0_92 = arith.constant 0 : index
    %152 = vector.load %arg8[%c8_90, %c0_91, %c0_92] : memref<16x2x512xf32, #tpu.memory_space<vmem>>, vector<1x1x512xf32>
    %153 = vector.shape_cast %152 : vector<1x1x512xf32> to vector<1x512xf32>
    %154 = vector.shape_cast %151 : vector<1x512xf32> to vector<1x1x512xf32>
    tpu.vector_store %arg8[%c8_90, %c0_91, %c0_92], %154 {strides = array<i32>} : memref<16x2x512xf32, #tpu.memory_space<vmem>>, vector<1x1x512xf32>,
    %c1_i32_93 = arith.constant 1 : i32
    %155 = arith.addi %0, %c1_i32_93 : i32
    %156 = arith.index_cast %155 : i32 to index
    %c8_94 = arith.constant 8 : index
    %157 = memref.load %arg1[%156, %c8_94] : memref<2x16xi32, #tpu.memory_space<smem>>
    %158 = arith.index_cast %157 : i32 to index
    %c0_95 = arith.constant 0 : index
    %159 = vector.load %arg2[%158, %c0_95] : memref<128x512xf32, #tpu.memory_space<vmem>>, vector<1x512xf32>
    %160 = arith.addf %159, %1 : vector<1x512xf32>
    %c8_96 = arith.constant 8 : index
    %c1_97 = arith.constant 1 : index
    %c0_98 = arith.constant 0 : index
    %161 = vector.load %arg8[%c8_96, %c1_97, %c0_98] : memref<16x2x512xf32, #tpu.memory_space<vmem>>, vector<1x1x512xf32>
    %162 = vector.shape_cast %161 : vector<1x1x512xf32> to vector<1x512xf32>
    %163 = vector.shape_cast %160 : vector<1x512xf32> to vector<1x1x512xf32>
    tpu.vector_store %arg8[%c8_96, %c1_97, %c0_98], %163 {strides = array<i32>} : memref<16x2x512xf32, #tpu.memory_space<vmem>>, vector<1x1x512xf32>,
    %c0_i32_99 = arith.constant 0 : i32
    %164 = arith.addi %0, %c0_i32_99 : i32
    %165 = arith.index_cast %164 : i32 to index
    %c9 = arith.constant 9 : index
    %166 = memref.load %arg1[%165, %c9] : memref<2x16xi32, #tpu.memory_space<smem>>
    %167 = arith.index_cast %166 : i32 to index
    %c0_100 = arith.constant 0 : index
    %168 = vector.load %arg2[%167, %c0_100] : memref<128x512xf32, #tpu.memory_space<vmem>>, vector<1x512xf32>
    %169 = arith.addf %168, %1 : vector<1x512xf32>
    %c9_101 = arith.constant 9 : index
    %c0_102 = arith.constant 0 : index
    %c0_103 = arith.constant 0 : index
    %170 = vector.load %arg8[%c9_101, %c0_102, %c0_103] : memref<16x2x512xf32, #tpu.memory_space<vmem>>, vector<1x1x512xf32>
    %171 = vector.shape_cast %170 : vector<1x1x512xf32> to vector<1x512xf32>
    %172 = vector.shape_cast %169 : vector<1x512xf32> to vector<1x1x512xf32>
    tpu.vector_store %arg8[%c9_101, %c0_102, %c0_103], %172 {strides = array<i32>} : memref<16x2x512xf32, #tpu.memory_space<vmem>>, vector<1x1x512xf32>,
    %c1_i32_104 = arith.constant 1 : i32
    %173 = arith.addi %0, %c1_i32_104 : i32
    %174 = arith.index_cast %173 : i32 to index
    %c9_105 = arith.constant 9 : index
    %175 = memref.load %arg1[%174, %c9_105] : memref<2x16xi32, #tpu.memory_space<smem>>
    %176 = arith.index_cast %175 : i32 to index
    %c0_106 = arith.constant 0 : index
    %177 = vector.load %arg2[%176, %c0_106] : memref<128x512xf32, #tpu.memory_space<vmem>>, vector<1x512xf32>
    %178 = arith.addf %177, %1 : vector<1x512xf32>
    %c9_107 = arith.constant 9 : index
    %c1_108 = arith.constant 1 : index
    %c0_109 = arith.constant 0 : index
    %179 = vector.load %arg8[%c9_107, %c1_108, %c0_109] : memref<16x2x512xf32, #tpu.memory_space<vmem>>, vector<1x1x512xf32>
    %180 = vector.shape_cast %179 : vector<1x1x512xf32> to vector<1x512xf32>
    %181 = vector.shape_cast %178 : vector<1x512xf32> to vector<1x1x512xf32>
    tpu.vector_store %arg8[%c9_107, %c1_108, %c0_109], %181 {strides = array<i32>} : memref<16x2x512xf32, #tpu.memory_space<vmem>>, vector<1x1x512xf32>,
    %c0_i32_110 = arith.constant 0 : i32
    %182 = arith.addi %0, %c0_i32_110 : i32
    %183 = arith.index_cast %182 : i32 to index
    %c10 = arith.constant 10 : index
    %184 = memref.load %arg1[%183, %c10] : memref<2x16xi32, #tpu.memory_space<smem>>
    %185 = arith.index_cast %184 : i32 to index
    %c0_111 = arith.constant 0 : index
    %186 = vector.load %arg2[%185, %c0_111] : memref<128x512xf32, #tpu.memory_space<vmem>>, vector<1x512xf32>
    %187 = arith.addf %186, %1 : vector<1x512xf32>
    %c10_112 = arith.constant 10 : index
    %c0_113 = arith.constant 0 : index
    %c0_114 = arith.constant 0 : index
    %188 = vector.load %arg8[%c10_112, %c0_113, %c0_114] : memref<16x2x512xf32, #tpu.memory_space<vmem>>, vector<1x1x512xf32>
    %189 = vector.shape_cast %188 : vector<1x1x512xf32> to vector<1x512xf32>
    %190 = vector.shape_cast %187 : vector<1x512xf32> to vector<1x1x512xf32>
    tpu.vector_store %arg8[%c10_112, %c0_113, %c0_114], %190 {strides = array<i32>} : memref<16x2x512xf32, #tpu.memory_space<vmem>>, vector<1x1x512xf32>,
    %c1_i32_115 = arith.constant 1 : i32
    %191 = arith.addi %0, %c1_i32_115 : i32
    %192 = arith.index_cast %191 : i32 to index
    %c10_116 = arith.constant 10 : index
    %193 = memref.load %arg1[%192, %c10_116] : memref<2x16xi32, #tpu.memory_space<smem>>
    %194 = arith.index_cast %193 : i32 to index
    %c0_117 = arith.constant 0 : index
    %195 = vector.load %arg2[%194, %c0_117] : memref<128x512xf32, #tpu.memory_space<vmem>>, vector<1x512xf32>
    %196 = arith.addf %195, %1 : vector<1x512xf32>
    %c10_118 = arith.constant 10 : index
    %c1_119 = arith.constant 1 : index
    %c0_120 = arith.constant 0 : index
    %197 = vector.load %arg8[%c10_118, %c1_119, %c0_120] : memref<16x2x512xf32, #tpu.memory_space<vmem>>, vector<1x1x512xf32>
    %198 = vector.shape_cast %197 : vector<1x1x512xf32> to vector<1x512xf32>
    %199 = vector.shape_cast %196 : vector<1x512xf32> to vector<1x1x512xf32>
    tpu.vector_store %arg8[%c10_118, %c1_119, %c0_120], %199 {strides = array<i32>} : memref<16x2x512xf32, #tpu.memory_space<vmem>>, vector<1x1x512xf32>,
    %c0_i32_121 = arith.constant 0 : i32
    %200 = arith.addi %0, %c0_i32_121 : i32
    %201 = arith.index_cast %200 : i32 to index
    %c11 = arith.constant 11 : index
    %202 = memref.load %arg1[%201, %c11] : memref<2x16xi32, #tpu.memory_space<smem>>
    %203 = arith.index_cast %202 : i32 to index
    %c0_122 = arith.constant 0 : index
    %204 = vector.load %arg2[%203, %c0_122] : memref<128x512xf32, #tpu.memory_space<vmem>>, vector<1x512xf32>
    %205 = arith.addf %204, %1 : vector<1x512xf32>
    %c11_123 = arith.constant 11 : index
    %c0_124 = arith.constant 0 : index
    %c0_125 = arith.constant 0 : index
    %206 = vector.load %arg8[%c11_123, %c0_124, %c0_125] : memref<16x2x512xf32, #tpu.memory_space<vmem>>, vector<1x1x512xf32>
    %207 = vector.shape_cast %206 : vector<1x1x512xf32> to vector<1x512xf32>
    %208 = vector.shape_cast %205 : vector<1x512xf32> to vector<1x1x512xf32>
    tpu.vector_store %arg8[%c11_123, %c0_124, %c0_125], %208 {strides = array<i32>} : memref<16x2x512xf32, #tpu.memory_space<vmem>>, vector<1x1x512xf32>,
    %c1_i32_126 = arith.constant 1 : i32
    %209 = arith.addi %0, %c1_i32_126 : i32
    %210 = arith.index_cast %209 : i32 to index
    %c11_127 = arith.constant 11 : index
    %211 = memref.load %arg1[%210, %c11_127] : memref<2x16xi32, #tpu.memory_space<smem>>
    %212 = arith.index_cast %211 : i32 to index
    %c0_128 = arith.constant 0 : index
    %213 = vector.load %arg2[%212, %c0_128] : memref<128x512xf32, #tpu.memory_space<vmem>>, vector<1x512xf32>
    %214 = arith.addf %213, %1 : vector<1x512xf32>
    %c11_129 = arith.constant 11 : index
    %c1_130 = arith.constant 1 : index
    %c0_131 = arith.constant 0 : index
    %215 = vector.load %arg8[%c11_129, %c1_130, %c0_131] : memref<16x2x512xf32, #tpu.memory_space<vmem>>, vector<1x1x512xf32>
    %216 = vector.shape_cast %215 : vector<1x1x512xf32> to vector<1x512xf32>
    %217 = vector.shape_cast %214 : vector<1x512xf32> to vector<1x1x512xf32>
    tpu.vector_store %arg8[%c11_129, %c1_130, %c0_131], %217 {strides = array<i32>} : memref<16x2x512xf32, #tpu.memory_space<vmem>>, vector<1x1x512xf32>,
    %c0_i32_132 = arith.constant 0 : i32
    %218 = arith.addi %0, %c0_i32_132 : i32
    %219 = arith.index_cast %218 : i32 to index
    %c12 = arith.constant 12 : index
    %220 = memref.load %arg1[%219, %c12] : memref<2x16xi32, #tpu.memory_space<smem>>
    %221 = arith.index_cast %220 : i32 to index
    %c0_133 = arith.constant 0 : index
    %222 = vector.load %arg2[%221, %c0_133] : memref<128x512xf32, #tpu.memory_space<vmem>>, vector<1x512xf32>
    %223 = arith.addf %222, %1 : vector<1x512xf32>
    %c12_134 = arith.constant 12 : index
    %c0_135 = arith.constant 0 : index
    %c0_136 = arith.constant 0 : index
    %224 = vector.load %arg8[%c12_134, %c0_135, %c0_136] : memref<16x2x512xf32, #tpu.memory_space<vmem>>, vector<1x1x512xf32>
    %225 = vector.shape_cast %224 : vector<1x1x512xf32> to vector<1x512xf32>
    %226 = vector.shape_cast %223 : vector<1x512xf32> to vector<1x1x512xf32>
    tpu.vector_store %arg8[%c12_134, %c0_135, %c0_136], %226 {strides = array<i32>} : memref<16x2x512xf32, #tpu.memory_space<vmem>>, vector<1x1x512xf32>,
    %c1_i32_137 = arith.constant 1 : i32
    %227 = arith.addi %0, %c1_i32_137 : i32
    %228 = arith.index_cast %227 : i32 to index
    %c12_138 = arith.constant 12 : index
    %229 = memref.load %arg1[%228, %c12_138] : memref<2x16xi32, #tpu.memory_space<smem>>
    %230 = arith.index_cast %229 : i32 to index
    %c0_139 = arith.constant 0 : index
    %231 = vector.load %arg2[%230, %c0_139] : memref<128x512xf32, #tpu.memory_space<vmem>>, vector<1x512xf32>
    %232 = arith.addf %231, %1 : vector<1x512xf32>
    %c12_140 = arith.constant 12 : index
    %c1_141 = arith.constant 1 : index
    %c0_142 = arith.constant 0 : index
    %233 = vector.load %arg8[%c12_140, %c1_141, %c0_142] : memref<16x2x512xf32, #tpu.memory_space<vmem>>, vector<1x1x512xf32>
    %234 = vector.shape_cast %233 : vector<1x1x512xf32> to vector<1x512xf32>
    %235 = vector.shape_cast %232 : vector<1x512xf32> to vector<1x1x512xf32>
    tpu.vector_store %arg8[%c12_140, %c1_141, %c0_142], %235 {strides = array<i32>} : memref<16x2x512xf32, #tpu.memory_space<vmem>>, vector<1x1x512xf32>,
    %c0_i32_143 = arith.constant 0 : i32
    %236 = arith.addi %0, %c0_i32_143 : i32
    %237 = arith.index_cast %236 : i32 to index
    %c13 = arith.constant 13 : index
    %238 = memref.load %arg1[%237, %c13] : memref<2x16xi32, #tpu.memory_space<smem>>
    %239 = arith.index_cast %238 : i32 to index
    %c0_144 = arith.constant 0 : index
    %240 = vector.load %arg2[%239, %c0_144] : memref<128x512xf32, #tpu.memory_space<vmem>>, vector<1x512xf32>
    %241 = arith.addf %240, %1 : vector<1x512xf32>
    %c13_145 = arith.constant 13 : index
    %c0_146 = arith.constant 0 : index
    %c0_147 = arith.constant 0 : index
    %242 = vector.load %arg8[%c13_145, %c0_146, %c0_147] : memref<16x2x512xf32, #tpu.memory_space<vmem>>, vector<1x1x512xf32>
    %243 = vector.shape_cast %242 : vector<1x1x512xf32> to vector<1x512xf32>
    %244 = vector.shape_cast %241 : vector<1x512xf32> to vector<1x1x512xf32>
    tpu.vector_store %arg8[%c13_145, %c0_146, %c0_147], %244 {strides = array<i32>} : memref<16x2x512xf32, #tpu.memory_space<vmem>>, vector<1x1x512xf32>,
    %c1_i32_148 = arith.constant 1 : i32
    %245 = arith.addi %0, %c1_i32_148 : i32
    %246 = arith.index_cast %245 : i32 to index
    %c13_149 = arith.constant 13 : index
    %247 = memref.load %arg1[%246, %c13_149] : memref<2x16xi32, #tpu.memory_space<smem>>
    %248 = arith.index_cast %247 : i32 to index
    %c0_150 = arith.constant 0 : index
    %249 = vector.load %arg2[%248, %c0_150] : memref<128x512xf32, #tpu.memory_space<vmem>>, vector<1x512xf32>
    %250 = arith.addf %249, %1 : vector<1x512xf32>
    %c13_151 = arith.constant 13 : index
    %c1_152 = arith.constant 1 : index
    %c0_153 = arith.constant 0 : index
    %251 = vector.load %arg8[%c13_151, %c1_152, %c0_153] : memref<16x2x512xf32, #tpu.memory_space<vmem>>, vector<1x1x512xf32>
    %252 = vector.shape_cast %251 : vector<1x1x512xf32> to vector<1x512xf32>
    %253 = vector.shape_cast %250 : vector<1x512xf32> to vector<1x1x512xf32>
    tpu.vector_store %arg8[%c13_151, %c1_152, %c0_153], %253 {strides = array<i32>} : memref<16x2x512xf32, #tpu.memory_space<vmem>>, vector<1x1x512xf32>,
    %c0_i32_154 = arith.constant 0 : i32
    %254 = arith.addi %0, %c0_i32_154 : i32
    %255 = arith.index_cast %254 : i32 to index
    %c14 = arith.constant 14 : index
    %256 = memref.load %arg1[%255, %c14] : memref<2x16xi32, #tpu.memory_space<smem>>
    %257 = arith.index_cast %256 : i32 to index
    %c0_155 = arith.constant 0 : index
    %258 = vector.load %arg2[%257, %c0_155] : memref<128x512xf32, #tpu.memory_space<vmem>>, vector<1x512xf32>
    %259 = arith.addf %258, %1 : vector<1x512xf32>
    %c14_156 = arith.constant 14 : index
    %c0_157 = arith.constant 0 : index
    %c0_158 = arith.constant 0 : index
    %260 = vector.load %arg8[%c14_156, %c0_157, %c0_158] : memref<16x2x512xf32, #tpu.memory_space<vmem>>, vector<1x1x512xf32>
    %261 = vector.shape_cast %260 : vector<1x1x512xf32> to vector<1x512xf32>
    %262 = vector.shape_cast %259 : vector<1x512xf32> to vector<1x1x512xf32>
    tpu.vector_store %arg8[%c14_156, %c0_157, %c0_158], %262 {strides = array<i32>} : memref<16x2x512xf32, #tpu.memory_space<vmem>>, vector<1x1x512xf32>,
    %c1_i32_159 = arith.constant 1 : i32
    %263 = arith.addi %0, %c1_i32_159 : i32
    %264 = arith.index_cast %263 : i32 to index
    %c14_160 = arith.constant 14 : index
    %265 = memref.load %arg1[%264, %c14_160] : memref<2x16xi32, #tpu.memory_space<smem>>
    %266 = arith.index_cast %265 : i32 to index
    %c0_161 = arith.constant 0 : index
    %267 = vector.load %arg2[%266, %c0_161] : memref<128x512xf32, #tpu.memory_space<vmem>>, vector<1x512xf32>
    %268 = arith.addf %267, %1 : vector<1x512xf32>
    %c14_162 = arith.constant 14 : index
    %c1_163 = arith.constant 1 : index
    %c0_164 = arith.constant 0 : index
    %269 = vector.load %arg8[%c14_162, %c1_163, %c0_164] : memref<16x2x512xf32, #tpu.memory_space<vmem>>, vector<1x1x512xf32>
    %270 = vector.shape_cast %269 : vector<1x1x512xf32> to vector<1x512xf32>
    %271 = vector.shape_cast %268 : vector<1x512xf32> to vector<1x1x512xf32>
    tpu.vector_store %arg8[%c14_162, %c1_163, %c0_164], %271 {strides = array<i32>} : memref<16x2x512xf32, #tpu.memory_space<vmem>>, vector<1x1x512xf32>,
    %c0_i32_165 = arith.constant 0 : i32
    %272 = arith.addi %0, %c0_i32_165 : i32
    %273 = arith.index_cast %272 : i32 to index
    %c15 = arith.constant 15 : index
    %274 = memref.load %arg1[%273, %c15] : memref<2x16xi32, #tpu.memory_space<smem>>
    %275 = arith.index_cast %274 : i32 to index
    %c0_166 = arith.constant 0 : index
    %276 = vector.load %arg2[%275, %c0_166] : memref<128x512xf32, #tpu.memory_space<vmem>>, vector<1x512xf32>
    %277 = arith.addf %276, %1 : vector<1x512xf32>
    %c15_167 = arith.constant 15 : index
    %c0_168 = arith.constant 0 : index
    %c0_169 = arith.constant 0 : index
    %278 = vector.load %arg8[%c15_167, %c0_168, %c0_169] : memref<16x2x512xf32, #tpu.memory_space<vmem>>, vector<1x1x512xf32>
    %279 = vector.shape_cast %278 : vector<1x1x512xf32> to vector<1x512xf32>
    %280 = vector.shape_cast %277 : vector<1x512xf32> to vector<1x1x512xf32>
    tpu.vector_store %arg8[%c15_167, %c0_168, %c0_169], %280 {strides = array<i32>} : memref<16x2x512xf32, #tpu.memory_space<vmem>>, vector<1x1x512xf32>,
    %c1_i32_170 = arith.constant 1 : i32
    %281 = arith.addi %0, %c1_i32_170 : i32
    %282 = arith.index_cast %281 : i32 to index
    %c15_171 = arith.constant 15 : index
    %283 = memref.load %arg1[%282, %c15_171] : memref<2x16xi32, #tpu.memory_space<smem>>
    %284 = arith.index_cast %283 : i32 to index
    %c0_172 = arith.constant 0 : index
    %285 = vector.load %arg2[%284, %c0_172] : memref<128x512xf32, #tpu.memory_space<vmem>>, vector<1x512xf32>
    %286 = arith.addf %285, %1 : vector<1x512xf32>
    %c15_173 = arith.constant 15 : index
    %c1_174 = arith.constant 1 : index
    %c0_175 = arith.constant 0 : index
    %287 = vector.load %arg8[%c15_173, %c1_174, %c0_175] : memref<16x2x512xf32, #tpu.memory_space<vmem>>, vector<1x1x512xf32>
    %288 = vector.shape_cast %287 : vector<1x1x512xf32> to vector<1x512xf32>
    %289 = vector.shape_cast %286 : vector<1x512xf32> to vector<1x1x512xf32>
    tpu.vector_store %arg8[%c15_173, %c1_174, %c0_175], %289 {strides = array<i32>} : memref<16x2x512xf32, #tpu.memory_space<vmem>>, vector<1x1x512xf32>,
    %cst = arith.constant 0.000000e+00 : f32
    %290 = vector.broadcast %cst : f32 to vector<2x128xf32>
    %cst_176 = arith.constant 0.000000e+00 : f32
    %291 = vector.broadcast %cst_176 : f32 to vector<2x128xf32>
    %c0_177 = arith.constant 0 : index
    %c0_178 = arith.constant 0 : index
    %c0_179 = arith.constant 0 : index
    %292 = vector.load %arg8[%c0_177, %c0_178, %c0_179] : memref<16x2x512xf32, #tpu.memory_space<vmem>>, vector<1x2x512xf32>
    %293 = vector.shape_cast %292 : vector<1x2x512xf32> to vector<2x512xf32>
    %294 = arith.truncf %290 : vector<2x128xf32> to vector<2x128xbf16>
    %c0_180 = arith.constant 0 : index
    %c0_181 = arith.constant 0 : index
    %295 = vector.load %arg3[%c0_180, %c0_181] : memref<128x512xbf16, #tpu.memory_space<vmem>>, vector<128x512xbf16>
    %cst_182 = arith.constant dense<0.000000e+00> : vector<2x512xf32>
    %296 = tpu.matmul %294, %295, %cst_182 {dimension_numbers = #tpu.dot_dimension_numbers<[1], [0], [0], [1], [0, 0, 1, 1], [], []>} : vector<2x128xbf16>, vector<128x512xbf16>, vector<2x512xf32> -> vector<2x512xf32>
    %297 = arith.addf %293, %296 : vector<2x512xf32>
    %298 = vector.extract_strided_slice %297 {offsets = [0, 0], sizes = [2, 128], strides = [1, 1]} : vector<2x512xf32> to vector<2x128xf32>
    %cst_183 = arith.constant 0.000000e+00 : f32
    %299 = vector.broadcast %cst_183 : f32 to vector<2x128xf32>
    %300 = arith.subf %299, %298 : vector<2x128xf32>
    %301 = math.exp %300 : vector<2x128xf32>
    %cst_184 = arith.constant 1.000000e+00 : f32
    %302 = vector.broadcast %cst_184 : f32 to vector<2x128xf32>
    %303 = arith.addf %302, %301 : vector<2x128xf32>
    %304 = tpu.reciprocal %303 {approx = true} : vector<2x128xf32> -> vector<2x128xf32>
    %305 = vector.extract_strided_slice %297 {offsets = [0, 128], sizes = [2, 128], strides = [1, 1]} : vector<2x512xf32> to vector<2x128xf32>
    %cst_185 = arith.constant 0.000000e+00 : f32
    %306 = vector.broadcast %cst_185 : f32 to vector<2x128xf32>
    %307 = arith.subf %306, %305 : vector<2x128xf32>
    %308 = math.exp %307 : vector<2x128xf32>
    %cst_186 = arith.constant 1.000000e+00 : f32
    %309 = vector.broadcast %cst_186 : f32 to vector<2x128xf32>
    %310 = arith.addf %309, %308 : vector<2x128xf32>
    %311 = tpu.reciprocal %310 {approx = true} : vector<2x128xf32> -> vector<2x128xf32>
    %312 = vector.extract_strided_slice %297 {offsets = [0, 256], sizes = [2, 128], strides = [1, 1]} : vector<2x512xf32> to vector<2x128xf32>
    %313 = math.tanh %312 : vector<2x128xf32>
    %314 = vector.extract_strided_slice %297 {offsets = [0, 384], sizes = [2, 128], strides = [1, 1]} : vector<2x512xf32> to vector<2x128xf32>
    %cst_187 = arith.constant 0.000000e+00 : f32
    %315 = vector.broadcast %cst_187 : f32 to vector<2x128xf32>
    %316 = arith.subf %315, %314 : vector<2x128xf32>
    %317 = math.exp %316 : vector<2x128xf32>
    %cst_188 = arith.constant 1.000000e+00 : f32
    %318 = vector.broadcast %cst_188 : f32 to vector<2x128xf32>
    %319 = arith.addf %318, %317 : vector<2x128xf32>
    %320 = tpu.reciprocal %319 {approx = true} : vector<2x128xf32> -> vector<2x128xf32>
    %321 = arith.mulf %311, %291 : vector<2x128xf32>
    %322 = arith.mulf %304, %313 : vector<2x128xf32>
    %323 = arith.addf %321, %322 : vector<2x128xf32>
    %324 = math.tanh %323 : vector<2x128xf32>
    %325 = arith.mulf %320, %324 : vector<2x128xf32>
    %c1_189 = arith.constant 1 : index
    %c0_190 = arith.constant 0 : index
    %c0_191 = arith.constant 0 : index
    %326 = vector.load %arg8[%c1_189, %c0_190, %c0_191] : memref<16x2x512xf32, #tpu.memory_space<vmem>>, vector<1x2x512xf32>
    %327 = vector.shape_cast %326 : vector<1x2x512xf32> to vector<2x512xf32>
    %328 = arith.truncf %325 : vector<2x128xf32> to vector<2x128xbf16>
    %c0_192 = arith.constant 0 : index
    %c0_193 = arith.constant 0 : index
    %329 = vector.load %arg3[%c0_192, %c0_193] : memref<128x512xbf16, #tpu.memory_space<vmem>>, vector<128x512xbf16>
    %cst_194 = arith.constant dense<0.000000e+00> : vector<2x512xf32>
    %330 = tpu.matmul %328, %329, %cst_194 {dimension_numbers = #tpu.dot_dimension_numbers<[1], [0], [0], [1], [0, 0, 1, 1], [], []>} : vector<2x128xbf16>, vector<128x512xbf16>, vector<2x512xf32> -> vector<2x512xf32>
    %331 = arith.addf %327, %330 : vector<2x512xf32>
    %332 = vector.extract_strided_slice %331 {offsets = [0, 0], sizes = [2, 128], strides = [1, 1]} : vector<2x512xf32> to vector<2x128xf32>
    %cst_195 = arith.constant 0.000000e+00 : f32
    %333 = vector.broadcast %cst_195 : f32 to vector<2x128xf32>
    %334 = arith.subf %333, %332 : vector<2x128xf32>
    %335 = math.exp %334 : vector<2x128xf32>
    %cst_196 = arith.constant 1.000000e+00 : f32
    %336 = vector.broadcast %cst_196 : f32 to vector<2x128xf32>
    %337 = arith.addf %336, %335 : vector<2x128xf32>
    %338 = tpu.reciprocal %337 {approx = true} : vector<2x128xf32> -> vector<2x128xf32>
    %339 = vector.extract_strided_slice %331 {offsets = [0, 128], sizes = [2, 128], strides = [1, 1]} : vector<2x512xf32> to vector<2x128xf32>
    %cst_197 = arith.constant 0.000000e+00 : f32
    %340 = vector.broadcast %cst_197 : f32 to vector<2x128xf32>
    %341 = arith.subf %340, %339 : vector<2x128xf32>
    %342 = math.exp %341 : vector<2x128xf32>
    %cst_198 = arith.constant 1.000000e+00 : f32
    %343 = vector.broadcast %cst_198 : f32 to vector<2x128xf32>
    %344 = arith.addf %343, %342 : vector<2x128xf32>
    %345 = tpu.reciprocal %344 {approx = true} : vector<2x128xf32> -> vector<2x128xf32>
    %346 = vector.extract_strided_slice %331 {offsets = [0, 256], sizes = [2, 128], strides = [1, 1]} : vector<2x512xf32> to vector<2x128xf32>
    %347 = math.tanh %346 : vector<2x128xf32>
    %348 = vector.extract_strided_slice %331 {offsets = [0, 384], sizes = [2, 128], strides = [1, 1]} : vector<2x512xf32> to vector<2x128xf32>
    %cst_199 = arith.constant 0.000000e+00 : f32
    %349 = vector.broadcast %cst_199 : f32 to vector<2x128xf32>
    %350 = arith.subf %349, %348 : vector<2x128xf32>
    %351 = math.exp %350 : vector<2x128xf32>
    %cst_200 = arith.constant 1.000000e+00 : f32
    %352 = vector.broadcast %cst_200 : f32 to vector<2x128xf32>
    %353 = arith.addf %352, %351 : vector<2x128xf32>
    %354 = tpu.reciprocal %353 {approx = true} : vector<2x128xf32> -> vector<2x128xf32>
    %355 = arith.mulf %345, %323 : vector<2x128xf32>
    %356 = arith.mulf %338, %347 : vector<2x128xf32>
    %357 = arith.addf %355, %356 : vector<2x128xf32>
    %358 = math.tanh %357 : vector<2x128xf32>
    %359 = arith.mulf %354, %358 : vector<2x128xf32>
    %c2_201 = arith.constant 2 : index
    %c0_202 = arith.constant 0 : index
    %c0_203 = arith.constant 0 : index
    %360 = vector.load %arg8[%c2_201, %c0_202, %c0_203] : memref<16x2x512xf32, #tpu.memory_space<vmem>>, vector<1x2x512xf32>
    %361 = vector.shape_cast %360 : vector<1x2x512xf32> to vector<2x512xf32>
    %362 = arith.truncf %359 : vector<2x128xf32> to vector<2x128xbf16>
    %c0_204 = arith.constant 0 : index
    %c0_205 = arith.constant 0 : index
    %363 = vector.load %arg3[%c0_204, %c0_205] : memref<128x512xbf16, #tpu.memory_space<vmem>>, vector<128x512xbf16>
    %cst_206 = arith.constant dense<0.000000e+00> : vector<2x512xf32>
    %364 = tpu.matmul %362, %363, %cst_206 {dimension_numbers = #tpu.dot_dimension_numbers<[1], [0], [0], [1], [0, 0, 1, 1], [], []>} : vector<2x128xbf16>, vector<128x512xbf16>, vector<2x512xf32> -> vector<2x512xf32>
    %365 = arith.addf %361, %364 : vector<2x512xf32>
    %366 = vector.extract_strided_slice %365 {offsets = [0, 0], sizes = [2, 128], strides = [1, 1]} : vector<2x512xf32> to vector<2x128xf32>
    %cst_207 = arith.constant 0.000000e+00 : f32
    %367 = vector.broadcast %cst_207 : f32 to vector<2x128xf32>
    %368 = arith.subf %367, %366 : vector<2x128xf32>
    %369 = math.exp %368 : vector<2x128xf32>
    %cst_208 = arith.constant 1.000000e+00 : f32
    %370 = vector.broadcast %cst_208 : f32 to vector<2x128xf32>
    %371 = arith.addf %370, %369 : vector<2x128xf32>
    %372 = tpu.reciprocal %371 {approx = true} : vector<2x128xf32> -> vector<2x128xf32>
    %373 = vector.extract_strided_slice %365 {offsets = [0, 128], sizes = [2, 128], strides = [1, 1]} : vector<2x512xf32> to vector<2x128xf32>
    %cst_209 = arith.constant 0.000000e+00 : f32
    %374 = vector.broadcast %cst_209 : f32 to vector<2x128xf32>
    %375 = arith.subf %374, %373 : vector<2x128xf32>
    %376 = math.exp %375 : vector<2x128xf32>
    %cst_210 = arith.constant 1.000000e+00 : f32
    %377 = vector.broadcast %cst_210 : f32 to vector<2x128xf32>
    %378 = arith.addf %377, %376 : vector<2x128xf32>
    %379 = tpu.reciprocal %378 {approx = true} : vector<2x128xf32> -> vector<2x128xf32>
    %380 = vector.extract_strided_slice %365 {offsets = [0, 256], sizes = [2, 128], strides = [1, 1]} : vector<2x512xf32> to vector<2x128xf32>
    %381 = math.tanh %380 : vector<2x128xf32>
    %382 = vector.extract_strided_slice %365 {offsets = [0, 384], sizes = [2, 128], strides = [1, 1]} : vector<2x512xf32> to vector<2x128xf32>
    %cst_211 = arith.constant 0.000000e+00 : f32
    %383 = vector.broadcast %cst_211 : f32 to vector<2x128xf32>
    %384 = arith.subf %383, %382 : vector<2x128xf32>
    %385 = math.exp %384 : vector<2x128xf32>
    %cst_212 = arith.constant 1.000000e+00 : f32
    %386 = vector.broadcast %cst_212 : f32 to vector<2x128xf32>
    %387 = arith.addf %386, %385 : vector<2x128xf32>
    %388 = tpu.reciprocal %387 {approx = true} : vector<2x128xf32> -> vector<2x128xf32>
    %389 = arith.mulf %379, %357 : vector<2x128xf32>
    %390 = arith.mulf %372, %381 : vector<2x128xf32>
    %391 = arith.addf %389, %390 : vector<2x128xf32>
    %392 = math.tanh %391 : vector<2x128xf32>
    %393 = arith.mulf %388, %392 : vector<2x128xf32>
    %c3_213 = arith.constant 3 : index
    %c0_214 = arith.constant 0 : index
    %c0_215 = arith.constant 0 : index
    %394 = vector.load %arg8[%c3_213, %c0_214, %c0_215] : memref<16x2x512xf32, #tpu.memory_space<vmem>>, vector<1x2x512xf32>
    %395 = vector.shape_cast %394 : vector<1x2x512xf32> to vector<2x512xf32>
    %396 = arith.truncf %393 : vector<2x128xf32> to vector<2x128xbf16>
    %c0_216 = arith.constant 0 : index
    %c0_217 = arith.constant 0 : index
    %397 = vector.load %arg3[%c0_216, %c0_217] : memref<128x512xbf16, #tpu.memory_space<vmem>>, vector<128x512xbf16>
    %cst_218 = arith.constant dense<0.000000e+00> : vector<2x512xf32>
    %398 = tpu.matmul %396, %397, %cst_218 {dimension_numbers = #tpu.dot_dimension_numbers<[1], [0], [0], [1], [0, 0, 1, 1], [], []>} : vector<2x128xbf16>, vector<128x512xbf16>, vector<2x512xf32> -> vector<2x512xf32>
    %399 = arith.addf %395, %398 : vector<2x512xf32>
    %400 = vector.extract_strided_slice %399 {offsets = [0, 0], sizes = [2, 128], strides = [1, 1]} : vector<2x512xf32> to vector<2x128xf32>
    %cst_219 = arith.constant 0.000000e+00 : f32
    %401 = vector.broadcast %cst_219 : f32 to vector<2x128xf32>
    %402 = arith.subf %401, %400 : vector<2x128xf32>
    %403 = math.exp %402 : vector<2x128xf32>
    %cst_220 = arith.constant 1.000000e+00 : f32
    %404 = vector.broadcast %cst_220 : f32 to vector<2x128xf32>
    %405 = arith.addf %404, %403 : vector<2x128xf32>
    %406 = tpu.reciprocal %405 {approx = true} : vector<2x128xf32> -> vector<2x128xf32>
    %407 = vector.extract_strided_slice %399 {offsets = [0, 128], sizes = [2, 128], strides = [1, 1]} : vector<2x512xf32> to vector<2x128xf32>
    %cst_221 = arith.constant 0.000000e+00 : f32
    %408 = vector.broadcast %cst_221 : f32 to vector<2x128xf32>
    %409 = arith.subf %408, %407 : vector<2x128xf32>
    %410 = math.exp %409 : vector<2x128xf32>
    %cst_222 = arith.constant 1.000000e+00 : f32
    %411 = vector.broadcast %cst_222 : f32 to vector<2x128xf32>
    %412 = arith.addf %411, %410 : vector<2x128xf32>
    %413 = tpu.reciprocal %412 {approx = true} : vector<2x128xf32> -> vector<2x128xf32>
    %414 = vector.extract_strided_slice %399 {offsets = [0, 256], sizes = [2, 128], strides = [1, 1]} : vector<2x512xf32> to vector<2x128xf32>
    %415 = math.tanh %414 : vector<2x128xf32>
    %416 = vector.extract_strided_slice %399 {offsets = [0, 384], sizes = [2, 128], strides = [1, 1]} : vector<2x512xf32> to vector<2x128xf32>
    %cst_223 = arith.constant 0.000000e+00 : f32
    %417 = vector.broadcast %cst_223 : f32 to vector<2x128xf32>
    %418 = arith.subf %417, %416 : vector<2x128xf32>
    %419 = math.exp %418 : vector<2x128xf32>
    %cst_224 = arith.constant 1.000000e+00 : f32
    %420 = vector.broadcast %cst_224 : f32 to vector<2x128xf32>
    %421 = arith.addf %420, %419 : vector<2x128xf32>
    %422 = tpu.reciprocal %421 {approx = true} : vector<2x128xf32> -> vector<2x128xf32>
    %423 = arith.mulf %413, %391 : vector<2x128xf32>
    %424 = arith.mulf %406, %415 : vector<2x128xf32>
    %425 = arith.addf %423, %424 : vector<2x128xf32>
    %426 = math.tanh %425 : vector<2x128xf32>
    %427 = arith.mulf %422, %426 : vector<2x128xf32>
    %c4_225 = arith.constant 4 : index
    %c0_226 = arith.constant 0 : index
    %c0_227 = arith.constant 0 : index
    %428 = vector.load %arg8[%c4_225, %c0_226, %c0_227] : memref<16x2x512xf32, #tpu.memory_space<vmem>>, vector<1x2x512xf32>
    %429 = vector.shape_cast %428 : vector<1x2x512xf32> to vector<2x512xf32>
    %430 = arith.truncf %427 : vector<2x128xf32> to vector<2x128xbf16>
    %c0_228 = arith.constant 0 : index
    %c0_229 = arith.constant 0 : index
    %431 = vector.load %arg3[%c0_228, %c0_229] : memref<128x512xbf16, #tpu.memory_space<vmem>>, vector<128x512xbf16>
    %cst_230 = arith.constant dense<0.000000e+00> : vector<2x512xf32>
    %432 = tpu.matmul %430, %431, %cst_230 {dimension_numbers = #tpu.dot_dimension_numbers<[1], [0], [0], [1], [0, 0, 1, 1], [], []>} : vector<2x128xbf16>, vector<128x512xbf16>, vector<2x512xf32> -> vector<2x512xf32>
    %433 = arith.addf %429, %432 : vector<2x512xf32>
    %434 = vector.extract_strided_slice %433 {offsets = [0, 0], sizes = [2, 128], strides = [1, 1]} : vector<2x512xf32> to vector<2x128xf32>
    %cst_231 = arith.constant 0.000000e+00 : f32
    %435 = vector.broadcast %cst_231 : f32 to vector<2x128xf32>
    %436 = arith.subf %435, %434 : vector<2x128xf32>
    %437 = math.exp %436 : vector<2x128xf32>
    %cst_232 = arith.constant 1.000000e+00 : f32
    %438 = vector.broadcast %cst_232 : f32 to vector<2x128xf32>
    %439 = arith.addf %438, %437 : vector<2x128xf32>
    %440 = tpu.reciprocal %439 {approx = true} : vector<2x128xf32> -> vector<2x128xf32>
    %441 = vector.extract_strided_slice %433 {offsets = [0, 128], sizes = [2, 128], strides = [1, 1]} : vector<2x512xf32> to vector<2x128xf32>
    %cst_233 = arith.constant 0.000000e+00 : f32
    %442 = vector.broadcast %cst_233 : f32 to vector<2x128xf32>
    %443 = arith.subf %442, %441 : vector<2x128xf32>
    %444 = math.exp %443 : vector<2x128xf32>
    %cst_234 = arith.constant 1.000000e+00 : f32
    %445 = vector.broadcast %cst_234 : f32 to vector<2x128xf32>
    %446 = arith.addf %445, %444 : vector<2x128xf32>
    %447 = tpu.reciprocal %446 {approx = true} : vector<2x128xf32> -> vector<2x128xf32>
    %448 = vector.extract_strided_slice %433 {offsets = [0, 256], sizes = [2, 128], strides = [1, 1]} : vector<2x512xf32> to vector<2x128xf32>
    %449 = math.tanh %448 : vector<2x128xf32>
    %450 = vector.extract_strided_slice %433 {offsets = [0, 384], sizes = [2, 128], strides = [1, 1]} : vector<2x512xf32> to vector<2x128xf32>
    %cst_235 = arith.constant 0.000000e+00 : f32
    %451 = vector.broadcast %cst_235 : f32 to vector<2x128xf32>
    %452 = arith.subf %451, %450 : vector<2x128xf32>
    %453 = math.exp %452 : vector<2x128xf32>
    %cst_236 = arith.constant 1.000000e+00 : f32
    %454 = vector.broadcast %cst_236 : f32 to vector<2x128xf32>
    %455 = arith.addf %454, %453 : vector<2x128xf32>
    %456 = tpu.reciprocal %455 {approx = true} : vector<2x128xf32> -> vector<2x128xf32>
    %457 = arith.mulf %447, %425 : vector<2x128xf32>
    %458 = arith.mulf %440, %449 : vector<2x128xf32>
    %459 = arith.addf %457, %458 : vector<2x128xf32>
    %460 = math.tanh %459 : vector<2x128xf32>
    %461 = arith.mulf %456, %460 : vector<2x128xf32>
    %c5_237 = arith.constant 5 : index
    %c0_238 = arith.constant 0 : index
    %c0_239 = arith.constant 0 : index
    %462 = vector.load %arg8[%c5_237, %c0_238, %c0_239] : memref<16x2x512xf32, #tpu.memory_space<vmem>>, vector<1x2x512xf32>
    %463 = vector.shape_cast %462 : vector<1x2x512xf32> to vector<2x512xf32>
    %464 = arith.truncf %461 : vector<2x128xf32> to vector<2x128xbf16>
    %c0_240 = arith.constant 0 : index
    %c0_241 = arith.constant 0 : index
    %465 = vector.load %arg3[%c0_240, %c0_241] : memref<128x512xbf16, #tpu.memory_space<vmem>>, vector<128x512xbf16>
    %cst_242 = arith.constant dense<0.000000e+00> : vector<2x512xf32>
    %466 = tpu.matmul %464, %465, %cst_242 {dimension_numbers = #tpu.dot_dimension_numbers<[1], [0], [0], [1], [0, 0, 1, 1], [], []>} : vector<2x128xbf16>, vector<128x512xbf16>, vector<2x512xf32> -> vector<2x512xf32>
    %467 = arith.addf %463, %466 : vector<2x512xf32>
    %468 = vector.extract_strided_slice %467 {offsets = [0, 0], sizes = [2, 128], strides = [1, 1]} : vector<2x512xf32> to vector<2x128xf32>
    %cst_243 = arith.constant 0.000000e+00 : f32
    %469 = vector.broadcast %cst_243 : f32 to vector<2x128xf32>
    %470 = arith.subf %469, %468 : vector<2x128xf32>
    %471 = math.exp %470 : vector<2x128xf32>
    %cst_244 = arith.constant 1.000000e+00 : f32
    %472 = vector.broadcast %cst_244 : f32 to vector<2x128xf32>
    %473 = arith.addf %472, %471 : vector<2x128xf32>
    %474 = tpu.reciprocal %473 {approx = true} : vector<2x128xf32> -> vector<2x128xf32>
    %475 = vector.extract_strided_slice %467 {offsets = [0, 128], sizes = [2, 128], strides = [1, 1]} : vector<2x512xf32> to vector<2x128xf32>
    %cst_245 = arith.constant 0.000000e+00 : f32
    %476 = vector.broadcast %cst_245 : f32 to vector<2x128xf32>
    %477 = arith.subf %476, %475 : vector<2x128xf32>
    %478 = math.exp %477 : vector<2x128xf32>
    %cst_246 = arith.constant 1.000000e+00 : f32
    %479 = vector.broadcast %cst_246 : f32 to vector<2x128xf32>
    %480 = arith.addf %479, %478 : vector<2x128xf32>
    %481 = tpu.reciprocal %480 {approx = true} : vector<2x128xf32> -> vector<2x128xf32>
    %482 = vector.extract_strided_slice %467 {offsets = [0, 256], sizes = [2, 128], strides = [1, 1]} : vector<2x512xf32> to vector<2x128xf32>
    %483 = math.tanh %482 : vector<2x128xf32>
    %484 = vector.extract_strided_slice %467 {offsets = [0, 384], sizes = [2, 128], strides = [1, 1]} : vector<2x512xf32> to vector<2x128xf32>
    %cst_247 = arith.constant 0.000000e+00 : f32
    %485 = vector.broadcast %cst_247 : f32 to vector<2x128xf32>
    %486 = arith.subf %485, %484 : vector<2x128xf32>
    %487 = math.exp %486 : vector<2x128xf32>
    %cst_248 = arith.constant 1.000000e+00 : f32
    %488 = vector.broadcast %cst_248 : f32 to vector<2x128xf32>
    %489 = arith.addf %488, %487 : vector<2x128xf32>
    %490 = tpu.reciprocal %489 {approx = true} : vector<2x128xf32> -> vector<2x128xf32>
    %491 = arith.mulf %481, %459 : vector<2x128xf32>
    %492 = arith.mulf %474, %483 : vector<2x128xf32>
    %493 = arith.addf %491, %492 : vector<2x128xf32>
    %494 = math.tanh %493 : vector<2x128xf32>
    %495 = arith.mulf %490, %494 : vector<2x128xf32>
    %c6_249 = arith.constant 6 : index
    %c0_250 = arith.constant 0 : index
    %c0_251 = arith.constant 0 : index
    %496 = vector.load %arg8[%c6_249, %c0_250, %c0_251] : memref<16x2x512xf32, #tpu.memory_space<vmem>>, vector<1x2x512xf32>
    %497 = vector.shape_cast %496 : vector<1x2x512xf32> to vector<2x512xf32>
    %498 = arith.truncf %495 : vector<2x128xf32> to vector<2x128xbf16>
    %c0_252 = arith.constant 0 : index
    %c0_253 = arith.constant 0 : index
    %499 = vector.load %arg3[%c0_252, %c0_253] : memref<128x512xbf16, #tpu.memory_space<vmem>>, vector<128x512xbf16>
    %cst_254 = arith.constant dense<0.000000e+00> : vector<2x512xf32>
    %500 = tpu.matmul %498, %499, %cst_254 {dimension_numbers = #tpu.dot_dimension_numbers<[1], [0], [0], [1], [0, 0, 1, 1], [], []>} : vector<2x128xbf16>, vector<128x512xbf16>, vector<2x512xf32> -> vector<2x512xf32>
    %501 = arith.addf %497, %500 : vector<2x512xf32>
    %502 = vector.extract_strided_slice %501 {offsets = [0, 0], sizes = [2, 128], strides = [1, 1]} : vector<2x512xf32> to vector<2x128xf32>
    %cst_255 = arith.constant 0.000000e+00 : f32
    %503 = vector.broadcast %cst_255 : f32 to vector<2x128xf32>
    %504 = arith.subf %503, %502 : vector<2x128xf32>
    %505 = math.exp %504 : vector<2x128xf32>
    %cst_256 = arith.constant 1.000000e+00 : f32
    %506 = vector.broadcast %cst_256 : f32 to vector<2x128xf32>
    %507 = arith.addf %506, %505 : vector<2x128xf32>
    %508 = tpu.reciprocal %507 {approx = true} : vector<2x128xf32> -> vector<2x128xf32>
    %509 = vector.extract_strided_slice %501 {offsets = [0, 128], sizes = [2, 128], strides = [1, 1]} : vector<2x512xf32> to vector<2x128xf32>
    %cst_257 = arith.constant 0.000000e+00 : f32
    %510 = vector.broadcast %cst_257 : f32 to vector<2x128xf32>
    %511 = arith.subf %510, %509 : vector<2x128xf32>
    %512 = math.exp %511 : vector<2x128xf32>
    %cst_258 = arith.constant 1.000000e+00 : f32
    %513 = vector.broadcast %cst_258 : f32 to vector<2x128xf32>
    %514 = arith.addf %513, %512 : vector<2x128xf32>
    %515 = tpu.reciprocal %514 {approx = true} : vector<2x128xf32> -> vector<2x128xf32>
    %516 = vector.extract_strided_slice %501 {offsets = [0, 256], sizes = [2, 128], strides = [1, 1]} : vector<2x512xf32> to vector<2x128xf32>
    %517 = math.tanh %516 : vector<2x128xf32>
    %518 = vector.extract_strided_slice %501 {offsets = [0, 384], sizes = [2, 128], strides = [1, 1]} : vector<2x512xf32> to vector<2x128xf32>
    %cst_259 = arith.constant 0.000000e+00 : f32
    %519 = vector.broadcast %cst_259 : f32 to vector<2x128xf32>
    %520 = arith.subf %519, %518 : vector<2x128xf32>
    %521 = math.exp %520 : vector<2x128xf32>
    %cst_260 = arith.constant 1.000000e+00 : f32
    %522 = vector.broadcast %cst_260 : f32 to vector<2x128xf32>
    %523 = arith.addf %522, %521 : vector<2x128xf32>
    %524 = tpu.reciprocal %523 {approx = true} : vector<2x128xf32> -> vector<2x128xf32>
    %525 = arith.mulf %515, %493 : vector<2x128xf32>
    %526 = arith.mulf %508, %517 : vector<2x128xf32>
    %527 = arith.addf %525, %526 : vector<2x128xf32>
    %528 = math.tanh %527 : vector<2x128xf32>
    %529 = arith.mulf %524, %528 : vector<2x128xf32>
    %c7_261 = arith.constant 7 : index
    %c0_262 = arith.constant 0 : index
    %c0_263 = arith.constant 0 : index
    %530 = vector.load %arg8[%c7_261, %c0_262, %c0_263] : memref<16x2x512xf32, #tpu.memory_space<vmem>>, vector<1x2x512xf32>
    %531 = vector.shape_cast %530 : vector<1x2x512xf32> to vector<2x512xf32>
    %532 = arith.truncf %529 : vector<2x128xf32> to vector<2x128xbf16>
    %c0_264 = arith.constant 0 : index
    %c0_265 = arith.constant 0 : index
    %533 = vector.load %arg3[%c0_264, %c0_265] : memref<128x512xbf16, #tpu.memory_space<vmem>>, vector<128x512xbf16>
    %cst_266 = arith.constant dense<0.000000e+00> : vector<2x512xf32>
    %534 = tpu.matmul %532, %533, %cst_266 {dimension_numbers = #tpu.dot_dimension_numbers<[1], [0], [0], [1], [0, 0, 1, 1], [], []>} : vector<2x128xbf16>, vector<128x512xbf16>, vector<2x512xf32> -> vector<2x512xf32>
    %535 = arith.addf %531, %534 : vector<2x512xf32>
    %536 = vector.extract_strided_slice %535 {offsets = [0, 0], sizes = [2, 128], strides = [1, 1]} : vector<2x512xf32> to vector<2x128xf32>
    %cst_267 = arith.constant 0.000000e+00 : f32
    %537 = vector.broadcast %cst_267 : f32 to vector<2x128xf32>
    %538 = arith.subf %537, %536 : vector<2x128xf32>
    %539 = math.exp %538 : vector<2x128xf32>
    %cst_268 = arith.constant 1.000000e+00 : f32
    %540 = vector.broadcast %cst_268 : f32 to vector<2x128xf32>
    %541 = arith.addf %540, %539 : vector<2x128xf32>
    %542 = tpu.reciprocal %541 {approx = true} : vector<2x128xf32> -> vector<2x128xf32>
    %543 = vector.extract_strided_slice %535 {offsets = [0, 128], sizes = [2, 128], strides = [1, 1]} : vector<2x512xf32> to vector<2x128xf32>
    %cst_269 = arith.constant 0.000000e+00 : f32
    %544 = vector.broadcast %cst_269 : f32 to vector<2x128xf32>
    %545 = arith.subf %544, %543 : vector<2x128xf32>
    %546 = math.exp %545 : vector<2x128xf32>
    %cst_270 = arith.constant 1.000000e+00 : f32
    %547 = vector.broadcast %cst_270 : f32 to vector<2x128xf32>
    %548 = arith.addf %547, %546 : vector<2x128xf32>
    %549 = tpu.reciprocal %548 {approx = true} : vector<2x128xf32> -> vector<2x128xf32>
    %550 = vector.extract_strided_slice %535 {offsets = [0, 256], sizes = [2, 128], strides = [1, 1]} : vector<2x512xf32> to vector<2x128xf32>
    %551 = math.tanh %550 : vector<2x128xf32>
    %552 = vector.extract_strided_slice %535 {offsets = [0, 384], sizes = [2, 128], strides = [1, 1]} : vector<2x512xf32> to vector<2x128xf32>
    %cst_271 = arith.constant 0.000000e+00 : f32
    %553 = vector.broadcast %cst_271 : f32 to vector<2x128xf32>
    %554 = arith.subf %553, %552 : vector<2x128xf32>
    %555 = math.exp %554 : vector<2x128xf32>
    %cst_272 = arith.constant 1.000000e+00 : f32
    %556 = vector.broadcast %cst_272 : f32 to vector<2x128xf32>
    %557 = arith.addf %556, %555 : vector<2x128xf32>
    %558 = tpu.reciprocal %557 {approx = true} : vector<2x128xf32> -> vector<2x128xf32>
    %559 = arith.mulf %549, %527 : vector<2x128xf32>
    %560 = arith.mulf %542, %551 : vector<2x128xf32>
    %561 = arith.addf %559, %560 : vector<2x128xf32>
    %562 = math.tanh %561 : vector<2x128xf32>
    %563 = arith.mulf %558, %562 : vector<2x128xf32>
    %c8_273 = arith.constant 8 : index
    %c0_274 = arith.constant 0 : index
    %c0_275 = arith.constant 0 : index
    %564 = vector.load %arg8[%c8_273, %c0_274, %c0_275] : memref<16x2x512xf32, #tpu.memory_space<vmem>>, vector<1x2x512xf32>
    %565 = vector.shape_cast %564 : vector<1x2x512xf32> to vector<2x512xf32>
    %566 = arith.truncf %563 : vector<2x128xf32> to vector<2x128xbf16>
    %c0_276 = arith.constant 0 : index
    %c0_277 = arith.constant 0 : index
    %567 = vector.load %arg3[%c0_276, %c0_277] : memref<128x512xbf16, #tpu.memory_space<vmem>>, vector<128x512xbf16>
    %cst_278 = arith.constant dense<0.000000e+00> : vector<2x512xf32>
    %568 = tpu.matmul %566, %567, %cst_278 {dimension_numbers = #tpu.dot_dimension_numbers<[1], [0], [0], [1], [0, 0, 1, 1], [], []>} : vector<2x128xbf16>, vector<128x512xbf16>, vector<2x512xf32> -> vector<2x512xf32>
    %569 = arith.addf %565, %568 : vector<2x512xf32>
    %570 = vector.extract_strided_slice %569 {offsets = [0, 0], sizes = [2, 128], strides = [1, 1]} : vector<2x512xf32> to vector<2x128xf32>
    %cst_279 = arith.constant 0.000000e+00 : f32
    %571 = vector.broadcast %cst_279 : f32 to vector<2x128xf32>
    %572 = arith.subf %571, %570 : vector<2x128xf32>
    %573 = math.exp %572 : vector<2x128xf32>
    %cst_280 = arith.constant 1.000000e+00 : f32
    %574 = vector.broadcast %cst_280 : f32 to vector<2x128xf32>
    %575 = arith.addf %574, %573 : vector<2x128xf32>
    %576 = tpu.reciprocal %575 {approx = true} : vector<2x128xf32> -> vector<2x128xf32>
    %577 = vector.extract_strided_slice %569 {offsets = [0, 128], sizes = [2, 128], strides = [1, 1]} : vector<2x512xf32> to vector<2x128xf32>
    %cst_281 = arith.constant 0.000000e+00 : f32
    %578 = vector.broadcast %cst_281 : f32 to vector<2x128xf32>
    %579 = arith.subf %578, %577 : vector<2x128xf32>
    %580 = math.exp %579 : vector<2x128xf32>
    %cst_282 = arith.constant 1.000000e+00 : f32
    %581 = vector.broadcast %cst_282 : f32 to vector<2x128xf32>
    %582 = arith.addf %581, %580 : vector<2x128xf32>
    %583 = tpu.reciprocal %582 {approx = true} : vector<2x128xf32> -> vector<2x128xf32>
    %584 = vector.extract_strided_slice %569 {offsets = [0, 256], sizes = [2, 128], strides = [1, 1]} : vector<2x512xf32> to vector<2x128xf32>
    %585 = math.tanh %584 : vector<2x128xf32>
    %586 = vector.extract_strided_slice %569 {offsets = [0, 384], sizes = [2, 128], strides = [1, 1]} : vector<2x512xf32> to vector<2x128xf32>
    %cst_283 = arith.constant 0.000000e+00 : f32
    %587 = vector.broadcast %cst_283 : f32 to vector<2x128xf32>
    %588 = arith.subf %587, %586 : vector<2x128xf32>
    %589 = math.exp %588 : vector<2x128xf32>
    %cst_284 = arith.constant 1.000000e+00 : f32
    %590 = vector.broadcast %cst_284 : f32 to vector<2x128xf32>
    %591 = arith.addf %590, %589 : vector<2x128xf32>
    %592 = tpu.reciprocal %591 {approx = true} : vector<2x128xf32> -> vector<2x128xf32>
    %593 = arith.mulf %583, %561 : vector<2x128xf32>
    %594 = arith.mulf %576, %585 : vector<2x128xf32>
    %595 = arith.addf %593, %594 : vector<2x128xf32>
    %596 = math.tanh %595 : vector<2x128xf32>
    %597 = arith.mulf %592, %596 : vector<2x128xf32>
    %c9_285 = arith.constant 9 : index
    %c0_286 = arith.constant 0 : index
    %c0_287 = arith.constant 0 : index
    %598 = vector.load %arg8[%c9_285, %c0_286, %c0_287] : memref<16x2x512xf32, #tpu.memory_space<vmem>>, vector<1x2x512xf32>
    %599 = vector.shape_cast %598 : vector<1x2x512xf32> to vector<2x512xf32>
    %600 = arith.truncf %597 : vector<2x128xf32> to vector<2x128xbf16>
    %c0_288 = arith.constant 0 : index
    %c0_289 = arith.constant 0 : index
    %601 = vector.load %arg3[%c0_288, %c0_289] : memref<128x512xbf16, #tpu.memory_space<vmem>>, vector<128x512xbf16>
    %cst_290 = arith.constant dense<0.000000e+00> : vector<2x512xf32>
    %602 = tpu.matmul %600, %601, %cst_290 {dimension_numbers = #tpu.dot_dimension_numbers<[1], [0], [0], [1], [0, 0, 1, 1], [], []>} : vector<2x128xbf16>, vector<128x512xbf16>, vector<2x512xf32> -> vector<2x512xf32>
    %603 = arith.addf %599, %602 : vector<2x512xf32>
    %604 = vector.extract_strided_slice %603 {offsets = [0, 0], sizes = [2, 128], strides = [1, 1]} : vector<2x512xf32> to vector<2x128xf32>
    %cst_291 = arith.constant 0.000000e+00 : f32
    %605 = vector.broadcast %cst_291 : f32 to vector<2x128xf32>
    %606 = arith.subf %605, %604 : vector<2x128xf32>
    %607 = math.exp %606 : vector<2x128xf32>
    %cst_292 = arith.constant 1.000000e+00 : f32
    %608 = vector.broadcast %cst_292 : f32 to vector<2x128xf32>
    %609 = arith.addf %608, %607 : vector<2x128xf32>
    %610 = tpu.reciprocal %609 {approx = true} : vector<2x128xf32> -> vector<2x128xf32>
    %611 = vector.extract_strided_slice %603 {offsets = [0, 128], sizes = [2, 128], strides = [1, 1]} : vector<2x512xf32> to vector<2x128xf32>
    %cst_293 = arith.constant 0.000000e+00 : f32
    %612 = vector.broadcast %cst_293 : f32 to vector<2x128xf32>
    %613 = arith.subf %612, %611 : vector<2x128xf32>
    %614 = math.exp %613 : vector<2x128xf32>
    %cst_294 = arith.constant 1.000000e+00 : f32
    %615 = vector.broadcast %cst_294 : f32 to vector<2x128xf32>
    %616 = arith.addf %615, %614 : vector<2x128xf32>
    %617 = tpu.reciprocal %616 {approx = true} : vector<2x128xf32> -> vector<2x128xf32>
    %618 = vector.extract_strided_slice %603 {offsets = [0, 256], sizes = [2, 128], strides = [1, 1]} : vector<2x512xf32> to vector<2x128xf32>
    %619 = math.tanh %618 : vector<2x128xf32>
    %620 = vector.extract_strided_slice %603 {offsets = [0, 384], sizes = [2, 128], strides = [1, 1]} : vector<2x512xf32> to vector<2x128xf32>
    %cst_295 = arith.constant 0.000000e+00 : f32
    %621 = vector.broadcast %cst_295 : f32 to vector<2x128xf32>
    %622 = arith.subf %621, %620 : vector<2x128xf32>
    %623 = math.exp %622 : vector<2x128xf32>
    %cst_296 = arith.constant 1.000000e+00 : f32
    %624 = vector.broadcast %cst_296 : f32 to vector<2x128xf32>
    %625 = arith.addf %624, %623 : vector<2x128xf32>
    %626 = tpu.reciprocal %625 {approx = true} : vector<2x128xf32> -> vector<2x128xf32>
    %627 = arith.mulf %617, %595 : vector<2x128xf32>
    %628 = arith.mulf %610, %619 : vector<2x128xf32>
    %629 = arith.addf %627, %628 : vector<2x128xf32>
    %630 = math.tanh %629 : vector<2x128xf32>
    %631 = arith.mulf %626, %630 : vector<2x128xf32>
    %c10_297 = arith.constant 10 : index
    %c0_298 = arith.constant 0 : index
    %c0_299 = arith.constant 0 : index
    %632 = vector.load %arg8[%c10_297, %c0_298, %c0_299] : memref<16x2x512xf32, #tpu.memory_space<vmem>>, vector<1x2x512xf32>
    %633 = vector.shape_cast %632 : vector<1x2x512xf32> to vector<2x512xf32>
    %634 = arith.truncf %631 : vector<2x128xf32> to vector<2x128xbf16>
    %c0_300 = arith.constant 0 : index
    %c0_301 = arith.constant 0 : index
    %635 = vector.load %arg3[%c0_300, %c0_301] : memref<128x512xbf16, #tpu.memory_space<vmem>>, vector<128x512xbf16>
    %cst_302 = arith.constant dense<0.000000e+00> : vector<2x512xf32>
    %636 = tpu.matmul %634, %635, %cst_302 {dimension_numbers = #tpu.dot_dimension_numbers<[1], [0], [0], [1], [0, 0, 1, 1], [], []>} : vector<2x128xbf16>, vector<128x512xbf16>, vector<2x512xf32> -> vector<2x512xf32>
    %637 = arith.addf %633, %636 : vector<2x512xf32>
    %638 = vector.extract_strided_slice %637 {offsets = [0, 0], sizes = [2, 128], strides = [1, 1]} : vector<2x512xf32> to vector<2x128xf32>
    %cst_303 = arith.constant 0.000000e+00 : f32
    %639 = vector.broadcast %cst_303 : f32 to vector<2x128xf32>
    %640 = arith.subf %639, %638 : vector<2x128xf32>
    %641 = math.exp %640 : vector<2x128xf32>
    %cst_304 = arith.constant 1.000000e+00 : f32
    %642 = vector.broadcast %cst_304 : f32 to vector<2x128xf32>
    %643 = arith.addf %642, %641 : vector<2x128xf32>
    %644 = tpu.reciprocal %643 {approx = true} : vector<2x128xf32> -> vector<2x128xf32>
    %645 = vector.extract_strided_slice %637 {offsets = [0, 128], sizes = [2, 128], strides = [1, 1]} : vector<2x512xf32> to vector<2x128xf32>
    %cst_305 = arith.constant 0.000000e+00 : f32
    %646 = vector.broadcast %cst_305 : f32 to vector<2x128xf32>
    %647 = arith.subf %646, %645 : vector<2x128xf32>
    %648 = math.exp %647 : vector<2x128xf32>
    %cst_306 = arith.constant 1.000000e+00 : f32
    %649 = vector.broadcast %cst_306 : f32 to vector<2x128xf32>
    %650 = arith.addf %649, %648 : vector<2x128xf32>
    %651 = tpu.reciprocal %650 {approx = true} : vector<2x128xf32> -> vector<2x128xf32>
    %652 = vector.extract_strided_slice %637 {offsets = [0, 256], sizes = [2, 128], strides = [1, 1]} : vector<2x512xf32> to vector<2x128xf32>
    %653 = math.tanh %652 : vector<2x128xf32>
    %654 = vector.extract_strided_slice %637 {offsets = [0, 384], sizes = [2, 128], strides = [1, 1]} : vector<2x512xf32> to vector<2x128xf32>
    %cst_307 = arith.constant 0.000000e+00 : f32
    %655 = vector.broadcast %cst_307 : f32 to vector<2x128xf32>
    %656 = arith.subf %655, %654 : vector<2x128xf32>
    %657 = math.exp %656 : vector<2x128xf32>
    %cst_308 = arith.constant 1.000000e+00 : f32
    %658 = vector.broadcast %cst_308 : f32 to vector<2x128xf32>
    %659 = arith.addf %658, %657 : vector<2x128xf32>
    %660 = tpu.reciprocal %659 {approx = true} : vector<2x128xf32> -> vector<2x128xf32>
    %661 = arith.mulf %651, %629 : vector<2x128xf32>
    %662 = arith.mulf %644, %653 : vector<2x128xf32>
    %663 = arith.addf %661, %662 : vector<2x128xf32>
    %664 = math.tanh %663 : vector<2x128xf32>
    %665 = arith.mulf %660, %664 : vector<2x128xf32>
    %c11_309 = arith.constant 11 : index
    %c0_310 = arith.constant 0 : index
    %c0_311 = arith.constant 0 : index
    %666 = vector.load %arg8[%c11_309, %c0_310, %c0_311] : memref<16x2x512xf32, #tpu.memory_space<vmem>>, vector<1x2x512xf32>
    %667 = vector.shape_cast %666 : vector<1x2x512xf32> to vector<2x512xf32>
    %668 = arith.truncf %665 : vector<2x128xf32> to vector<2x128xbf16>
    %c0_312 = arith.constant 0 : index
    %c0_313 = arith.constant 0 : index
    %669 = vector.load %arg3[%c0_312, %c0_313] : memref<128x512xbf16, #tpu.memory_space<vmem>>, vector<128x512xbf16>
    %cst_314 = arith.constant dense<0.000000e+00> : vector<2x512xf32>
    %670 = tpu.matmul %668, %669, %cst_314 {dimension_numbers = #tpu.dot_dimension_numbers<[1], [0], [0], [1], [0, 0, 1, 1], [], []>} : vector<2x128xbf16>, vector<128x512xbf16>, vector<2x512xf32> -> vector<2x512xf32>
    %671 = arith.addf %667, %670 : vector<2x512xf32>
    %672 = vector.extract_strided_slice %671 {offsets = [0, 0], sizes = [2, 128], strides = [1, 1]} : vector<2x512xf32> to vector<2x128xf32>
    %cst_315 = arith.constant 0.000000e+00 : f32
    %673 = vector.broadcast %cst_315 : f32 to vector<2x128xf32>
    %674 = arith.subf %673, %672 : vector<2x128xf32>
    %675 = math.exp %674 : vector<2x128xf32>
    %cst_316 = arith.constant 1.000000e+00 : f32
    %676 = vector.broadcast %cst_316 : f32 to vector<2x128xf32>
    %677 = arith.addf %676, %675 : vector<2x128xf32>
    %678 = tpu.reciprocal %677 {approx = true} : vector<2x128xf32> -> vector<2x128xf32>
    %679 = vector.extract_strided_slice %671 {offsets = [0, 128], sizes = [2, 128], strides = [1, 1]} : vector<2x512xf32> to vector<2x128xf32>
    %cst_317 = arith.constant 0.000000e+00 : f32
    %680 = vector.broadcast %cst_317 : f32 to vector<2x128xf32>
    %681 = arith.subf %680, %679 : vector<2x128xf32>
    %682 = math.exp %681 : vector<2x128xf32>
    %cst_318 = arith.constant 1.000000e+00 : f32
    %683 = vector.broadcast %cst_318 : f32 to vector<2x128xf32>
    %684 = arith.addf %683, %682 : vector<2x128xf32>
    %685 = tpu.reciprocal %684 {approx = true} : vector<2x128xf32> -> vector<2x128xf32>
    %686 = vector.extract_strided_slice %671 {offsets = [0, 256], sizes = [2, 128], strides = [1, 1]} : vector<2x512xf32> to vector<2x128xf32>
    %687 = math.tanh %686 : vector<2x128xf32>
    %688 = vector.extract_strided_slice %671 {offsets = [0, 384], sizes = [2, 128], strides = [1, 1]} : vector<2x512xf32> to vector<2x128xf32>
    %cst_319 = arith.constant 0.000000e+00 : f32
    %689 = vector.broadcast %cst_319 : f32 to vector<2x128xf32>
    %690 = arith.subf %689, %688 : vector<2x128xf32>
    %691 = math.exp %690 : vector<2x128xf32>
    %cst_320 = arith.constant 1.000000e+00 : f32
    %692 = vector.broadcast %cst_320 : f32 to vector<2x128xf32>
    %693 = arith.addf %692, %691 : vector<2x128xf32>
    %694 = tpu.reciprocal %693 {approx = true} : vector<2x128xf32> -> vector<2x128xf32>
    %695 = arith.mulf %685, %663 : vector<2x128xf32>
    %696 = arith.mulf %678, %687 : vector<2x128xf32>
    %697 = arith.addf %695, %696 : vector<2x128xf32>
    %698 = math.tanh %697 : vector<2x128xf32>
    %699 = arith.mulf %694, %698 : vector<2x128xf32>
    %c12_321 = arith.constant 12 : index
    %c0_322 = arith.constant 0 : index
    %c0_323 = arith.constant 0 : index
    %700 = vector.load %arg8[%c12_321, %c0_322, %c0_323] : memref<16x2x512xf32, #tpu.memory_space<vmem>>, vector<1x2x512xf32>
    %701 = vector.shape_cast %700 : vector<1x2x512xf32> to vector<2x512xf32>
    %702 = arith.truncf %699 : vector<2x128xf32> to vector<2x128xbf16>
    %c0_324 = arith.constant 0 : index
    %c0_325 = arith.constant 0 : index
    %703 = vector.load %arg3[%c0_324, %c0_325] : memref<128x512xbf16, #tpu.memory_space<vmem>>, vector<128x512xbf16>
    %cst_326 = arith.constant dense<0.000000e+00> : vector<2x512xf32>
    %704 = tpu.matmul %702, %703, %cst_326 {dimension_numbers = #tpu.dot_dimension_numbers<[1], [0], [0], [1], [0, 0, 1, 1], [], []>} : vector<2x128xbf16>, vector<128x512xbf16>, vector<2x512xf32> -> vector<2x512xf32>
    %705 = arith.addf %701, %704 : vector<2x512xf32>
    %706 = vector.extract_strided_slice %705 {offsets = [0, 0], sizes = [2, 128], strides = [1, 1]} : vector<2x512xf32> to vector<2x128xf32>
    %cst_327 = arith.constant 0.000000e+00 : f32
    %707 = vector.broadcast %cst_327 : f32 to vector<2x128xf32>
    %708 = arith.subf %707, %706 : vector<2x128xf32>
    %709 = math.exp %708 : vector<2x128xf32>
    %cst_328 = arith.constant 1.000000e+00 : f32
    %710 = vector.broadcast %cst_328 : f32 to vector<2x128xf32>
    %711 = arith.addf %710, %709 : vector<2x128xf32>
    %712 = tpu.reciprocal %711 {approx = true} : vector<2x128xf32> -> vector<2x128xf32>
    %713 = vector.extract_strided_slice %705 {offsets = [0, 128], sizes = [2, 128], strides = [1, 1]} : vector<2x512xf32> to vector<2x128xf32>
    %cst_329 = arith.constant 0.000000e+00 : f32
    %714 = vector.broadcast %cst_329 : f32 to vector<2x128xf32>
    %715 = arith.subf %714, %713 : vector<2x128xf32>
    %716 = math.exp %715 : vector<2x128xf32>
    %cst_330 = arith.constant 1.000000e+00 : f32
    %717 = vector.broadcast %cst_330 : f32 to vector<2x128xf32>
    %718 = arith.addf %717, %716 : vector<2x128xf32>
    %719 = tpu.reciprocal %718 {approx = true} : vector<2x128xf32> -> vector<2x128xf32>
    %720 = vector.extract_strided_slice %705 {offsets = [0, 256], sizes = [2, 128], strides = [1, 1]} : vector<2x512xf32> to vector<2x128xf32>
    %721 = math.tanh %720 : vector<2x128xf32>
    %722 = vector.extract_strided_slice %705 {offsets = [0, 384], sizes = [2, 128], strides = [1, 1]} : vector<2x512xf32> to vector<2x128xf32>
    %cst_331 = arith.constant 0.000000e+00 : f32
    %723 = vector.broadcast %cst_331 : f32 to vector<2x128xf32>
    %724 = arith.subf %723, %722 : vector<2x128xf32>
    %725 = math.exp %724 : vector<2x128xf32>
    %cst_332 = arith.constant 1.000000e+00 : f32
    %726 = vector.broadcast %cst_332 : f32 to vector<2x128xf32>
    %727 = arith.addf %726, %725 : vector<2x128xf32>
    %728 = tpu.reciprocal %727 {approx = true} : vector<2x128xf32> -> vector<2x128xf32>
    %729 = arith.mulf %719, %697 : vector<2x128xf32>
    %730 = arith.mulf %712, %721 : vector<2x128xf32>
    %731 = arith.addf %729, %730 : vector<2x128xf32>
    %732 = math.tanh %731 : vector<2x128xf32>
    %733 = arith.mulf %728, %732 : vector<2x128xf32>
    %c13_333 = arith.constant 13 : index
    %c0_334 = arith.constant 0 : index
    %c0_335 = arith.constant 0 : index
    %734 = vector.load %arg8[%c13_333, %c0_334, %c0_335] : memref<16x2x512xf32, #tpu.memory_space<vmem>>, vector<1x2x512xf32>
    %735 = vector.shape_cast %734 : vector<1x2x512xf32> to vector<2x512xf32>
    %736 = arith.truncf %733 : vector<2x128xf32> to vector<2x128xbf16>
    %c0_336 = arith.constant 0 : index
    %c0_337 = arith.constant 0 : index
    %737 = vector.load %arg3[%c0_336, %c0_337] : memref<128x512xbf16, #tpu.memory_space<vmem>>, vector<128x512xbf16>
    %cst_338 = arith.constant dense<0.000000e+00> : vector<2x512xf32>
    %738 = tpu.matmul %736, %737, %cst_338 {dimension_numbers = #tpu.dot_dimension_numbers<[1], [0], [0], [1], [0, 0, 1, 1], [], []>} : vector<2x128xbf16>, vector<128x512xbf16>, vector<2x512xf32> -> vector<2x512xf32>
    %739 = arith.addf %735, %738 : vector<2x512xf32>
    %740 = vector.extract_strided_slice %739 {offsets = [0, 0], sizes = [2, 128], strides = [1, 1]} : vector<2x512xf32> to vector<2x128xf32>
    %cst_339 = arith.constant 0.000000e+00 : f32
    %741 = vector.broadcast %cst_339 : f32 to vector<2x128xf32>
    %742 = arith.subf %741, %740 : vector<2x128xf32>
    %743 = math.exp %742 : vector<2x128xf32>
    %cst_340 = arith.constant 1.000000e+00 : f32
    %744 = vector.broadcast %cst_340 : f32 to vector<2x128xf32>
    %745 = arith.addf %744, %743 : vector<2x128xf32>
    %746 = tpu.reciprocal %745 {approx = true} : vector<2x128xf32> -> vector<2x128xf32>
    %747 = vector.extract_strided_slice %739 {offsets = [0, 128], sizes = [2, 128], strides = [1, 1]} : vector<2x512xf32> to vector<2x128xf32>
    %cst_341 = arith.constant 0.000000e+00 : f32
    %748 = vector.broadcast %cst_341 : f32 to vector<2x128xf32>
    %749 = arith.subf %748, %747 : vector<2x128xf32>
    %750 = math.exp %749 : vector<2x128xf32>
    %cst_342 = arith.constant 1.000000e+00 : f32
    %751 = vector.broadcast %cst_342 : f32 to vector<2x128xf32>
    %752 = arith.addf %751, %750 : vector<2x128xf32>
    %753 = tpu.reciprocal %752 {approx = true} : vector<2x128xf32> -> vector<2x128xf32>
    %754 = vector.extract_strided_slice %739 {offsets = [0, 256], sizes = [2, 128], strides = [1, 1]} : vector<2x512xf32> to vector<2x128xf32>
    %755 = math.tanh %754 : vector<2x128xf32>
    %756 = vector.extract_strided_slice %739 {offsets = [0, 384], sizes = [2, 128], strides = [1, 1]} : vector<2x512xf32> to vector<2x128xf32>
    %cst_343 = arith.constant 0.000000e+00 : f32
    %757 = vector.broadcast %cst_343 : f32 to vector<2x128xf32>
    %758 = arith.subf %757, %756 : vector<2x128xf32>
    %759 = math.exp %758 : vector<2x128xf32>
    %cst_344 = arith.constant 1.000000e+00 : f32
    %760 = vector.broadcast %cst_344 : f32 to vector<2x128xf32>
    %761 = arith.addf %760, %759 : vector<2x128xf32>
    %762 = tpu.reciprocal %761 {approx = true} : vector<2x128xf32> -> vector<2x128xf32>
    %763 = arith.mulf %753, %731 : vector<2x128xf32>
    %764 = arith.mulf %746, %755 : vector<2x128xf32>
    %765 = arith.addf %763, %764 : vector<2x128xf32>
    %766 = math.tanh %765 : vector<2x128xf32>
    %767 = arith.mulf %762, %766 : vector<2x128xf32>
    %c14_345 = arith.constant 14 : index
    %c0_346 = arith.constant 0 : index
    %c0_347 = arith.constant 0 : index
    %768 = vector.load %arg8[%c14_345, %c0_346, %c0_347] : memref<16x2x512xf32, #tpu.memory_space<vmem>>, vector<1x2x512xf32>
    %769 = vector.shape_cast %768 : vector<1x2x512xf32> to vector<2x512xf32>
    %770 = arith.truncf %767 : vector<2x128xf32> to vector<2x128xbf16>
    %c0_348 = arith.constant 0 : index
    %c0_349 = arith.constant 0 : index
    %771 = vector.load %arg3[%c0_348, %c0_349] : memref<128x512xbf16, #tpu.memory_space<vmem>>, vector<128x512xbf16>
    %cst_350 = arith.constant dense<0.000000e+00> : vector<2x512xf32>
    %772 = tpu.matmul %770, %771, %cst_350 {dimension_numbers = #tpu.dot_dimension_numbers<[1], [0], [0], [1], [0, 0, 1, 1], [], []>} : vector<2x128xbf16>, vector<128x512xbf16>, vector<2x512xf32> -> vector<2x512xf32>
    %773 = arith.addf %769, %772 : vector<2x512xf32>
    %774 = vector.extract_strided_slice %773 {offsets = [0, 0], sizes = [2, 128], strides = [1, 1]} : vector<2x512xf32> to vector<2x128xf32>
    %cst_351 = arith.constant 0.000000e+00 : f32
    %775 = vector.broadcast %cst_351 : f32 to vector<2x128xf32>
    %776 = arith.subf %775, %774 : vector<2x128xf32>
    %777 = math.exp %776 : vector<2x128xf32>
    %cst_352 = arith.constant 1.000000e+00 : f32
    %778 = vector.broadcast %cst_352 : f32 to vector<2x128xf32>
    %779 = arith.addf %778, %777 : vector<2x128xf32>
    %780 = tpu.reciprocal %779 {approx = true} : vector<2x128xf32> -> vector<2x128xf32>
    %781 = vector.extract_strided_slice %773 {offsets = [0, 128], sizes = [2, 128], strides = [1, 1]} : vector<2x512xf32> to vector<2x128xf32>
    %cst_353 = arith.constant 0.000000e+00 : f32
    %782 = vector.broadcast %cst_353 : f32 to vector<2x128xf32>
    %783 = arith.subf %782, %781 : vector<2x128xf32>
    %784 = math.exp %783 : vector<2x128xf32>
    %cst_354 = arith.constant 1.000000e+00 : f32
    %785 = vector.broadcast %cst_354 : f32 to vector<2x128xf32>
    %786 = arith.addf %785, %784 : vector<2x128xf32>
    %787 = tpu.reciprocal %786 {approx = true} : vector<2x128xf32> -> vector<2x128xf32>
    %788 = vector.extract_strided_slice %773 {offsets = [0, 256], sizes = [2, 128], strides = [1, 1]} : vector<2x512xf32> to vector<2x128xf32>
    %789 = math.tanh %788 : vector<2x128xf32>
    %790 = vector.extract_strided_slice %773 {offsets = [0, 384], sizes = [2, 128], strides = [1, 1]} : vector<2x512xf32> to vector<2x128xf32>
    %cst_355 = arith.constant 0.000000e+00 : f32
    %791 = vector.broadcast %cst_355 : f32 to vector<2x128xf32>
    %792 = arith.subf %791, %790 : vector<2x128xf32>
    %793 = math.exp %792 : vector<2x128xf32>
    %cst_356 = arith.constant 1.000000e+00 : f32
    %794 = vector.broadcast %cst_356 : f32 to vector<2x128xf32>
    %795 = arith.addf %794, %793 : vector<2x128xf32>
    %796 = tpu.reciprocal %795 {approx = true} : vector<2x128xf32> -> vector<2x128xf32>
    %797 = arith.mulf %787, %765 : vector<2x128xf32>
    %798 = arith.mulf %780, %789 : vector<2x128xf32>
    %799 = arith.addf %797, %798 : vector<2x128xf32>
    %800 = math.tanh %799 : vector<2x128xf32>
    %801 = arith.mulf %796, %800 : vector<2x128xf32>
    %c15_357 = arith.constant 15 : index
    %c0_358 = arith.constant 0 : index
    %c0_359 = arith.constant 0 : index
    %802 = vector.load %arg8[%c15_357, %c0_358, %c0_359] : memref<16x2x512xf32, #tpu.memory_space<vmem>>, vector<1x2x512xf32>
    %803 = vector.shape_cast %802 : vector<1x2x512xf32> to vector<2x512xf32>
    %804 = arith.truncf %801 : vector<2x128xf32> to vector<2x128xbf16>
    %c0_360 = arith.constant 0 : index
    %c0_361 = arith.constant 0 : index
    %805 = vector.load %arg3[%c0_360, %c0_361] : memref<128x512xbf16, #tpu.memory_space<vmem>>, vector<128x512xbf16>
    %cst_362 = arith.constant dense<0.000000e+00> : vector<2x512xf32>
    %806 = tpu.matmul %804, %805, %cst_362 {dimension_numbers = #tpu.dot_dimension_numbers<[1], [0], [0], [1], [0, 0, 1, 1], [], []>} : vector<2x128xbf16>, vector<128x512xbf16>, vector<2x512xf32> -> vector<2x512xf32>
    %807 = arith.addf %803, %806 : vector<2x512xf32>
    %808 = vector.extract_strided_slice %807 {offsets = [0, 0], sizes = [2, 128], strides = [1, 1]} : vector<2x512xf32> to vector<2x128xf32>
    %cst_363 = arith.constant 0.000000e+00 : f32
    %809 = vector.broadcast %cst_363 : f32 to vector<2x128xf32>
    %810 = arith.subf %809, %808 : vector<2x128xf32>
    %811 = math.exp %810 : vector<2x128xf32>
    %cst_364 = arith.constant 1.000000e+00 : f32
    %812 = vector.broadcast %cst_364 : f32 to vector<2x128xf32>
    %813 = arith.addf %812, %811 : vector<2x128xf32>
    %814 = tpu.reciprocal %813 {approx = true} : vector<2x128xf32> -> vector<2x128xf32>
    %815 = vector.extract_strided_slice %807 {offsets = [0, 128], sizes = [2, 128], strides = [1, 1]} : vector<2x512xf32> to vector<2x128xf32>
    %cst_365 = arith.constant 0.000000e+00 : f32
    %816 = vector.broadcast %cst_365 : f32 to vector<2x128xf32>
    %817 = arith.subf %816, %815 : vector<2x128xf32>
    %818 = math.exp %817 : vector<2x128xf32>
    %cst_366 = arith.constant 1.000000e+00 : f32
    %819 = vector.broadcast %cst_366 : f32 to vector<2x128xf32>
    %820 = arith.addf %819, %818 : vector<2x128xf32>
    %821 = tpu.reciprocal %820 {approx = true} : vector<2x128xf32> -> vector<2x128xf32>
    %822 = vector.extract_strided_slice %807 {offsets = [0, 256], sizes = [2, 128], strides = [1, 1]} : vector<2x512xf32> to vector<2x128xf32>
    %823 = math.tanh %822 : vector<2x128xf32>
    %824 = vector.extract_strided_slice %807 {offsets = [0, 384], sizes = [2, 128], strides = [1, 1]} : vector<2x512xf32> to vector<2x128xf32>
    %cst_367 = arith.constant 0.000000e+00 : f32
    %825 = vector.broadcast %cst_367 : f32 to vector<2x128xf32>
    %826 = arith.subf %825, %824 : vector<2x128xf32>
    %827 = math.exp %826 : vector<2x128xf32>
    %cst_368 = arith.constant 1.000000e+00 : f32
    %828 = vector.broadcast %cst_368 : f32 to vector<2x128xf32>
    %829 = arith.addf %828, %827 : vector<2x128xf32>
    %830 = tpu.reciprocal %829 {approx = true} : vector<2x128xf32> -> vector<2x128xf32>
    %831 = arith.mulf %821, %799 : vector<2x128xf32>
    %832 = arith.mulf %814, %823 : vector<2x128xf32>
    %833 = arith.addf %831, %832 : vector<2x128xf32>
    %834 = math.tanh %833 : vector<2x128xf32>
    %835 = arith.mulf %830, %834 : vector<2x128xf32>
    %836 = arith.truncf %835 : vector<2x128xf32> to vector<2x128xbf16>
    %c0_369 = arith.constant 0 : index
    %c0_370 = arith.constant 0 : index
    %837 = vector.load %arg5[%c0_369, %c0_370] : memref<128x128xbf16, #tpu.memory_space<vmem>>, vector<128x128xbf16>
    %cst_371 = arith.constant dense<0.000000e+00> : vector<2x128xf32>
    %838 = tpu.matmul %836, %837, %cst_371 {dimension_numbers = #tpu.dot_dimension_numbers<[1], [0], [0], [1], [0, 0, 1, 1], [], []>} : vector<2x128xbf16>, vector<128x128xbf16>, vector<2x128xf32> -> vector<2x128xf32>
    %c0_372 = arith.constant 0 : index
    %c0_373 = arith.constant 0 : index
    %839 = vector.load %arg6[%c0_372, %c0_373] : memref<1x128xf32, #tpu.memory_space<vmem>>, vector<1x128xf32>
    %840 = vector.broadcast %839 : vector<1x128xf32> to vector<2x128xf32>
    %841 = arith.addf %838, %840 : vector<2x128xf32>
    %842 = tpu.iota {dimensions = array<i32: 1>} : vector<2x128xi32>
    %c4_i32 = arith.constant 4 : i32
    %843 = vector.broadcast %c4_i32 : i32 to vector<2x128xi32>
    %844 = arith.cmpi slt, %842, %843 : vector<2x128xi32>
    %cst_374 = arith.constant -1.000000e+30 : f32
    %845 = vector.broadcast %cst_374 : f32 to vector<2x128xf32>
    %846 = arith.select %844, %841, %845 : vector<2x128xi1>, vector<2x128xf32>
    %cst_375 = arith.constant dense<0xFF800000> : vector<2xf32>
    %847 = vector.multi_reduction <maximumf>, %846, %cst_375 [1] : vector<2x128xf32> to vector<2xf32>
    %848 = vector.shape_cast %847 : vector<2xf32> to vector<2x1xf32>
    %849 = vector.broadcast %848 : vector<2x1xf32> to vector<2x128xf32>
    %850 = arith.subf %846, %849 : vector<2x128xf32>
    %851 = math.exp %850 : vector<2x128xf32>
    %cst_376 = arith.constant dense<0.000000e+00> : vector<2xf32>
    %852 = vector.multi_reduction <add>, %851, %cst_376 [1] : vector<2x128xf32> to vector<2xf32>
    %853 = vector.shape_cast %852 : vector<2xf32> to vector<2x1xf32>
    %854 = math.log %853 : vector<2x1xf32>
    %855 = vector.broadcast %854 : vector<2x1xf32> to vector<2x128xf32>
    %856 = arith.subf %850, %855 : vector<2x128xf32>
    %c0_377 = arith.constant 0 : index
    %c0_378 = arith.constant 0 : index
    %c0_379 = arith.constant 0 : index
    %857 = vector.load %arg7[%c0_377, %c0_378, %c0_379] : memref<1x2x128xf32, #tpu.memory_space<vmem>>, vector<1x2x128xf32>
    %858 = vector.shape_cast %857 : vector<1x2x128xf32> to vector<2x128xf32>
    %859 = vector.shape_cast %856 : vector<2x128xf32> to vector<1x2x128xf32>
    tpu.vector_store %arg7[%c0_377, %c0_378, %c0_379], %859 {strides = array<i32>} : memref<1x2x128xf32, #tpu.memory_space<vmem>>, vector<1x2x128xf32>,
    return
  }
  func.func @transform_0(%arg0: i32, %arg1: memref<2x16xi32, #tpu.memory_space<smem>>) -> (i32, i32) {
    %c0_i32 = arith.constant 0 : i32
    %c0_i32_0 = arith.constant 0 : i32
    %c0_i32_1 = arith.constant 0 : i32
    return %c0_i32, %c0_i32_0 : i32, i32
  }
  func.func @transform_1(%arg0: i32, %arg1: memref<2x16xi32, #tpu.memory_space<smem>>) -> (i32, i32) {
    %c0_i32 = arith.constant 0 : i32
    %c0_i32_0 = arith.constant 0 : i32
    %c0_i32_1 = arith.constant 0 : i32
    return %c0_i32, %c0_i32_0 : i32, i32
  }
  func.func @transform_2(%arg0: i32, %arg1: memref<2x16xi32, #tpu.memory_space<smem>>) -> (i32, i32) {
    %c0_i32 = arith.constant 0 : i32
    %c0_i32_0 = arith.constant 0 : i32
    %c0_i32_1 = arith.constant 0 : i32
    return %c0_i32, %c0_i32_0 : i32, i32
  }
  func.func @transform_3(%arg0: i32, %arg1: memref<2x16xi32, #tpu.memory_space<smem>>) -> (i32, i32) {
    %c0_i32 = arith.constant 0 : i32
    %c0_i32_0 = arith.constant 0 : i32
    %c0_i32_1 = arith.constant 0 : i32
    return %c0_i32, %c0_i32_0 : i32, i32
  }
  func.func @transform_4(%arg0: i32, %arg1: memref<2x16xi32, #tpu.memory_space<smem>>) -> (i32, i32) {
    %c0_i32 = arith.constant 0 : i32
    %c0_i32_0 = arith.constant 0 : i32
    %c0_i32_1 = arith.constant 0 : i32
    return %c0_i32, %c0_i32_0 : i32, i32
  }
  func.func @transform_5(%arg0: i32, %arg1: memref<2x16xi32, #tpu.memory_space<smem>>) -> (i32, i32, i32) {
    %c0_i32 = arith.constant 0 : i32
    %c0_i32_0 = arith.constant 0 : i32
    %c0_i32_1 = arith.constant 0 : i32
    return %arg0, %c0_i32, %c0_i32_0 : i32, i32, i32
  }
}

</mosaic_0001>

<llo_original>
// kernel: smallchar_rnn_forward.1
$region0: #{smallchar_rnn_forward.1}
  #allocation0 [shape = 'u32[]', space=smem, size = 0x4, offset = 0x4, fixed_abs, tag = 'smem constant byte address 0x4 - core index']
  #allocation1 [shape = 'u32[72,128]{1,0:T(1,128)}', space=vmem, size = 0x9000, scoped, tag = 'internal scratch']
  #allocation2 [shape = 'f32[16,2,512]{2,1,0:T(2,128)}', space=vmem, size = 0x10000, scoped, tag = 'scratch operand']
  #allocation3 [shape = 's32[1]{0}', space=sflag, size = 0x4, scoped, tag = 'scoped memory for smallchar_rnn_forward.1']
  #allocation4 [shape = 'u8[1024]{0}', space=smem, size = 0x400, scoped, tag = 'prefetched SMEM operand 0']
  %s0 = inlined_call_operand.vmem [shape: s32[2,16], index: 0, kind: input, shape index: {}]
  %s1 = inlined_call_operand.hbm [shape: f32[128,512], index: 1, kind: input, shape index: {}]
  %s2 = inlined_call_operand.hbm [shape: bf16[128,512], index: 2, kind: input, shape index: {}]
  %s3 = inlined_call_operand.hbm [shape: f32[1,512], index: 3, kind: input, shape index: {}]
  %s4 = inlined_call_operand.hbm [shape: bf16[128,128], index: 4, kind: input, shape index: {}]
  %s5 = inlined_call_operand.hbm [shape: f32[1,128], index: 5, kind: input, shape index: {}]
  %s6 = inlined_call_operand.hbm [shape: f32[1,2,128], index: 6, kind: output, shape index: {}]
  %s7 = sld [smem:[#allocation0]]
  $region50: #{smallchar_rnn_forward.1} parent=0
    _
  %s9 = ssub.s32 1, %s7
  %s10 = scalar_select 0, %s9, %s7
  %s12 = sshll.u32 %s0, 4
  %s13 = int_to_ptr.vmem [resolvable:$true] %s12
  %15 = dma.vmem_to_smem %s13, 32, [#allocation4], [#allocation3]
  %17 = dma.done [#allocation3], 32
  %18 = sfence
  $region1: #{smallchar_rnn_forward.1} parent=0
    #allocation5 [shape = 'u8[262144]{0}', space=vmem, size = 0x40000, scoped, tag = 'input window, operand 1, single buffered']
    #allocation6 [shape = 's32[1]{0}', space=sflag, size = 0x4, scoped, tag = 'scoped memory for smallchar_rnn_forward.1']
    #allocation7 [shape = 's32[1]{0}', space=sflag, size = 0x4, scoped, tag = 'scoped memory for smallchar_rnn_forward.1']
    #allocation8 [shape = 'u8[131072]{0}', space=vmem, size = 0x20000, scoped, tag = 'input window, operand 2, single buffered']
    #allocation9 [shape = 's32[1]{0}', space=sflag, size = 0x4, scoped, tag = 'scoped memory for smallchar_rnn_forward.1']
    #allocation10 [shape = 'u8[2048]{0}', space=vmem, size = 0x800, scoped, tag = 'input window, operand 3, single buffered']
    #allocation11 [shape = 'u8[32768]{0}', space=vmem, size = 0x8000, scoped, tag = 'input window, operand 4, single buffered']
    #allocation12 [shape = 's32[1]{0}', space=sflag, size = 0x4, scoped, tag = 'scoped memory for smallchar_rnn_forward.1']
    #allocation13 [shape = 'u8[512]{0}', space=vmem, size = 0x400, scoped, tag = 'input window, operand 5, single buffered']
    #allocation14 [shape = 'u8[1024]{0}', space=vmem, size = 0x400, scoped, tag = 'output window, operand 0, single buffered']
    %19 = vsyncpa [#allocation6], 0
    %20 = vsyncpa [#allocation9], 0
    %21 = vsyncpa [#allocation12], 0
    %22 = vsyncpa [#allocation7], 0
    // Predicated region
    $region2: #{smallchar_rnn_forward.1} parent=1 // pred_check
      _
    $region3: #{smallchar_rnn_forward.1} parent=1 // pred_check_branch
      %24 = sbr.rel (0) target = $region5
    $region4: #{smallchar_rnn_forward.1} parent=1 // pred_region
      %26 = vsyncadd [#allocation6], 0
      %s27 = sshll.u32 %s1, 4
      %s28 = int_to_ptr.hbm [resolvable:$true] %s27
      %s29 = sshll.u32 [#allocation5], 4
      %s30 = int_to_ptr.vmem [resolvable:$true] %s29
      %35 = dma.hbm_to_vmem [thread:$0]  %s28, 8192, %s30, [#allocation6], 512, 512, 32
    $region5: #{smallchar_rnn_forward.1} parent=1 // pred_fallthru
      _
    // Predicated region
    $region6: #{smallchar_rnn_forward.1} parent=1 // pred_check
      _
    $region7: #{smallchar_rnn_forward.1} parent=1 // pred_check_branch
      %37 = sbr.rel (0) target = $region9
    $region8: #{smallchar_rnn_forward.1} parent=1 // pred_region
      %39 = vsyncadd [#allocation9], 0
      %s40 = sshll.u32 %s2, 4
      %s41 = int_to_ptr.hbm [resolvable:$true] %s40
      %s42 = sshll.u32 [#allocation8], 4
      %s43 = int_to_ptr.vmem [resolvable:$true] %s42
      %48 = dma.hbm_to_vmem [thread:$0]  %s41, 4096, %s43, [#allocation9], 256, 256, 16
    $region9: #{smallchar_rnn_forward.1} parent=1 // pred_fallthru
      _
    // Predicated region
    $region10: #{smallchar_rnn_forward.1} parent=1 // pred_check
      _
    $region11: #{smallchar_rnn_forward.1} parent=1 // pred_check_branch
      %50 = sbr.rel (0) target = $region13
    $region12: #{smallchar_rnn_forward.1} parent=1 // pred_region
      %52 = vsyncadd [#allocation9], 0
      %s54 = sshll.u32 %s3, 4
      %s55 = int_to_ptr.hbm [resolvable:$true] %s54
      %s56 = sshll.u32 [#allocation10], 4
      %s57 = int_to_ptr.vmem [resolvable:$true] %s56
      %59 = dma.hbm_to_vmem [thread:$0]  %s55, 64, %s57, [#allocation9]
    $region13: #{smallchar_rnn_forward.1} parent=1 // pred_fallthru
      _
    // Predicated region
    $region14: #{smallchar_rnn_forward.1} parent=1 // pred_check
      _
    $region15: #{smallchar_rnn_forward.1} parent=1 // pred_check_branch
      %61 = sbr.rel (0) target = $region17
    $region16: #{smallchar_rnn_forward.1} parent=1 // pred_region
      %63 = vsyncadd [#allocation12], 0
      %s64 = sshll.u32 %s4, 4
      %s65 = int_to_ptr.hbm [resolvable:$true] %s64
      %s66 = sshll.u32 [#allocation11], 4
      %s67 = int_to_ptr.vmem [resolvable:$true] %s66
      %72 = dma.hbm_to_vmem [thread:$0]  %s65, 1024, %s67, [#allocation12], 64, 64, 4
    $region17: #{smallchar_rnn_forward.1} parent=1 // pred_fallthru
      _
    // Predicated region
    $region18: #{smallchar_rnn_forward.1} parent=1 // pred_check
      _
    $region19: #{smallchar_rnn_forward.1} parent=1 // pred_check_branch
      %74 = sbr.rel (0) target = $region21
    $region20: #{smallchar_rnn_forward.1} parent=1 // pred_region
      %76 = vsyncadd [#allocation12], 0
      %s78 = sshll.u32 %s5, 4
      %s79 = int_to_ptr.hbm [resolvable:$true] %s78
      %s80 = sshll.u32 [#allocation13], 4
      %s81 = int_to_ptr.vmem [resolvable:$true] %s80
      %83 = dma.hbm_to_vmem [thread:$0]  %s79, 16, %s81, [#allocation12]
    $region21: #{smallchar_rnn_forward.1} parent=1 // pred_fallthru
      _
    // Predicated region
    $region22: #{smallchar_rnn_forward.1} parent=1 // pred_check
      _
    $region23: #{smallchar_rnn_forward.1} parent=1 // pred_check_branch
      %85 = sbr.rel (0) target = $region25
    $region24: #{smallchar_rnn_forward.1} parent=1 // pred_region
      %87 = dma.done [#allocation6], 8192
    $region25: #{smallchar_rnn_forward.1} parent=1 // pred_fallthru
      _
    // Predicated region
    $region26: #{smallchar_rnn_forward.1} parent=1 // pred_check
      _
    $region27: #{smallchar_rnn_forward.1} parent=1 // pred_check_branch
      %89 = sbr.rel (0) target = $region29
    $region28: #{smallchar_rnn_forward.1} parent=1 // pred_region
      %91 = dma.done [#allocation9], 4096
    $region29: #{smallchar_rnn_forward.1} parent=1 // pred_fallthru
      _
    // Predicated region
    $region30: #{smallchar_rnn_forward.1} parent=1 // pred_check
      _
    $region31: #{smallchar_rnn_forward.1} parent=1 // pred_check_branch
      %93 = sbr.rel (0) target = $region33
    $region32: #{smallchar_rnn_forward.1} parent=1 // pred_region
      %95 = dma.done [#allocation9], 64
    $region33: #{smallchar_rnn_forward.1} parent=1 // pred_fallthru
      _
    // Predicated region
    $region34: #{smallchar_rnn_forward.1} parent=1 // pred_check
      _
    $region35: #{smallchar_rnn_forward.1} parent=1 // pred_check_branch
      %97 = sbr.rel (0) target = $region37
    $region36: #{smallchar_rnn_forward.1} parent=1 // pred_region
      %99 = dma.done [#allocation12], 1024
    $region37: #{smallchar_rnn_forward.1} parent=1 // pred_fallthru
      _
    // Predicated region
    $region38: #{smallchar_rnn_forward.1} parent=1 // pred_check
      _
    $region39: #{smallchar_rnn_forward.1} parent=1 // pred_check_branch
      %101 = sbr.rel (0) target = $region41
    $region40: #{smallchar_rnn_forward.1} parent=1 // pred_region
      %103 = dma.done [#allocation12], 16
    $region41: #{smallchar_rnn_forward.1} parent=1 // pred_fallthru
      _
    %s105 = smul.u32 0, 2
    %v106 = vld [vmem:[#allocation10] sm:$0xf]
    %s107 = smul.u32 %s105, 128
    %s108 = sld [smem:[#allocation4 + %s107]]
    %s109 = sshra.s32 %s108, 3
    %s110 = sand.u32 %s108, 7
    %s111 = sshra.s32 %s108, 3
    %s112 = sand.u32 %s108, 7
    %s113 = smul.u32 %s109, 4
    %s114 = smul.u32 %s113, 8
    %s115 = sadd.s32 %s114, %s112
    %s116 = scalar_lea.vmem [#allocation5], %s115
    %v117 = vld [vmem:[%s116] ss:$8 sm:$0xf]
    %v118 = vadd.f32 %v117, %v106
    %v119 = vlaneseq
    %vm120 = vcmp.ge.s32.totalorder %v119, 0
    %vm121 = vcmp.lt.s32.totalorder %v119, 512
    %vm122 = vmand %vm120, %vm121
    %123 = vst.msk [vmem:[#allocation2] ss:$2 sm:$0xf] %vm122, %v118
    %s124 = sadd.s32 %s105, 1
    %s125 = smul.u32 %s124, 128
    %s126 = sld [smem:[#allocation4 + %s125]]
    %s127 = sshra.s32 %s126, 3
    %s128 = sand.u32 %s126, 7
    %s129 = sshra.s32 %s126, 3
    %s130 = sand.u32 %s126, 7
    %s131 = smul.u32 %s127, 4
    %s132 = smul.u32 %s131, 8
    %s133 = sadd.s32 %s132, %s130
    %s134 = scalar_lea.vmem [#allocation5], %s133
    %v135 = vld [vmem:[%s134] ss:$8 sm:$0xf]
    %v136 = vadd.f32 %v135, %v106
    %s137 = scalar_lea.vmem [#allocation2], 1
    %138 = vst.msk [vmem:[%s137] ss:$2 sm:$0xf] %vm122, %v136
    %s139 = sadd.s32 %s107, 1
    %s140 = sld [smem:[#allocation4 + %s139]]
    %s141 = sshra.s32 %s140, 3
    %s142 = sand.u32 %s140, 7
    %s143 = sshra.s32 %s140, 3
    %s144 = sand.u32 %s140, 7
    %s145 = smul.u32 %s141, 4
    %s146 = smul.u32 %s145, 8
    %s147 = sadd.s32 %s146, %s144
    %s148 = scalar_lea.vmem [#allocation5], %s147
    %v149 = vld [vmem:[%s148] ss:$8 sm:$0xf]
    %v150 = vadd.f32 %v149, %v106
    %s151 = scalar_lea.vmem [#allocation2], 8
    %152 = vst.msk [vmem:[%s151] ss:$2 sm:$0xf] %vm122, %v150
    %s153 = sadd.s32 %s125, 1
    %s154 = sld [smem:[#allocation4 + %s153]]
    %s155 = sshra.s32 %s154, 3
    %s156 = sand.u32 %s154, 7
    %s157 = sshra.s32 %s154, 3
    %s158 = sand.u32 %s154, 7
    %s159 = smul.u32 %s155, 4
    %s160 = smul.u32 %s159, 8
    %s161 = sadd.s32 %s160, %s158
    %s162 = scalar_lea.vmem [#allocation5], %s161
    %v163 = vld [vmem:[%s162] ss:$8 sm:$0xf]
    %v164 = vadd.f32 %v163, %v106
    %s165 = scalar_lea.vmem %s151, 1 [#allocation2]
    %166 = vst.msk [vmem:[%s165] ss:$2 sm:$0xf] %vm122, %v164
    %s167 = sadd.s32 %s107, 2
    %s168 = sld [smem:[#allocation4 + %s167]]
    %s169 = sshra.s32 %s168, 3
    %s170 = sand.u32 %s168, 7
    %s171 = sshra.s32 %s168, 3
    %s172 = sand.u32 %s168, 7
    %s173 = smul.u32 %s169, 4
    %s174 = smul.u32 %s173, 8
    %s175 = sadd.s32 %s174, %s172
    %s176 = scalar_lea.vmem [#allocation5], %s175
    %v177 = vld [vmem:[%s176] ss:$8 sm:$0xf]
    %v178 = vadd.f32 %v177, %v106
    %s179 = scalar_lea.vmem [#allocation2], 16
    %180 = vst.msk [vmem:[%s179] ss:$2 sm:$0xf] %vm122, %v178
    %s181 = sadd.s32 %s125, 2
    %s182 = sld [smem:[#allocation4 + %s181]]
    %s183 = sshra.s32 %s182, 3
    %s184 = sand.u32 %s182, 7
    %s185 = sshra.s32 %s182, 3
    %s186 = sand.u32 %s182, 7
    %s187 = smul.u32 %s183, 4
    %s188 = smul.u32 %s187, 8
    %s189 = sadd.s32 %s188, %s186
    %s190 = scalar_lea.vmem [#allocation5], %s189
    %v191 = vld [vmem:[%s190] ss:$8 sm:$0xf]
    %v192 = vadd.f32 %v191, %v106
    %s193 = scalar_lea.vmem %s179, 1 [#allocation2]
    %194 = vst.msk [vmem:[%s193] ss:$2 sm:$0xf] %vm122, %v192
    %s195 = sadd.s32 %s107, 3
    %s196 = sld [smem:[#allocation4 + %s195]]
    %s197 = sshra.s32 %s196, 3
    %s198 = sand.u32 %s196, 7
    %s199 = sshra.s32 %s196, 3
    %s200 = sand.u32 %s196, 7
    %s201 = smul.u32 %s197, 4
    %s202 = smul.u32 %s201, 8
    %s203 = sadd.s32 %s202, %s200
    %s204 = scalar_lea.vmem [#allocation5], %s203
    %v205 = vld [vmem:[%s204] ss:$8 sm:$0xf]
    %v206 = vadd.f32 %v205, %v106
    %s207 = scalar_lea.vmem [#allocation2], 24
    %208 = vst.msk [vmem:[%s207] ss:$2 sm:$0xf] %vm122, %v206
    %s209 = sadd.s32 %s125, 3
    %s210 = sld [smem:[#allocation4 + %s209]]
    %s211 = sshra.s32 %s210, 3
    %s212 = sand.u32 %s210, 7
    %s213 = sshra.s32 %s210, 3
    %s214 = sand.u32 %s210, 7
    %s215 = smul.u32 %s211, 4
    %s216 = smul.u32 %s215, 8
    %s217 = sadd.s32 %s216, %s214
    %s218 = scalar_lea.vmem [#allocation5], %s217
    %v219 = vld [vmem:[%s218] ss:$8 sm:$0xf]
    %v220 = vadd.f32 %v219, %v106
    %s221 = scalar_lea.vmem %s207, 1 [#allocation2]
    %222 = vst.msk [vmem:[%s221] ss:$2 sm:$0xf] %vm122, %v220
    %s223 = sadd.s32 %s107, 4
    %s224 = sld [smem:[#allocation4 + %s223]]
    %s225 = sshra.s32 %s224, 3
    %s226 = sand.u32 %s224, 7
    %s227 = sshra.s32 %s224, 3
    %s228 = sand.u32 %s224, 7
    %s229 = smul.u32 %s225, 4
    %s230 = smul.u32 %s229, 8
    %s231 = sadd.s32 %s230, %s228
    %s232 = scalar_lea.vmem [#allocation5], %s231
    %v233 = vld [vmem:[%s232] ss:$8 sm:$0xf]
    %v234 = vadd.f32 %v233, %v106
    %s235 = scalar_lea.vmem [#allocation2], 32
    %236 = vst.msk [vmem:[%s235] ss:$2 sm:$0xf] %vm122, %v234
    %s237 = sadd.s32 %s125, 4
    %s238 = sld [smem:[#allocation4 + %s237]]
    %s239 = sshra.s32 %s238, 3
    %s240 = sand.u32 %s238, 7
    %s241 = sshra.s32 %s238, 3
    %s242 = sand.u32 %s238, 7
    %s243 = smul.u32 %s239, 4
    %s244 = smul.u32 %s243, 8
    %s245 = sadd.s32 %s244, %s242
    %s246 = scalar_lea.vmem [#allocation5], %s245
    %v247 = vld [vmem:[%s246] ss:$8 sm:$0xf]
    %v248 = vadd.f32 %v247, %v106
    %s249 = scalar_lea.vmem %s235, 1 [#allocation2]
    %250 = vst.msk [vmem:[%s249] ss:$2 sm:$0xf] %vm122, %v248
    %s251 = sadd.s32 %s107, 5
    %s252 = sld [smem:[#allocation4 + %s251]]
    %s253 = sshra.s32 %s252, 3
    %s254 = sand.u32 %s252, 7
    %s255 = sshra.s32 %s252, 3
    %s256 = sand.u32 %s252, 7
    %s257 = smul.u32 %s253, 4
    %s258 = smul.u32 %s257, 8
    %s259 = sadd.s32 %s258, %s256
    %s260 = scalar_lea.vmem [#allocation5], %s259
    %v261 = vld [vmem:[%s260] ss:$8 sm:$0xf]
    %v262 = vadd.f32 %v261, %v106
    %s263 = scalar_lea.vmem [#allocation2], 40
    %264 = vst.msk [vmem:[%s263] ss:$2 sm:$0xf] %vm122, %v262
    %s265 = sadd.s32 %s125, 5
    %s266 = sld [smem:[#allocation4 + %s265]]
    %s267 = sshra.s32 %s266, 3
    %s268 = sand.u32 %s266, 7
    %s269 = sshra.s32 %s266, 3
    %s270 = sand.u32 %s266, 7
    %s271 = smul.u32 %s267, 4
    %s272 = smul.u32 %s271, 8
    %s273 = sadd.s32 %s272, %s270
    %s274 = scalar_lea.vmem [#allocation5], %s273
    %v275 = vld [vmem:[%s274] ss:$8 sm:$0xf]
    %v276 = vadd.f32 %v275, %v106
    %s277 = scalar_lea.vmem %s263, 1 [#allocation2]
    %278 = vst.msk [vmem:[%s277] ss:$2 sm:$0xf] %vm122, %v276
    %s279 = sadd.s32 %s107, 6
    %s280 = sld [smem:[#allocation4 + %s279]]
    %s281 = sshra.s32 %s280, 3
    %s282 = sand.u32 %s280, 7
    %s283 = sshra.s32 %s280, 3
    %s284 = sand.u32 %s280, 7
    %s285 = smul.u32 %s281, 4
    %s286 = smul.u32 %s285, 8
    %s287 = sadd.s32 %s286, %s284
    %s288 = scalar_lea.vmem [#allocation5], %s287
    %v289 = vld [vmem:[%s288] ss:$8 sm:$0xf]
    %v290 = vadd.f32 %v289, %v106
    %s291 = scalar_lea.vmem [#allocation2], 48
    %292 = vst.msk [vmem:[%s291] ss:$2 sm:$0xf] %vm122, %v290
    %s293 = sadd.s32 %s125, 6
    %s294 = sld [smem:[#allocation4 + %s293]]
    %s295 = sshra.s32 %s294, 3
    %s296 = sand.u32 %s294, 7
    %s297 = sshra.s32 %s294, 3
    %s298 = sand.u32 %s294, 7
    %s299 = smul.u32 %s295, 4
    %s300 = smul.u32 %s299, 8
    %s301 = sadd.s32 %s300, %s298
    %s302 = scalar_lea.vmem [#allocation5], %s301
    %v303 = vld [vmem:[%s302] ss:$8 sm:$0xf]
    %v304 = vadd.f32 %v303, %v106
    %s305 = scalar_lea.vmem %s291, 1 [#allocation2]
    %306 = vst.msk [vmem:[%s305] ss:$2 sm:$0xf] %vm122, %v304
    %s307 = sadd.s32 %s107, 7
    %s308 = sld [smem:[#allocation4 + %s307]]
    %s309 = sshra.s32 %s308, 3
    %s310 = sand.u32 %s308, 7
    %s311 = sshra.s32 %s308, 3
    %s312 = sand.u32 %s308, 7
    %s313 = smul.u32 %s309, 4
    %s314 = smul.u32 %s313, 8
    %s315 = sadd.s32 %s314, %s312
    %s316 = scalar_lea.vmem [#allocation5], %s315
    %v317 = vld [vmem:[%s316] ss:$8 sm:$0xf]
    %v318 = vadd.f32 %v317, %v106
    %s319 = scalar_lea.vmem [#allocation2], 56
    %320 = vst.msk [vmem:[%s319] ss:$2 sm:$0xf] %vm122, %v318
    %s321 = sadd.s32 %s125, 7
    %s322 = sld [smem:[#allocation4 + %s321]]
    %s323 = sshra.s32 %s322, 3
    %s324 = sand.u32 %s322, 7
    %s325 = sshra.s32 %s322, 3
    %s326 = sand.u32 %s322, 7
    %s327 = smul.u32 %s323, 4
    %s328 = smul.u32 %s327, 8
    %s329 = sadd.s32 %s328, %s326
    %s330 = scalar_lea.vmem [#allocation5], %s329
    %v331 = vld [vmem:[%s330] ss:$8 sm:$0xf]
    %v332 = vadd.f32 %v331, %v106
    %s333 = scalar_lea.vmem %s319, 1 [#allocation2]
    %334 = vst.msk [vmem:[%s333] ss:$2 sm:$0xf] %vm122, %v332
    %s335 = sadd.s32 %s107, 8
    %s336 = sld [smem:[#allocation4 + %s335]]
    %s337 = sshra.s32 %s336, 3
    %s338 = sand.u32 %s336, 7
    %s339 = sshra.s32 %s336, 3
    %s340 = sand.u32 %s336, 7
    %s341 = smul.u32 %s337, 4
    %s342 = smul.u32 %s341, 8
    %s343 = sadd.s32 %s342, %s340
    %s344 = scalar_lea.vmem [#allocation5], %s343
    %v345 = vld [vmem:[%s344] ss:$8 sm:$0xf]
    %v346 = vadd.f32 %v345, %v106
    %s347 = scalar_lea.vmem [#allocation2], 64
    %348 = vst.msk [vmem:[%s347] ss:$2 sm:$0xf] %vm122, %v346
    %s349 = sadd.s32 %s125, 8
    %s350 = sld [smem:[#allocation4 + %s349]]
    %s351 = sshra.s32 %s350, 3
    %s352 = sand.u32 %s350, 7
    %s353 = sshra.s32 %s350, 3
    %s354 = sand.u32 %s350, 7
    %s355 = smul.u32 %s351, 4
    %s356 = smul.u32 %s355, 8
    %s357 = sadd.s32 %s356, %s354
    %s358 = scalar_lea.vmem [#allocation5], %s357
    %v359 = vld [vmem:[%s358] ss:$8 sm:$0xf]
    %v360 = vadd.f32 %v359, %v106
    %s361 = scalar_lea.vmem %s347, 1 [#allocation2]
    %362 = vst.msk [vmem:[%s361] ss:$2 sm:$0xf] %vm122, %v360
    %s363 = sadd.s32 %s107, 9
    %s364 = sld [smem:[#allocation4 + %s363]]
    %s365 = sshra.s32 %s364, 3
    %s366 = sand.u32 %s364, 7
    %s367 = sshra.s32 %s364, 3
    %s368 = sand.u32 %s364, 7
    %s369 = smul.u32 %s365, 4
    %s370 = smul.u32 %s369, 8
    %s371 = sadd.s32 %s370, %s368
    %s372 = scalar_lea.vmem [#allocation5], %s371
    %v373 = vld [vmem:[%s372] ss:$8 sm:$0xf]
    %v374 = vadd.f32 %v373, %v106
    %s375 = scalar_lea.vmem [#allocation2], 72
    %376 = vst.msk [vmem:[%s375] ss:$2 sm:$0xf] %vm122, %v374
    %s377 = sadd.s32 %s125, 9
    %s378 = sld [smem:[#allocation4 + %s377]]
    %s379 = sshra.s32 %s378, 3
    %s380 = sand.u32 %s378, 7
    %s381 = sshra.s32 %s378, 3
    %s382 = sand.u32 %s378, 7
    %s383 = smul.u32 %s379, 4
    %s384 = smul.u32 %s383, 8
    %s385 = sadd.s32 %s384, %s382
    %s386 = scalar_lea.vmem [#allocation5], %s385
    %v387 = vld [vmem:[%s386] ss:$8 sm:$0xf]
    %v388 = vadd.f32 %v387, %v106
    %s389 = scalar_lea.vmem %s375, 1 [#allocation2]
    %390 = vst.msk [vmem:[%s389] ss:$2 sm:$0xf] %vm122, %v388
    %s391 = sadd.s32 %s107, 10
    %s392 = sld [smem:[#allocation4 + %s391]]
    %s393 = sshra.s32 %s392, 3
    %s394 = sand.u32 %s392, 7
    %s395 = sshra.s32 %s392, 3
    %s396 = sand.u32 %s392, 7
    %s397 = smul.u32 %s393, 4
    %s398 = smul.u32 %s397, 8
    %s399 = sadd.s32 %s398, %s396
    %s400 = scalar_lea.vmem [#allocation5], %s399
    %v401 = vld [vmem:[%s400] ss:$8 sm:$0xf]
    %v402 = vadd.f32 %v401, %v106
    %s403 = scalar_lea.vmem [#allocation2], 80
    %404 = vst.msk [vmem:[%s403] ss:$2 sm:$0xf] %vm122, %v402
    %s405 = sadd.s32 %s125, 10
    %s406 = sld [smem:[#allocation4 + %s405]]
    %s407 = sshra.s32 %s406, 3
    %s408 = sand.u32 %s406, 7
    %s409 = sshra.s32 %s406, 3
    %s410 = sand.u32 %s406, 7
    %s411 = smul.u32 %s407, 4
    %s412 = smul.u32 %s411, 8
    %s413 = sadd.s32 %s412, %s410
    %s414 = scalar_lea.vmem [#allocation5], %s413
    %v415 = vld [vmem:[%s414] ss:$8 sm:$0xf]
    %v416 = vadd.f32 %v415, %v106
    %s417 = scalar_lea.vmem %s403, 1 [#allocation2]
    %418 = vst.msk [vmem:[%s417] ss:$2 sm:$0xf] %vm122, %v416
    %s419 = sadd.s32 %s107, 11
    %s420 = sld [smem:[#allocation4 + %s419]]
    %s421 = sshra.s32 %s420, 3
    %s422 = sand.u32 %s420, 7
    %s423 = sshra.s32 %s420, 3
    %s424 = sand.u32 %s420, 7
    %s425 = smul.u32 %s421, 4
    %s426 = smul.u32 %s425, 8
    %s427 = sadd.s32 %s426, %s424
    %s428 = scalar_lea.vmem [#allocation5], %s427
    %v429 = vld [vmem:[%s428] ss:$8 sm:$0xf]
    %v430 = vadd.f32 %v429, %v106
    %s431 = scalar_lea.vmem [#allocation2], 88
    %432 = vst.msk [vmem:[%s431] ss:$2 sm:$0xf] %vm122, %v430
    %s433 = sadd.s32 %s125, 11
    %s434 = sld [smem:[#allocation4 + %s433]]
    %s435 = sshra.s32 %s434, 3
    %s436 = sand.u32 %s434, 7
    %s437 = sshra.s32 %s434, 3
    %s438 = sand.u32 %s434, 7
    %s439 = smul.u32 %s435, 4
    %s440 = smul.u32 %s439, 8
    %s441 = sadd.s32 %s440, %s438
    %s442 = scalar_lea.vmem [#allocation5], %s441
    %v443 = vld [vmem:[%s442] ss:$8 sm:$0xf]
    %v444 = vadd.f32 %v443, %v106
    %s445 = scalar_lea.vmem %s431, 1 [#allocation2]
    %446 = vst.msk [vmem:[%s445] ss:$2 sm:$0xf] %vm122, %v444
    %s447 = sadd.s32 %s107, 12
    %s448 = sld [smem:[#allocation4 + %s447]]
    %s449 = sshra.s32 %s448, 3
    %s450 = sand.u32 %s448, 7
    %s451 = sshra.s32 %s448, 3
    %s452 = sand.u32 %s448, 7
    %s453 = smul.u32 %s449, 4
    %s454 = smul.u32 %s453, 8
    %s455 = sadd.s32 %s454, %s452
    %s456 = scalar_lea.vmem [#allocation5], %s455
    %v457 = vld [vmem:[%s456] ss:$8 sm:$0xf]
    %v458 = vadd.f32 %v457, %v106
    %s459 = scalar_lea.vmem [#allocation2], 96
    %460 = vst.msk [vmem:[%s459] ss:$2 sm:$0xf] %vm122, %v458
    %s461 = sadd.s32 %s125, 12
    %s462 = sld [smem:[#allocation4 + %s461]]
    %s463 = sshra.s32 %s462, 3
    %s464 = sand.u32 %s462, 7
    %s465 = sshra.s32 %s462, 3
    %s466 = sand.u32 %s462, 7
    %s467 = smul.u32 %s463, 4
    %s468 = smul.u32 %s467, 8
    %s469 = sadd.s32 %s468, %s466
    %s470 = scalar_lea.vmem [#allocation5], %s469
    %v471 = vld [vmem:[%s470] ss:$8 sm:$0xf]
    %v472 = vadd.f32 %v471, %v106
    %s473 = scalar_lea.vmem %s459, 1 [#allocation2]
    %474 = vst.msk [vmem:[%s473] ss:$2 sm:$0xf] %vm122, %v472
    %s475 = sadd.s32 %s107, 13
    %s476 = sld [smem:[#allocation4 + %s475]]
    %s477 = sshra.s32 %s476, 3
    %s478 = sand.u32 %s476, 7
    %s479 = sshra.s32 %s476, 3
    %s480 = sand.u32 %s476, 7
    %s481 = smul.u32 %s477, 4
    %s482 = smul.u32 %s481, 8
    %s483 = sadd.s32 %s482, %s480
    %s484 = scalar_lea.vmem [#allocation5], %s483
    %v485 = vld [vmem:[%s484] ss:$8 sm:$0xf]
    %v486 = vadd.f32 %v485, %v106
    %s487 = scalar_lea.vmem [#allocation2], 104
    %488 = vst.msk [vmem:[%s487] ss:$2 sm:$0xf] %vm122, %v486
    %s489 = sadd.s32 %s125, 13
    %s490 = sld [smem:[#allocation4 + %s489]]
    %s491 = sshra.s32 %s490, 3
    %s492 = sand.u32 %s490, 7
    %s493 = sshra.s32 %s490, 3
    %s494 = sand.u32 %s490, 7
    %s495 = smul.u32 %s491, 4
    %s496 = smul.u32 %s495, 8
    %s497 = sadd.s32 %s496, %s494
    %s498 = scalar_lea.vmem [#allocation5], %s497
    %v499 = vld [vmem:[%s498] ss:$8 sm:$0xf]
    %v500 = vadd.f32 %v499, %v106
    %s501 = scalar_lea.vmem %s487, 1 [#allocation2]
    %502 = vst.msk [vmem:[%s501] ss:$2 sm:$0xf] %vm122, %v500
    %s503 = sadd.s32 %s107, 14
    %s504 = sld [smem:[#allocation4 + %s503]]
    %s505 = sshra.s32 %s504, 3
    %s506 = sand.u32 %s504, 7
    %s507 = sshra.s32 %s504, 3
    %s508 = sand.u32 %s504, 7
    %s509 = smul.u32 %s505, 4
    %s510 = smul.u32 %s509, 8
    %s511 = sadd.s32 %s510, %s508
    %s512 = scalar_lea.vmem [#allocation5], %s511
    %v513 = vld [vmem:[%s512] ss:$8 sm:$0xf]
    %v514 = vadd.f32 %v513, %v106
    %s515 = scalar_lea.vmem [#allocation2], 112
    %516 = vst.msk [vmem:[%s515] ss:$2 sm:$0xf] %vm122, %v514
    %s517 = sadd.s32 %s125, 14
    %s518 = sld [smem:[#allocation4 + %s517]]
    %s519 = sshra.s32 %s518, 3
    %s520 = sand.u32 %s518, 7
    %s521 = sshra.s32 %s518, 3
    %s522 = sand.u32 %s518, 7
    %s523 = smul.u32 %s519, 4
    %s524 = smul.u32 %s523, 8
    %s525 = sadd.s32 %s524, %s522
    %s526 = scalar_lea.vmem [#allocation5], %s525
    %v527 = vld [vmem:[%s526] ss:$8 sm:$0xf]
    %v528 = vadd.f32 %v527, %v106
    %s529 = scalar_lea.vmem %s515, 1 [#allocation2]
    %530 = vst.msk [vmem:[%s529] ss:$2 sm:$0xf] %vm122, %v528
    %s531 = sadd.s32 %s107, 15
    %s532 = sld [smem:[#allocation4 + %s531]]
    %s533 = sshra.s32 %s532, 3
    %s534 = sand.u32 %s532, 7
    %s535 = sshra.s32 %s532, 3
    %s536 = sand.u32 %s532, 7
    %s537 = smul.u32 %s533, 4
    %s538 = smul.u32 %s537, 8
    %s539 = sadd.s32 %s538, %s536
    %s540 = scalar_lea.vmem [#allocation5], %s539
    %v541 = vld [vmem:[%s540] ss:$8 sm:$0xf]
    %v542 = vadd.f32 %v541, %v106
    %s543 = scalar_lea.vmem [#allocation2], 120
    %544 = vst.msk [vmem:[%s543] ss:$2 sm:$0xf] %vm122, %v542
    %s545 = sadd.s32 %s125, 15
    %s546 = sld [smem:[#allocation4 + %s545]]
    %s547 = sshra.s32 %s546, 3
    %s548 = sand.u32 %s546, 7
    %s549 = sshra.s32 %s546, 3
    %s550 = sand.u32 %s546, 7
    %s551 = smul.u32 %s547, 4
    %s552 = smul.u32 %s551, 8
    %s553 = sadd.s32 %s552, %s550
    %s554 = scalar_lea.vmem [#allocation5], %s553
    %v555 = vld [vmem:[%s554] ss:$8 sm:$0xf]
    %v556 = vadd.f32 %v555, %v106
    %s557 = scalar_lea.vmem %s543, 1 [#allocation2]
    %558 = vst.msk [vmem:[%s557] ss:$2 sm:$0xf] %vm122, %v556
    %v559 = vld [vmem:[#allocation2] sm:$0xff]
    %v560 = vld [vmem:[#allocation8] sm:$0xff]
    %v561 = vld [vmem:[#allocation8 + $0x8] sm:$0xff]
    %v562 = vld [vmem:[#allocation8 + $0x10] sm:$0xff]
    %v563 = vld [vmem:[#allocation8 + $0x18] sm:$0xff]
    %v564 = vld [vmem:[#allocation8 + $0x20] sm:$0xff]
    %v565 = vld [vmem:[#allocation8 + $0x28] sm:$0xff]
    %v566 = vld [vmem:[#allocation8 + $0x30] sm:$0xff]
    %v567 = vld [vmem:[#allocation8 + $0x38] sm:$0xff]
    %v568 = vld [vmem:[#allocation8 + $0x40] sm:$0xff]
    %v569 = vld [vmem:[#allocation8 + $0x48] sm:$0xff]
    %v570 = vld [vmem:[#allocation8 + $0x50] sm:$0xff]
    %v571 = vld [vmem:[#allocation8 + $0x58] sm:$0xff]
    %v572 = vld [vmem:[#allocation8 + $0x60] sm:$0xff]
    %v573 = vld [vmem:[#allocation8 + $0x68] sm:$0xff]
    %v574 = vld [vmem:[#allocation8 + $0x70] sm:$0xff]
    %v575 = vld [vmem:[#allocation8 + $0x78] sm:$0xff]
    %v576 = vld [vmem:[#allocation8 + $0x80] sm:$0xff]
    %v577 = vld [vmem:[#allocation8 + $0x88] sm:$0xff]
    %v578 = vld [vmem:[#allocation8 + $0x90] sm:$0xff]
    %v579 = vld [vmem:[#allocation8 + $0x98] sm:$0xff]
    %v580 = vld [vmem:[#allocation8 + $0xa0] sm:$0xff]
    %v581 = vld [vmem:[#allocation8 + $0xa8] sm:$0xff]
    %v582 = vld [vmem:[#allocation8 + $0xb0] sm:$0xff]
    %v583 = vld [vmem:[#allocation8 + $0xb8] sm:$0xff]
    %v584 = vld [vmem:[#allocation8 + $0xc0] sm:$0xff]
    %v585 = vld [vmem:[#allocation8 + $0xc8] sm:$0xff]
    %v586 = vld [vmem:[#allocation8 + $0xd0] sm:$0xff]
    %v587 = vld [vmem:[#allocation8 + $0xd8] sm:$0xff]
    %v588 = vld [vmem:[#allocation8 + $0xe0] sm:$0xff]
    %v589 = vld [vmem:[#allocation8 + $0xe8] sm:$0xff]
    %v590 = vld [vmem:[#allocation8 + $0xf0] sm:$0xff]
    %v591 = vld [vmem:[#allocation8 + $0xf8] sm:$0xff]
    %v624 = vunpack.c.l.b16 %v560
    %v625 = vunpack.c.h.b16 %v560
    %v626 = vunpack.c.l.b16 %v561
    %v627 = vunpack.c.h.b16 %v561
    %v628 = vunpack.c.l.b16 %v562
    %v629 = vunpack.c.h.b16 %v562
    %v630 = vunpack.c.l.b16 %v563
    %v631 = vunpack.c.h.b16 %v563
    %v632 = vunpack.c.l.b16 %v564
    %v633 = vunpack.c.h.b16 %v564
    %v634 = vunpack.c.l.b16 %v565
    %v635 = vunpack.c.h.b16 %v565
    %v636 = vunpack.c.l.b16 %v566
    %v637 = vunpack.c.h.b16 %v566
    %v638 = vunpack.c.l.b16 %v567
    %v639 = vunpack.c.h.b16 %v567
    %v640 = vunpack.c.l.b16 %v568
    %v641 = vunpack.c.h.b16 %v568
    %v642 = vunpack.c.l.b16 %v569
    %v643 = vunpack.c.h.b16 %v569
    %v644 = vunpack.c.l.b16 %v570
    %v645 = vunpack.c.h.b16 %v570
    %v646 = vunpack.c.l.b16 %v571
    %v647 = vunpack.c.h.b16 %v571
    %v648 = vunpack.c.l.b16 %v572
    %v649 = vunpack.c.h.b16 %v572
    %v650 = vunpack.c.l.b16 %v573
    %v651 = vunpack.c.h.b16 %v573
    %v652 = vunpack.c.l.b16 %v574
    %v653 = vunpack.c.h.b16 %v574
    %v654 = vunpack.c.l.b16 %v575
    %v655 = vunpack.c.h.b16 %v575
    %v656 = vunpack.c.l.b16 %v576
    %v657 = vunpack.c.h.b16 %v576
    %v658 = vunpack.c.l.b16 %v577
    %v659 = vunpack.c.h.b16 %v577
    %v660 = vunpack.c.l.b16 %v578
    %v661 = vunpack.c.h.b16 %v578
    %v662 = vunpack.c.l.b16 %v579
    %v663 = vunpack.c.h.b16 %v579
    %v664 = vunpack.c.l.b16 %v580
    %v665 = vunpack.c.h.b16 %v580
    %v666 = vunpack.c.l.b16 %v581
    %v667 = vunpack.c.h.b16 %v581
    %v668 = vunpack.c.l.b16 %v582
    %v669 = vunpack.c.h.b16 %v582
    %v670 = vunpack.c.l.b16 %v583
    %v671 = vunpack.c.h.b16 %v583
    %v672 = vunpack.c.l.b16 %v584
    %v673 = vunpack.c.h.b16 %v584
    %v674 = vunpack.c.l.b16 %v585
    %v675 = vunpack.c.h.b16 %v585
    %v676 = vunpack.c.l.b16 %v586
    %v677 = vunpack.c.h.b16 %v586
    %v678 = vunpack.c.l.b16 %v587
    %v679 = vunpack.c.h.b16 %v587
    %v680 = vunpack.c.l.b16 %v588
    %v681 = vunpack.c.h.b16 %v588
    %v682 = vunpack.c.l.b16 %v589
    %v683 = vunpack.c.h.b16 %v589
    %v684 = vunpack.c.l.b16 %v590
    %v685 = vunpack.c.h.b16 %v590
    %v686 = vunpack.c.l.b16 %v591
    %v687 = vunpack.c.h.b16 %v591
    %v688 = vpack.c.b16 %v628, %v624
    %v689 = vpack.c.b16 %v629, %v625
    %v690 = vpack.c.b16 %v630, %v626
    %v691 = vpack.c.b16 %v631, %v627
    %v692 = vpack.c.b16 %v636, %v632
    %v693 = vpack.c.b16 %v637, %v633
    %v694 = vpack.c.b16 %v638, %v634
    %v695 = vpack.c.b16 %v639, %v635
    %v696 = vpack.c.b16 %v644, %v640
    %v697 = vpack.c.b16 %v645, %v641
    %v698 = vpack.c.b16 %v646, %v642
    %v699 = vpack.c.b16 %v647, %v643
    %v700 = vpack.c.b16 %v652, %v648
    %v701 = vpack.c.b16 %v653, %v649
    %v702 = vpack.c.b16 %v654, %v650
    %v703 = vpack.c.b16 %v655, %v651
    %v704 = vpack.c.b16 %v660, %v656
    %v705 = vpack.c.b16 %v661, %v657
    %v706 = vpack.c.b16 %v662, %v658
    %v707 = vpack.c.b16 %v663, %v659
    %v708 = vpack.c.b16 %v668, %v664
    %v709 = vpack.c.b16 %v669, %v665
    %v710 = vpack.c.b16 %v670, %v666
    %v711 = vpack.c.b16 %v671, %v667
    %v712 = vpack.c.b16 %v676, %v672
    %v713 = vpack.c.b16 %v677, %v673
    %v714 = vpack.c.b16 %v678, %v674
    %v715 = vpack.c.b16 %v679, %v675
    %v716 = vpack.c.b16 %v684, %v680
    %v717 = vpack.c.b16 %v685, %v681
    %v718 = vpack.c.b16 %v686, %v682
    %v719 = vpack.c.b16 %v687, %v683
    %752 = vmatpush.bf16.msra.mxu0 %v716
    %753 = vmatpush.bf16.msra.mxu0 %v712
    %754 = vmatpush.bf16.msra.mxu0 %v708
    %755 = vmatpush.bf16.msra.mxu0 %v704
    %756 = vmatpush.bf16.msra.mxu0 %v700
    %757 = vmatpush.bf16.msra.mxu0 %v696
    %758 = vmatpush.bf16.msra.mxu0 %v692
    %759 = vmatpush.bf16.msra.mxu0 %v688
    %760 = vmatmul.bf16.gmra.mxu0 0
    %v761 = vpop.f32.mrf.mxu0
    %v762 = vadd.f32 0.0, %v761
    %v763 = vpop.f32.mrf.mxu0
    %764 = vdwg.mxu0
    %765 = vmatpush.bf16.msra.mxu0 %v717
    %766 = vmatpush.bf16.msra.mxu0 %v713
    %767 = vmatpush.bf16.msra.mxu0 %v709
    %768 = vmatpush.bf16.msra.mxu0 %v705
    %769 = vmatpush.bf16.msra.mxu0 %v701
    %770 = vmatpush.bf16.msra.mxu0 %v697
    %771 = vmatpush.bf16.msra.mxu0 %v693
    %772 = vmatpush.bf16.msra.mxu0 %v689
    %773 = vmatmul.bf16.gmra.mxu0 0
    %v774 = vpop.f32.mrf.mxu0
    %v775 = vadd.f32 0.0, %v774
    %v776 = vpop.f32.mrf.mxu0
    %777 = vdwg.mxu0
    %778 = vmatpush.bf16.msra.mxu0 %v718
    %779 = vmatpush.bf16.msra.mxu0 %v714
    %780 = vmatpush.bf16.msra.mxu0 %v710
    %781 = vmatpush.bf16.msra.mxu0 %v706
    %782 = vmatpush.bf16.msra.mxu0 %v702
    %783 = vmatpush.bf16.msra.mxu0 %v698
    %784 = vmatpush.bf16.msra.mxu0 %v694
    %785 = vmatpush.bf16.msra.mxu0 %v690
    %786 = vmatmul.bf16.gmra.mxu0 0
    %v787 = vpop.f32.mrf.mxu0
    %v788 = vadd.f32 0.0, %v787
    %v789 = vpop.f32.mrf.mxu0
    %790 = vdwg.mxu0
    %791 = vmatpush.bf16.msra.mxu0 %v719
    %792 = vmatpush.bf16.msra.mxu0 %v715
    %793 = vmatpush.bf16.msra.mxu0 %v711
    %794 = vmatpush.bf16.msra.mxu0 %v707
    %795 = vmatpush.bf16.msra.mxu0 %v703
    %796 = vmatpush.bf16.msra.mxu0 %v699
    %797 = vmatpush.bf16.msra.mxu0 %v695
    %798 = vmatpush.bf16.msra.mxu0 %v691
    %799 = vmatmul.bf16.gmra.mxu0 0
    %v800 = vpop.f32.mrf.mxu0
    %v801 = vadd.f32 0.0, %v800
    %v802 = vpop.f32.mrf.mxu0
    %803 = vdwg.mxu0
    %v808 = vrot.slane %v775, 6
    %v809 = vrot.slane %v788, 4
    %v810 = vrot.slane %v801, 2
    %vm811 = vcmask 1041408
    %v812 = vsel %vm811, %v762, %v808
    %vm813 = vcmask 1045508
    %v814 = vsel %vm813, %v809, %v810
    %vm815 = vcmask 1043456
    %v816 = vsel %vm815, %v812, %v814
    %v818 = vadd.f32 %v559, %v816
    %v819 = vsub.f32 0.0, %v818
    %v820 = vmul.f32 %v819, 1.442695
    %v821 = vpow.pop %v820
    %v822 = vadd.f32 %v821, 1.0
    %v823 = vrcp.pop %v822
    %v825 = vrot.slane %v818, 2
    %v827 = vsub.f32 0.0, %v825
    %v828 = vmul.f32 %v827, 1.442695
    %v829 = vpow.pop %v828
    %v830 = vadd.f32 %v829, 1.0
    %v831 = vrcp.pop %v830
    %v832 = vrot.slane %v818, 4
    %v834 = vtanh.pop %v832
    %v835 = vrot.slane %v818, 6
    %v837 = vsub.f32 0.0, %v835
    %v838 = vmul.f32 %v837, 1.442695
    %v839 = vpow.pop %v838
    %v840 = vadd.f32 %v839, 1.0
    %v841 = vrcp.pop %v840
    %v842 = vmul.f32 %v831, 0.0
    %v843 = vmul.f32 %v823, %v834
    %v844 = vadd.f32 %v842, %v843
    %v845 = vtanh.pop %v844
    %v846 = vmul.f32 %v841, %v845
    %v847 = vld [vmem:[%s151] sm:$0xff]
    %v848 = vpack.c.bf16 %v846, %v846
    %849 = vmatpush.bf16.msra.mxu0 %v716
    %850 = vmatpush.bf16.msra.mxu0 %v712
    %851 = vmatpush.bf16.msra.mxu0 %v708
    %852 = vmatpush.bf16.msra.mxu0 %v704
    %853 = vmatpush.bf16.msra.mxu0 %v700
    %854 = vmatpush.bf16.msra.mxu0 %v696
    %855 = vmatpush.bf16.msra.mxu0 %v692
    %856 = vmatpush.bf16.msra.mxu0 %v688
    %857 = vmatmul.bf16.gmra.mxu0 %v848
    %v858 = vpop.f32.mrf.mxu0
    %v859 = vadd.f32 0.0, %v858
    %v860 = vpop.f32.mrf.mxu0
    %861 = vdwg.mxu0
    %862 = vmatpush.bf16.msra.mxu0 %v717
    %863 = vmatpush.bf16.msra.mxu0 %v713
    %864 = vmatpush.bf16.msra.mxu0 %v709
    %865 = vmatpush.bf16.msra.mxu0 %v705
    %866 = vmatpush.bf16.msra.mxu0 %v701
    %867 = vmatpush.bf16.msra.mxu0 %v697
    %868 = vmatpush.bf16.msra.mxu0 %v693
    %869 = vmatpush.bf16.msra.mxu0 %v689
    %870 = vmatmul.bf16.gmra.mxu0 %v848
    %v871 = vpop.f32.mrf.mxu0
    %v872 = vadd.f32 0.0, %v871
    %v873 = vpop.f32.mrf.mxu0
    %874 = vdwg.mxu0
    %875 = vmatpush.bf16.msra.mxu0 %v718
    %876 = vmatpush.bf16.msra.mxu0 %v714
    %877 = vmatpush.bf16.msra.mxu0 %v710
    %878 = vmatpush.bf16.msra.mxu0 %v706
    %879 = vmatpush.bf16.msra.mxu0 %v702
    %880 = vmatpush.bf16.msra.mxu0 %v698
    %881 = vmatpush.bf16.msra.mxu0 %v694
    %882 = vmatpush.bf16.msra.mxu0 %v690
    %883 = vmatmul.bf16.gmra.mxu0 %v848
    %v884 = vpop.f32.mrf.mxu0
    %v885 = vadd.f32 0.0, %v884
    %v886 = vpop.f32.mrf.mxu0
    %887 = vdwg.mxu0
    %888 = vmatpush.bf16.msra.mxu0 %v719
    %889 = vmatpush.bf16.msra.mxu0 %v715
    %890 = vmatpush.bf16.msra.mxu0 %v711
    %891 = vmatpush.bf16.msra.mxu0 %v707
    %892 = vmatpush.bf16.msra.mxu0 %v703
    %893 = vmatpush.bf16.msra.mxu0 %v699
    %894 = vmatpush.bf16.msra.mxu0 %v695
    %895 = vmatpush.bf16.msra.mxu0 %v691
    %896 = vmatmul.bf16.gmra.mxu0 %v848
    %v897 = vpop.f32.mrf.mxu0
    %v898 = vadd.f32 0.0, %v897
    %v899 = vpop.f32.mrf.mxu0
    %900 = vdwg.mxu0
    %v905 = vrot.slane %v872, 6
    %v906 = vrot.slane %v885, 4
    %v907 = vrot.slane %v898, 2
    %v908 = vsel %vm811, %v859, %v905
    %v909 = vsel %vm813, %v906, %v907
    %v910 = vsel %vm815, %v908, %v909
    %v912 = vadd.f32 %v847, %v910
    %v913 = vsub.f32 0.0, %v912
    %v914 = vmul.f32 %v913, 1.442695
    %v915 = vpow.pop %v914
    %v916 = vadd.f32 %v915, 1.0
    %v917 = vrcp.pop %v916
    %v919 = vrot.slane %v912, 2
    %v921 = vsub.f32 0.0, %v919
    %v922 = vmul.f32 %v921, 1.442695
    %v923 = vpow.pop %v922
    %v924 = vadd.f32 %v923, 1.0
    %v925 = vrcp.pop %v924
    %v926 = vrot.slane %v912, 4
    %v928 = vtanh.pop %v926
    %v929 = vrot.slane %v912, 6
    %v931 = vsub.f32 0.0, %v929
    %v932 = vmul.f32 %v931, 1.442695
    %v933 = vpow.pop %v932
    %v934 = vadd.f32 %v933, 1.0
    %v935 = vrcp.pop %v934
    %v936 = vmul.f32 %v925, %v844
    %v937 = vmul.f32 %v917, %v928
    %v938 = vadd.f32 %v936, %v937
    %v939 = vtanh.pop %v938
    %v940 = vmul.f32 %v935, %v939
    %v941 = vld [vmem:[%s179] sm:$0xff]
    %v942 = vpack.c.bf16 %v940, %v940
    %943 = vmatpush.bf16.msra.mxu0 %v716
    %944 = vmatpush.bf16.msra.mxu0 %v712
    %945 = vmatpush.bf16.msra.mxu0 %v708
    %946 = vmatpush.bf16.msra.mxu0 %v704
    %947 = vmatpush.bf16.msra.mxu0 %v700
    %948 = vmatpush.bf16.msra.mxu0 %v696
    %949 = vmatpush.bf16.msra.mxu0 %v692
    %950 = vmatpush.bf16.msra.mxu0 %v688
    %951 = vmatmul.bf16.gmra.mxu0 %v942
    %v952 = vpop.f32.mrf.mxu0
    %v953 = vadd.f32 0.0, %v952
    %v954 = vpop.f32.mrf.mxu0
    %955 = vdwg.mxu0
    %956 = vmatpush.bf16.msra.mxu0 %v717
    %957 = vmatpush.bf16.msra.mxu0 %v713
    %958 = vmatpush.bf16.msra.mxu0 %v709
    %959 = vmatpush.bf16.msra.mxu0 %v705
    %960 = vmatpush.bf16.msra.mxu0 %v701
    %961 = vmatpush.bf16.msra.mxu0 %v697
    %962 = vmatpush.bf16.msra.mxu0 %v693
    %963 = vmatpush.bf16.msra.mxu0 %v689
    %964 = vmatmul.bf16.gmra.mxu0 %v942
    %v965 = vpop.f32.mrf.mxu0
    %v966 = vadd.f32 0.0, %v965
    %v967 = vpop.f32.mrf.mxu0
    %968 = vdwg.mxu0
    %969 = vmatpush.bf16.msra.mxu0 %v718
    %970 = vmatpush.bf16.msra.mxu0 %v714
    %971 = vmatpush.bf16.msra.mxu0 %v710
    %972 = vmatpush.bf16.msra.mxu0 %v706
    %973 = vmatpush.bf16.msra.mxu0 %v702
    %974 = vmatpush.bf16.msra.mxu0 %v698
    %975 = vmatpush.bf16.msra.mxu0 %v694
    %976 = vmatpush.bf16.msra.mxu0 %v690
    %977 = vmatmul.bf16.gmra.mxu0 %v942
    %v978 = vpop.f32.mrf.mxu0
    %v979 = vadd.f32 0.0, %v978
    %v980 = vpop.f32.mrf.mxu0
    %981 = vdwg.mxu0
    %982 = vmatpush.bf16.msra.mxu0 %v719
    %983 = vmatpush.bf16.msra.mxu0 %v715
    %984 = vmatpush.bf16.msra.mxu0 %v711
    %985 = vmatpush.bf16.msra.mxu0 %v707
    %986 = vmatpush.bf16.msra.mxu0 %v703
    %987 = vmatpush.bf16.msra.mxu0 %v699
    %988 = vmatpush.bf16.msra.mxu0 %v695
    %989 = vmatpush.bf16.msra.mxu0 %v691
    %990 = vmatmul.bf16.gmra.mxu0 %v942
    %v991 = vpop.f32.mrf.mxu0
    %v992 = vadd.f32 0.0, %v991
    %v993 = vpop.f32.mrf.mxu0
    %994 = vdwg.mxu0
    %v999 = vrot.slane %v966, 6
    %v1000 = vrot.slane %v979, 4
    %v1001 = vrot.slane %v992, 2
    %v1002 = vsel %vm811, %v953, %v999
    %v1003 = vsel %vm813, %v1000, %v1001
    %v1004 = vsel %vm815, %v1002, %v1003
    %v1006 = vadd.f32 %v941, %v1004
    %v1007 = vsub.f32 0.0, %v1006
    %v1008 = vmul.f32 %v1007, 1.442695
    %v1009 = vpow.pop %v1008
    %v1010 = vadd.f32 %v1009, 1.0
    %v1011 = vrcp.pop %v1010
    %v1013 = vrot.slane %v1006, 2
    %v1015 = vsub.f32 0.0, %v1013
    %v1016 = vmul.f32 %v1015, 1.442695
    %v1017 = vpow.pop %v1016
    %v1018 = vadd.f32 %v1017, 1.0
    %v1019 = vrcp.pop %v1018
    %v1020 = vrot.slane %v1006, 4
    %v1022 = vtanh.pop %v1020
    %v1023 = vrot.slane %v1006, 6
    %v1025 = vsub.f32 0.0, %v1023
    %v1026 = vmul.f32 %v1025, 1.442695
    %v1027 = vpow.pop %v1026
    %v1028 = vadd.f32 %v1027, 1.0
    %v1029 = vrcp.pop %v1028
    %v1030 = vmul.f32 %v1019, %v938
    %v1031 = vmul.f32 %v1011, %v1022
    %v1032 = vadd.f32 %v1030, %v1031
    %v1033 = vtanh.pop %v1032
    %v1034 = vmul.f32 %v1029, %v1033
    %v1035 = vld [vmem:[%s207] sm:$0xff]
    %v1036 = vpack.c.bf16 %v1034, %v1034
    %1037 = vmatpush.bf16.msra.mxu0 %v716
    %1038 = vmatpush.bf16.msra.mxu0 %v712
    %1039 = vmatpush.bf16.msra.mxu0 %v708
    %1040 = vmatpush.bf16.msra.mxu0 %v704
    %1041 = vmatpush.bf16.msra.mxu0 %v700
    %1042 = vmatpush.bf16.msra.mxu0 %v696
    %1043 = vmatpush.bf16.msra.mxu0 %v692
    %1044 = vmatpush.bf16.msra.mxu0 %v688
    %1045 = vmatmul.bf16.gmra.mxu0 %v1036
    %v1046 = vpop.f32.mrf.mxu0
    %v1047 = vadd.f32 0.0, %v1046
    %v1048 = vpop.f32.mrf.mxu0
    %1049 = vdwg.mxu0
    %1050 = vmatpush.bf16.msra.mxu0 %v717
    %1051 = vmatpush.bf16.msra.mxu0 %v713
    %1052 = vmatpush.bf16.msra.mxu0 %v709
    %1053 = vmatpush.bf16.msra.mxu0 %v705
    %1054 = vmatpush.bf16.msra.mxu0 %v701
    %1055 = vmatpush.bf16.msra.mxu0 %v697
    %1056 = vmatpush.bf16.msra.mxu0 %v693
    %1057 = vmatpush.bf16.msra.mxu0 %v689
    %1058 = vmatmul.bf16.gmra.mxu0 %v1036
    %v1059 = vpop.f32.mrf.mxu0
    %v1060 = vadd.f32 0.0, %v1059
    %v1061 = vpop.f32.mrf.mxu0
    %1062 = vdwg.mxu0
    %1063 = vmatpush.bf16.msra.mxu0 %v718
    %1064 = vmatpush.bf16.msra.mxu0 %v714
    %1065 = vmatpush.bf16.msra.mxu0 %v710
    %1066 = vmatpush.bf16.msra.mxu0 %v706
    %1067 = vmatpush.bf16.msra.mxu0 %v702
    %1068 = vmatpush.bf16.msra.mxu0 %v698
    %1069 = vmatpush.bf16.msra.mxu0 %v694
    %1070 = vmatpush.bf16.msra.mxu0 %v690
    %1071 = vmatmul.bf16.gmra.mxu0 %v1036
    %v1072 = vpop.f32.mrf.mxu0
    %v1073 = vadd.f32 0.0, %v1072
    %v1074 = vpop.f32.mrf.mxu0
    %1075 = vdwg.mxu0
    %1076 = vmatpush.bf16.msra.mxu0 %v719
    %1077 = vmatpush.bf16.msra.mxu0 %v715
    %1078 = vmatpush.bf16.msra.mxu0 %v711
    %1079 = vmatpush.bf16.msra.mxu0 %v707
    %1080 = vmatpush.bf16.msra.mxu0 %v703
    %1081 = vmatpush.bf16.msra.mxu0 %v699
    %1082 = vmatpush.bf16.msra.mxu0 %v695
    %1083 = vmatpush.bf16.msra.mxu0 %v691
    %1084 = vmatmul.bf16.gmra.mxu0 %v1036
    %v1085 = vpop.f32.mrf.mxu0
    %v1086 = vadd.f32 0.0, %v1085
    %v1087 = vpop.f32.mrf.mxu0
    %1088 = vdwg.mxu0
    %v1093 = vrot.slane %v1060, 6
    %v1094 = vrot.slane %v1073, 4
    %v1095 = vrot.slane %v1086, 2
    %v1096 = vsel %vm811, %v1047, %v1093
    %v1097 = vsel %vm813, %v1094, %v1095
    %v1098 = vsel %vm815, %v1096, %v1097
    %v1100 = vadd.f32 %v1035, %v1098
    %v1101 = vsub.f32 0.0, %v1100
    %v1102 = vmul.f32 %v1101, 1.442695
    %v1103 = vpow.pop %v1102
    %v1104 = vadd.f32 %v1103, 1.0
    %v1105 = vrcp.pop %v1104
    %v1107 = vrot.slane %v1100, 2
    %v1109 = vsub.f32 0.0, %v1107
    %v1110 = vmul.f32 %v1109, 1.442695
    %v1111 = vpow.pop %v1110
    %v1112 = vadd.f32 %v1111, 1.0
    %v1113 = vrcp.pop %v1112
    %v1114 = vrot.slane %v1100, 4
    %v1116 = vtanh.pop %v1114
    %v1117 = vrot.slane %v1100, 6
    %v1119 = vsub.f32 0.0, %v1117
    %v1120 = vmul.f32 %v1119, 1.442695
    %v1121 = vpow.pop %v1120
    %v1122 = vadd.f32 %v1121, 1.0
    %v1123 = vrcp.pop %v1122
    %v1124 = vmul.f32 %v1113, %v1032
    %v1125 = vmul.f32 %v1105, %v1116
    %v1126 = vadd.f32 %v1124, %v1125
    %v1127 = vtanh.pop %v1126
    %v1128 = vmul.f32 %v1123, %v1127
    %v1129 = vld [vmem:[%s235] sm:$0xff]
    %v1130 = vpack.c.bf16 %v1128, %v1128
    %1131 = vmatpush.bf16.msra.mxu0 %v716
    %1132 = vmatpush.bf16.msra.mxu0 %v712
    %1133 = vmatpush.bf16.msra.mxu0 %v708
    %1134 = vmatpush.bf16.msra.mxu0 %v704
    %1135 = vmatpush.bf16.msra.mxu0 %v700
    %1136 = vmatpush.bf16.msra.mxu0 %v696
    %1137 = vmatpush.bf16.msra.mxu0 %v692
    %1138 = vmatpush.bf16.msra.mxu0 %v688
    %1139 = vmatmul.bf16.gmra.mxu0 %v1130
    %v1140 = vpop.f32.mrf.mxu0
    %v1141 = vadd.f32 0.0, %v1140
    %v1142 = vpop.f32.mrf.mxu0
    %1143 = vdwg.mxu0
    %1144 = vmatpush.bf16.msra.mxu0 %v717
    %1145 = vmatpush.bf16.msra.mxu0 %v713
    %1146 = vmatpush.bf16.msra.mxu0 %v709
    %1147 = vmatpush.bf16.msra.mxu0 %v705
    %1148 = vmatpush.bf16.msra.mxu0 %v701
    %1149 = vmatpush.bf16.msra.mxu0 %v697
    %1150 = vmatpush.bf16.msra.mxu0 %v693
    %1151 = vmatpush.bf16.msra.mxu0 %v689
    %1152 = vmatmul.bf16.gmra.mxu0 %v1130
    %v1153 = vpop.f32.mrf.mxu0
    %v1154 = vadd.f32 0.0, %v1153
    %v1155 = vpop.f32.mrf.mxu0
    %1156 = vdwg.mxu0
    %1157 = vmatpush.bf16.msra.mxu0 %v718
    %1158 = vmatpush.bf16.msra.mxu0 %v714
    %1159 = vmatpush.bf16.msra.mxu0 %v710
    %1160 = vmatpush.bf16.msra.mxu0 %v706
    %1161 = vmatpush.bf16.msra.mxu0 %v702
    %1162 = vmatpush.bf16.msra.mxu0 %v698
    %1163 = vmatpush.bf16.msra.mxu0 %v694
    %1164 = vmatpush.bf16.msra.mxu0 %v690
    %1165 = vmatmul.bf16.gmra.mxu0 %v1130
    %v1166 = vpop.f32.mrf.mxu0
    %v1167 = vadd.f32 0.0, %v1166
    %v1168 = vpop.f32.mrf.mxu0
    %1169 = vdwg.mxu0
    %1170 = vmatpush.bf16.msra.mxu0 %v719
    %1171 = vmatpush.bf16.msra.mxu0 %v715
    %1172 = vmatpush.bf16.msra.mxu0 %v711
    %1173 = vmatpush.bf16.msra.mxu0 %v707
    %1174 = vmatpush.bf16.msra.mxu0 %v703
    %1175 = vmatpush.bf16.msra.mxu0 %v699
    %1176 = vmatpush.bf16.msra.mxu0 %v695
    %1177 = vmatpush.bf16.msra.mxu0 %v691
    %1178 = vmatmul.bf16.gmra.mxu0 %v1130
    %v1179 = vpop.f32.mrf.mxu0
    %v1180 = vadd.f32 0.0, %v1179
    %v1181 = vpop.f32.mrf.mxu0
    %1182 = vdwg.mxu0
    %v1187 = vrot.slane %v1154, 6
    %v1188 = vrot.slane %v1167, 4
    %v1189 = vrot.slane %v1180, 2
    %v1190 = vsel %vm811, %v1141, %v1187
    %v1191 = vsel %vm813, %v1188, %v1189
    %v1192 = vsel %vm815, %v1190, %v1191
    %v1194 = vadd.f32 %v1129, %v1192
    %v1195 = vsub.f32 0.0, %v1194
    %v1196 = vmul.f32 %v1195, 1.442695
    %v1197 = vpow.pop %v1196
    %v1198 = vadd.f32 %v1197, 1.0
    %v1199 = vrcp.pop %v1198
    %v1201 = vrot.slane %v1194, 2
    %v1203 = vsub.f32 0.0, %v1201
    %v1204 = vmul.f32 %v1203, 1.442695
    %v1205 = vpow.pop %v1204
    %v1206 = vadd.f32 %v1205, 1.0
    %v1207 = vrcp.pop %v1206
    %v1208 = vrot.slane %v1194, 4
    %v1210 = vtanh.pop %v1208
    %v1211 = vrot.slane %v1194, 6
    %v1213 = vsub.f32 0.0, %v1211
    %v1214 = vmul.f32 %v1213, 1.442695
    %v1215 = vpow.pop %v1214
    %v1216 = vadd.f32 %v1215, 1.0
    %v1217 = vrcp.pop %v1216
    %v1218 = vmul.f32 %v1207, %v1126
    %v1219 = vmul.f32 %v1199, %v1210
    %v1220 = vadd.f32 %v1218, %v1219
    %v1221 = vtanh.pop %v1220
    %v1222 = vmul.f32 %v1217, %v1221
    %v1223 = vld [vmem:[%s263] sm:$0xff]
    %v1224 = vpack.c.bf16 %v1222, %v1222
    %1225 = vmatpush.bf16.msra.mxu0 %v716
    %1226 = vmatpush.bf16.msra.mxu0 %v712
    %1227 = vmatpush.bf16.msra.mxu0 %v708
    %1228 = vmatpush.bf16.msra.mxu0 %v704
    %1229 = vmatpush.bf16.msra.mxu0 %v700
    %1230 = vmatpush.bf16.msra.mxu0 %v696
    %1231 = vmatpush.bf16.msra.mxu0 %v692
    %1232 = vmatpush.bf16.msra.mxu0 %v688
    %1233 = vmatmul.bf16.gmra.mxu0 %v1224
    %v1234 = vpop.f32.mrf.mxu0
    %v1235 = vadd.f32 0.0, %v1234
    %v1236 = vpop.f32.mrf.mxu0
    %1237 = vdwg.mxu0
    %1238 = vmatpush.bf16.msra.mxu0 %v717
    %1239 = vmatpush.bf16.msra.mxu0 %v713
    %1240 = vmatpush.bf16.msra.mxu0 %v709
    %1241 = vmatpush.bf16.msra.mxu0 %v705
    %1242 = vmatpush.bf16.msra.mxu0 %v701
    %1243 = vmatpush.bf16.msra.mxu0 %v697
    %1244 = vmatpush.bf16.msra.mxu0 %v693
    %1245 = vmatpush.bf16.msra.mxu0 %v689
    %1246 = vmatmul.bf16.gmra.mxu0 %v1224
    %v1247 = vpop.f32.mrf.mxu0
    %v1248 = vadd.f32 0.0, %v1247
    %v1249 = vpop.f32.mrf.mxu0
    %1250 = vdwg.mxu0
    %1251 = vmatpush.bf16.msra.mxu0 %v718
    %1252 = vmatpush.bf16.msra.mxu0 %v714
    %1253 = vmatpush.bf16.msra.mxu0 %v710
    %1254 = vmatpush.bf16.msra.mxu0 %v706
    %1255 = vmatpush.bf16.msra.mxu0 %v702
    %1256 = vmatpush.bf16.msra.mxu0 %v698
    %1257 = vmatpush.bf16.msra.mxu0 %v694
    %1258 = vmatpush.bf16.msra.mxu0 %v690
    %1259 = vmatmul.bf16.gmra.mxu0 %v1224
    %v1260 = vpop.f32.mrf.mxu0
    %v1261 = vadd.f32 0.0, %v1260
    %v1262 = vpop.f32.mrf.mxu0
    %1263 = vdwg.mxu0
    %1264 = vmatpush.bf16.msra.mxu0 %v719
    %1265 = vmatpush.bf16.msra.mxu0 %v715
    %1266 = vmatpush.bf16.msra.mxu0 %v711
    %1267 = vmatpush.bf16.msra.mxu0 %v707
    %1268 = vmatpush.bf16.msra.mxu0 %v703
    %1269 = vmatpush.bf16.msra.mxu0 %v699
    %1270 = vmatpush.bf16.msra.mxu0 %v695
    %1271 = vmatpush.bf16.msra.mxu0 %v691
    %1272 = vmatmul.bf16.gmra.mxu0 %v1224
    %v1273 = vpop.f32.mrf.mxu0
    %v1274 = vadd.f32 0.0, %v1273
    %v1275 = vpop.f32.mrf.mxu0
    %1276 = vdwg.mxu0
    %v1281 = vrot.slane %v1248, 6
    %v1282 = vrot.slane %v1261, 4
    %v1283 = vrot.slane %v1274, 2
    %v1284 = vsel %vm811, %v1235, %v1281
    %v1285 = vsel %vm813, %v1282, %v1283
    %v1286 = vsel %vm815, %v1284, %v1285
    %v1288 = vadd.f32 %v1223, %v1286
    %v1289 = vsub.f32 0.0, %v1288
    %v1290 = vmul.f32 %v1289, 1.442695
    %v1291 = vpow.pop %v1290
    %v1292 = vadd.f32 %v1291, 1.0
    %v1293 = vrcp.pop %v1292
    %v1295 = vrot.slane %v1288, 2
    %v1297 = vsub.f32 0.0, %v1295
    %v1298 = vmul.f32 %v1297, 1.442695
    %v1299 = vpow.pop %v1298
    %v1300 = vadd.f32 %v1299, 1.0
    %v1301 = vrcp.pop %v1300
    %v1302 = vrot.slane %v1288, 4
    %v1304 = vtanh.pop %v1302
    %v1305 = vrot.slane %v1288, 6
    %v1307 = vsub.f32 0.0, %v1305
    %v1308 = vmul.f32 %v1307, 1.442695
    %v1309 = vpow.pop %v1308
    %v1310 = vadd.f32 %v1309, 1.0
    %v1311 = vrcp.pop %v1310
    %v1312 = vmul.f32 %v1301, %v1220
    %v1313 = vmul.f32 %v1293, %v1304
    %v1314 = vadd.f32 %v1312, %v1313
    %v1315 = vtanh.pop %v1314
    %v1316 = vmul.f32 %v1311, %v1315
    %v1317 = vld [vmem:[%s291] sm:$0xff]
    %v1318 = vpack.c.bf16 %v1316, %v1316
    %1319 = vmatpush.bf16.msra.mxu0 %v716
    %1320 = vmatpush.bf16.msra.mxu0 %v712
    %1321 = vmatpush.bf16.msra.mxu0 %v708
    %1322 = vmatpush.bf16.msra.mxu0 %v704
    %1323 = vmatpush.bf16.msra.mxu0 %v700
    %1324 = vmatpush.bf16.msra.mxu0 %v696
    %1325 = vmatpush.bf16.msra.mxu0 %v692
    %1326 = vmatpush.bf16.msra.mxu0 %v688
    %1327 = vmatmul.bf16.gmra.mxu0 %v1318
    %v1328 = vpop.f32.mrf.mxu0
    %v1329 = vadd.f32 0.0, %v1328
    %v1330 = vpop.f32.mrf.mxu0
    %1331 = vdwg.mxu0
    %1332 = vmatpush.bf16.msra.mxu0 %v717
    %1333 = vmatpush.bf16.msra.mxu0 %v713
    %1334 = vmatpush.bf16.msra.mxu0 %v709
    %1335 = vmatpush.bf16.msra.mxu0 %v705
    %1336 = vmatpush.bf16.msra.mxu0 %v701
    %1337 = vmatpush.bf16.msra.mxu0 %v697
    %1338 = vmatpush.bf16.msra.mxu0 %v693
    %1339 = vmatpush.bf16.msra.mxu0 %v689
    %1340 = vmatmul.bf16.gmra.mxu0 %v1318
    %v1341 = vpop.f32.mrf.mxu0
    %v1342 = vadd.f32 0.0, %v1341
    %v1343 = vpop.f32.mrf.mxu0
    %1344 = vdwg.mxu0
    %1345 = vmatpush.bf16.msra.mxu0 %v718
    %1346 = vmatpush.bf16.msra.mxu0 %v714
    %1347 = vmatpush.bf16.msra.mxu0 %v710
    %1348 = vmatpush.bf16.msra.mxu0 %v706
    %1349 = vmatpush.bf16.msra.mxu0 %v702
    %1350 = vmatpush.bf16.msra.mxu0 %v698
    %1351 = vmatpush.bf16.msra.mxu0 %v694
    %1352 = vmatpush.bf16.msra.mxu0 %v690
    %1353 = vmatmul.bf16.gmra.mxu0 %v1318
    %v1354 = vpop.f32.mrf.mxu0
    %v1355 = vadd.f32 0.0, %v1354
    %v1356 = vpop.f32.mrf.mxu0
    %1357 = vdwg.mxu0
    %1358 = vmatpush.bf16.msra.mxu0 %v719
    %1359 = vmatpush.bf16.msra.mxu0 %v715
    %1360 = vmatpush.bf16.msra.mxu0 %v711
    %1361 = vmatpush.bf16.msra.mxu0 %v707
    %1362 = vmatpush.bf16.msra.mxu0 %v703
    %1363 = vmatpush.bf16.msra.mxu0 %v699
    %1364 = vmatpush.bf16.msra.mxu0 %v695
    %1365 = vmatpush.bf16.msra.mxu0 %v691
    %1366 = vmatmul.bf16.gmra.mxu0 %v1318
    %v1367 = vpop.f32.mrf.mxu0
    %v1368 = vadd.f32 0.0, %v1367
    %v1369 = vpop.f32.mrf.mxu0
    %1370 = vdwg.mxu0
    %v1375 = vrot.slane %v1342, 6
    %v1376 = vrot.slane %v1355, 4
    %v1377 = vrot.slane %v1368, 2
    %v1378 = vsel %vm811, %v1329, %v1375
    %v1379 = vsel %vm813, %v1376, %v1377
    %v1380 = vsel %vm815, %v1378, %v1379
    %v1382 = vadd.f32 %v1317, %v1380
    %v1383 = vsub.f32 0.0, %v1382
    %v1384 = vmul.f32 %v1383, 1.442695
    %v1385 = vpow.pop %v1384
    %v1386 = vadd.f32 %v1385, 1.0
    %v1387 = vrcp.pop %v1386
    %v1389 = vrot.slane %v1382, 2
    %v1391 = vsub.f32 0.0, %v1389
    %v1392 = vmul.f32 %v1391, 1.442695
    %v1393 = vpow.pop %v1392
    %v1394 = vadd.f32 %v1393, 1.0
    %v1395 = vrcp.pop %v1394
    %v1396 = vrot.slane %v1382, 4
    %v1398 = vtanh.pop %v1396
    %v1399 = vrot.slane %v1382, 6
    %v1401 = vsub.f32 0.0, %v1399
    %v1402 = vmul.f32 %v1401, 1.442695
    %v1403 = vpow.pop %v1402
    %v1404 = vadd.f32 %v1403, 1.0
    %v1405 = vrcp.pop %v1404
    %v1406 = vmul.f32 %v1395, %v1314
    %v1407 = vmul.f32 %v1387, %v1398
    %v1408 = vadd.f32 %v1406, %v1407
    %v1409 = vtanh.pop %v1408
    %v1410 = vmul.f32 %v1405, %v1409
    %v1411 = vld [vmem:[%s319] sm:$0xff]
    %v1412 = vpack.c.bf16 %v1410, %v1410
    %1413 = vmatpush.bf16.msra.mxu0 %v716
    %1414 = vmatpush.bf16.msra.mxu0 %v712
    %1415 = vmatpush.bf16.msra.mxu0 %v708
    %1416 = vmatpush.bf16.msra.mxu0 %v704
    %1417 = vmatpush.bf16.msra.mxu0 %v700
    %1418 = vmatpush.bf16.msra.mxu0 %v696
    %1419 = vmatpush.bf16.msra.mxu0 %v692
    %1420 = vmatpush.bf16.msra.mxu0 %v688
    %1421 = vmatmul.bf16.gmra.mxu0 %v1412
    %v1422 = vpop.f32.mrf.mxu0
    %v1423 = vadd.f32 0.0, %v1422
    %v1424 = vpop.f32.mrf.mxu0
    %1425 = vdwg.mxu0
    %1426 = vmatpush.bf16.msra.mxu0 %v717
    %1427 = vmatpush.bf16.msra.mxu0 %v713
    %1428 = vmatpush.bf16.msra.mxu0 %v709
    %1429 = vmatpush.bf16.msra.mxu0 %v705
    %1430 = vmatpush.bf16.msra.mxu0 %v701
    %1431 = vmatpush.bf16.msra.mxu0 %v697
    %1432 = vmatpush.bf16.msra.mxu0 %v693
    %1433 = vmatpush.bf16.msra.mxu0 %v689
    %1434 = vmatmul.bf16.gmra.mxu0 %v1412
    %v1435 = vpop.f32.mrf.mxu0
    %v1436 = vadd.f32 0.0, %v1435
    %v1437 = vpop.f32.mrf.mxu0
    %1438 = vdwg.mxu0
    %1439 = vmatpush.bf16.msra.mxu0 %v718
    %1440 = vmatpush.bf16.msra.mxu0 %v714
    %1441 = vmatpush.bf16.msra.mxu0 %v710
    %1442 = vmatpush.bf16.msra.mxu0 %v706
    %1443 = vmatpush.bf16.msra.mxu0 %v702
    %1444 = vmatpush.bf16.msra.mxu0 %v698
    %1445 = vmatpush.bf16.msra.mxu0 %v694
    %1446 = vmatpush.bf16.msra.mxu0 %v690
    %1447 = vmatmul.bf16.gmra.mxu0 %v1412
    %v1448 = vpop.f32.mrf.mxu0
    %v1449 = vadd.f32 0.0, %v1448
    %v1450 = vpop.f32.mrf.mxu0
    %1451 = vdwg.mxu0
    %1452 = vmatpush.bf16.msra.mxu0 %v719
    %1453 = vmatpush.bf16.msra.mxu0 %v715
    %1454 = vmatpush.bf16.msra.mxu0 %v711
    %1455 = vmatpush.bf16.msra.mxu0 %v707
    %1456 = vmatpush.bf16.msra.mxu0 %v703
    %1457 = vmatpush.bf16.msra.mxu0 %v699
    %1458 = vmatpush.bf16.msra.mxu0 %v695
    %1459 = vmatpush.bf16.msra.mxu0 %v691
    %1460 = vmatmul.bf16.gmra.mxu0 %v1412
    %v1461 = vpop.f32.mrf.mxu0
    %v1462 = vadd.f32 0.0, %v1461
    %v1463 = vpop.f32.mrf.mxu0
    %1464 = vdwg.mxu0
    %v1469 = vrot.slane %v1436, 6
    %v1470 = vrot.slane %v1449, 4
    %v1471 = vrot.slane %v1462, 2
    %v1472 = vsel %vm811, %v1423, %v1469
    %v1473 = vsel %vm813, %v1470, %v1471
    %v1474 = vsel %vm815, %v1472, %v1473
    %v1476 = vadd.f32 %v1411, %v1474
    %v1477 = vsub.f32 0.0, %v1476
    %v1478 = vmul.f32 %v1477, 1.442695
    %v1479 = vpow.pop %v1478
    %v1480 = vadd.f32 %v1479, 1.0
    %v1481 = vrcp.pop %v1480
    %v1483 = vrot.slane %v1476, 2
    %v1485 = vsub.f32 0.0, %v1483
    %v1486 = vmul.f32 %v1485, 1.442695
    %v1487 = vpow.pop %v1486
    %v1488 = vadd.f32 %v1487, 1.0
    %v1489 = vrcp.pop %v1488
    %v1490 = vrot.slane %v1476, 4
    %v1492 = vtanh.pop %v1490
    %v1493 = vrot.slane %v1476, 6
    %v1495 = vsub.f32 0.0, %v1493
    %v1496 = vmul.f32 %v1495, 1.442695
    %v1497 = vpow.pop %v1496
    %v1498 = vadd.f32 %v1497, 1.0
    %v1499 = vrcp.pop %v1498
    %v1500 = vmul.f32 %v1489, %v1408
    %v1501 = vmul.f32 %v1481, %v1492
    %v1502 = vadd.f32 %v1500, %v1501
    %v1503 = vtanh.pop %v1502
    %v1504 = vmul.f32 %v1499, %v1503
    %v1505 = vld [vmem:[%s347] sm:$0xff]
    %v1506 = vpack.c.bf16 %v1504, %v1504
    %1507 = vmatpush.bf16.msra.mxu0 %v716
    %1508 = vmatpush.bf16.msra.mxu0 %v712
    %1509 = vmatpush.bf16.msra.mxu0 %v708
    %1510 = vmatpush.bf16.msra.mxu0 %v704
    %1511 = vmatpush.bf16.msra.mxu0 %v700
    %1512 = vmatpush.bf16.msra.mxu0 %v696
    %1513 = vmatpush.bf16.msra.mxu0 %v692
    %1514 = vmatpush.bf16.msra.mxu0 %v688
    %1515 = vmatmul.bf16.gmra.mxu0 %v1506
    %v1516 = vpop.f32.mrf.mxu0
    %v1517 = vadd.f32 0.0, %v1516
    %v1518 = vpop.f32.mrf.mxu0
    %1519 = vdwg.mxu0
    %1520 = vmatpush.bf16.msra.mxu0 %v717
    %1521 = vmatpush.bf16.msra.mxu0 %v713
    %1522 = vmatpush.bf16.msra.mxu0 %v709
    %1523 = vmatpush.bf16.msra.mxu0 %v705
    %1524 = vmatpush.bf16.msra.mxu0 %v701
    %1525 = vmatpush.bf16.msra.mxu0 %v697
    %1526 = vmatpush.bf16.msra.mxu0 %v693
    %1527 = vmatpush.bf16.msra.mxu0 %v689
    %1528 = vmatmul.bf16.gmra.mxu0 %v1506
    %v1529 = vpop.f32.mrf.mxu0
    %v1530 = vadd.f32 0.0, %v1529
    %v1531 = vpop.f32.mrf.mxu0
    %1532 = vdwg.mxu0
    %1533 = vmatpush.bf16.msra.mxu0 %v718
    %1534 = vmatpush.bf16.msra.mxu0 %v714
    %1535 = vmatpush.bf16.msra.mxu0 %v710
    %1536 = vmatpush.bf16.msra.mxu0 %v706
    %1537 = vmatpush.bf16.msra.mxu0 %v702
    %1538 = vmatpush.bf16.msra.mxu0 %v698
    %1539 = vmatpush.bf16.msra.mxu0 %v694
    %1540 = vmatpush.bf16.msra.mxu0 %v690
    %1541 = vmatmul.bf16.gmra.mxu0 %v1506
    %v1542 = vpop.f32.mrf.mxu0
    %v1543 = vadd.f32 0.0, %v1542
    %v1544 = vpop.f32.mrf.mxu0
    %1545 = vdwg.mxu0
    %1546 = vmatpush.bf16.msra.mxu0 %v719
    %1547 = vmatpush.bf16.msra.mxu0 %v715
    %1548 = vmatpush.bf16.msra.mxu0 %v711
    %1549 = vmatpush.bf16.msra.mxu0 %v707
    %1550 = vmatpush.bf16.msra.mxu0 %v703
    %1551 = vmatpush.bf16.msra.mxu0 %v699
    %1552 = vmatpush.bf16.msra.mxu0 %v695
    %1553 = vmatpush.bf16.msra.mxu0 %v691
    %1554 = vmatmul.bf16.gmra.mxu0 %v1506
    %v1555 = vpop.f32.mrf.mxu0
    %v1556 = vadd.f32 0.0, %v1555
    %v1557 = vpop.f32.mrf.mxu0
    %1558 = vdwg.mxu0
    %v1563 = vrot.slane %v1530, 6
    %v1564 = vrot.slane %v1543, 4
    %v1565 = vrot.slane %v1556, 2
    %v1566 = vsel %vm811, %v1517, %v1563
    %v1567 = vsel %vm813, %v1564, %v1565
    %v1568 = vsel %vm815, %v1566, %v1567
    %v1570 = vadd.f32 %v1505, %v1568
    %v1571 = vsub.f32 0.0, %v1570
    %v1572 = vmul.f32 %v1571, 1.442695
    %v1573 = vpow.pop %v1572
    %v1574 = vadd.f32 %v1573, 1.0
    %v1575 = vrcp.pop %v1574
    %v1577 = vrot.slane %v1570, 2
    %v1579 = vsub.f32 0.0, %v1577
    %v1580 = vmul.f32 %v1579, 1.442695
    %v1581 = vpow.pop %v1580
    %v1582 = vadd.f32 %v1581, 1.0
    %v1583 = vrcp.pop %v1582
    %v1584 = vrot.slane %v1570, 4
    %v1586 = vtanh.pop %v1584
    %v1587 = vrot.slane %v1570, 6
    %v1589 = vsub.f32 0.0, %v1587
    %v1590 = vmul.f32 %v1589, 1.442695
    %v1591 = vpow.pop %v1590
    %v1592 = vadd.f32 %v1591, 1.0
    %v1593 = vrcp.pop %v1592
    %v1594 = vmul.f32 %v1583, %v1502
    %v1595 = vmul.f32 %v1575, %v1586
    %v1596 = vadd.f32 %v1594, %v1595
    %v1597 = vtanh.pop %v1596
    %v1598 = vmul.f32 %v1593, %v1597
    %v1599 = vld [vmem:[%s375] sm:$0xff]
    %v1600 = vpack.c.bf16 %v1598, %v1598
    %1601 = vmatpush.bf16.msra.mxu0 %v716
    %1602 = vmatpush.bf16.msra.mxu0 %v712
    %1603 = vmatpush.bf16.msra.mxu0 %v708
    %1604 = vmatpush.bf16.msra.mxu0 %v704
    %1605 = vmatpush.bf16.msra.mxu0 %v700
    %1606 = vmatpush.bf16.msra.mxu0 %v696
    %1607 = vmatpush.bf16.msra.mxu0 %v692
    %1608 = vmatpush.bf16.msra.mxu0 %v688
    %1609 = vmatmul.bf16.gmra.mxu0 %v1600
    %v1610 = vpop.f32.mrf.mxu0
    %v1611 = vadd.f32 0.0, %v1610
    %v1612 = vpop.f32.mrf.mxu0
    %1613 = vdwg.mxu0
    %1614 = vmatpush.bf16.msra.mxu0 %v717
    %1615 = vmatpush.bf16.msra.mxu0 %v713
    %1616 = vmatpush.bf16.msra.mxu0 %v709
    %1617 = vmatpush.bf16.msra.mxu0 %v705
    %1618 = vmatpush.bf16.msra.mxu0 %v701
    %1619 = vmatpush.bf16.msra.mxu0 %v697
    %1620 = vmatpush.bf16.msra.mxu0 %v693
    %1621 = vmatpush.bf16.msra.mxu0 %v689
    %1622 = vmatmul.bf16.gmra.mxu0 %v1600
    %v1623 = vpop.f32.mrf.mxu0
    %v1624 = vadd.f32 0.0, %v1623
    %v1625 = vpop.f32.mrf.mxu0
    %1626 = vdwg.mxu0
    %1627 = vmatpush.bf16.msra.mxu0 %v718
    %1628 = vmatpush.bf16.msra.mxu0 %v714
    %1629 = vmatpush.bf16.msra.mxu0 %v710
    %1630 = vmatpush.bf16.msra.mxu0 %v706
    %1631 = vmatpush.bf16.msra.mxu0 %v702
    %1632 = vmatpush.bf16.msra.mxu0 %v698
    %1633 = vmatpush.bf16.msra.mxu0 %v694
    %1634 = vmatpush.bf16.msra.mxu0 %v690
    %1635 = vmatmul.bf16.gmra.mxu0 %v1600
    %v1636 = vpop.f32.mrf.mxu0
    %v1637 = vadd.f32 0.0, %v1636
    %v1638 = vpop.f32.mrf.mxu0
    %1639 = vdwg.mxu0
    %1640 = vmatpush.bf16.msra.mxu0 %v719
    %1641 = vmatpush.bf16.msra.mxu0 %v715
    %1642 = vmatpush.bf16.msra.mxu0 %v711
    %1643 = vmatpush.bf16.msra.mxu0 %v707
    %1644 = vmatpush.bf16.msra.mxu0 %v703
    %1645 = vmatpush.bf16.msra.mxu0 %v699
    %1646 = vmatpush.bf16.msra.mxu0 %v695
    %1647 = vmatpush.bf16.msra.mxu0 %v691
    %1648 = vmatmul.bf16.gmra.mxu0 %v1600
    %v1649 = vpop.f32.mrf.mxu0
    %v1650 = vadd.f32 0.0, %v1649
    %v1651 = vpop.f32.mrf.mxu0
    %1652 = vdwg.mxu0
    %v1657 = vrot.slane %v1624, 6
    %v1658 = vrot.slane %v1637, 4
    %v1659 = vrot.slane %v1650, 2
    %v1660 = vsel %vm811, %v1611, %v1657
    %v1661 = vsel %vm813, %v1658, %v1659
    %v1662 = vsel %vm815, %v1660, %v1661
    %v1664 = vadd.f32 %v1599, %v1662
    %v1665 = vsub.f32 0.0, %v1664
    %v1666 = vmul.f32 %v1665, 1.442695
    %v1667 = vpow.pop %v1666
    %v1668 = vadd.f32 %v1667, 1.0
    %v1669 = vrcp.pop %v1668
    %v1671 = vrot.slane %v1664, 2
    %v1673 = vsub.f32 0.0, %v1671
    %v1674 = vmul.f32 %v1673, 1.442695
    %v1675 = vpow.pop %v1674
    %v1676 = vadd.f32 %v1675, 1.0
    %v1677 = vrcp.pop %v1676
    %v1678 = vrot.slane %v1664, 4
    %v1680 = vtanh.pop %v1678
    %v1681 = vrot.slane %v1664, 6
    %v1683 = vsub.f32 0.0, %v1681
    %v1684 = vmul.f32 %v1683, 1.442695
    %v1685 = vpow.pop %v1684
    %v1686 = vadd.f32 %v1685, 1.0
    %v1687 = vrcp.pop %v1686
    %v1688 = vmul.f32 %v1677, %v1596
    %v1689 = vmul.f32 %v1669, %v1680
    %v1690 = vadd.f32 %v1688, %v1689
    %v1691 = vtanh.pop %v1690
    %v1692 = vmul.f32 %v1687, %v1691
    %v1693 = vld [vmem:[%s403] sm:$0xff]
    %v1694 = vpack.c.bf16 %v1692, %v1692
    %1695 = vmatpush.bf16.msra.mxu0 %v716
    %1696 = vmatpush.bf16.msra.mxu0 %v712
    %1697 = vmatpush.bf16.msra.mxu0 %v708
    %1698 = vmatpush.bf16.msra.mxu0 %v704
    %1699 = vmatpush.bf16.msra.mxu0 %v700
    %1700 = vmatpush.bf16.msra.mxu0 %v696
    %1701 = vmatpush.bf16.msra.mxu0 %v692
    %1702 = vmatpush.bf16.msra.mxu0 %v688
    %1703 = vmatmul.bf16.gmra.mxu0 %v1694
    %v1704 = vpop.f32.mrf.mxu0
    %v1705 = vadd.f32 0.0, %v1704
    %v1706 = vpop.f32.mrf.mxu0
    %1707 = vdwg.mxu0
    %1708 = vmatpush.bf16.msra.mxu0 %v717
    %1709 = vmatpush.bf16.msra.mxu0 %v713
    %1710 = vmatpush.bf16.msra.mxu0 %v709
    %1711 = vmatpush.bf16.msra.mxu0 %v705
    %1712 = vmatpush.bf16.msra.mxu0 %v701
    %1713 = vmatpush.bf16.msra.mxu0 %v697
    %1714 = vmatpush.bf16.msra.mxu0 %v693
    %1715 = vmatpush.bf16.msra.mxu0 %v689
    %1716 = vmatmul.bf16.gmra.mxu0 %v1694
    %v1717 = vpop.f32.mrf.mxu0
    %v1718 = vadd.f32 0.0, %v1717
    %v1719 = vpop.f32.mrf.mxu0
    %1720 = vdwg.mxu0
    %1721 = vmatpush.bf16.msra.mxu0 %v718
    %1722 = vmatpush.bf16.msra.mxu0 %v714
    %1723 = vmatpush.bf16.msra.mxu0 %v710
    %1724 = vmatpush.bf16.msra.mxu0 %v706
    %1725 = vmatpush.bf16.msra.mxu0 %v702
    %1726 = vmatpush.bf16.msra.mxu0 %v698
    %1727 = vmatpush.bf16.msra.mxu0 %v694
    %1728 = vmatpush.bf16.msra.mxu0 %v690
    %1729 = vmatmul.bf16.gmra.mxu0 %v1694
    %v1730 = vpop.f32.mrf.mxu0
    %v1731 = vadd.f32 0.0, %v1730
    %v1732 = vpop.f32.mrf.mxu0
    %1733 = vdwg.mxu0
    %1734 = vmatpush.bf16.msra.mxu0 %v719
    %1735 = vmatpush.bf16.msra.mxu0 %v715
    %1736 = vmatpush.bf16.msra.mxu0 %v711
    %1737 = vmatpush.bf16.msra.mxu0 %v707
    %1738 = vmatpush.bf16.msra.mxu0 %v703
    %1739 = vmatpush.bf16.msra.mxu0 %v699
    %1740 = vmatpush.bf16.msra.mxu0 %v695
    %1741 = vmatpush.bf16.msra.mxu0 %v691
    %1742 = vmatmul.bf16.gmra.mxu0 %v1694
    %v1743 = vpop.f32.mrf.mxu0
    %v1744 = vadd.f32 0.0, %v1743
    %v1745 = vpop.f32.mrf.mxu0
    %1746 = vdwg.mxu0
    %v1751 = vrot.slane %v1718, 6
    %v1752 = vrot.slane %v1731, 4
    %v1753 = vrot.slane %v1744, 2
    %v1754 = vsel %vm811, %v1705, %v1751
    %v1755 = vsel %vm813, %v1752, %v1753
    %v1756 = vsel %vm815, %v1754, %v1755
    %v1758 = vadd.f32 %v1693, %v1756
    %v1759 = vsub.f32 0.0, %v1758
    %v1760 = vmul.f32 %v1759, 1.442695
    %v1761 = vpow.pop %v1760
    %v1762 = vadd.f32 %v1761, 1.0
    %v1763 = vrcp.pop %v1762
    %v1765 = vrot.slane %v1758, 2
    %v1767 = vsub.f32 0.0, %v1765
    %v1768 = vmul.f32 %v1767, 1.442695
    %v1769 = vpow.pop %v1768
    %v1770 = vadd.f32 %v1769, 1.0
    %v1771 = vrcp.pop %v1770
    %v1772 = vrot.slane %v1758, 4
    %v1774 = vtanh.pop %v1772
    %v1775 = vrot.slane %v1758, 6
    %v1777 = vsub.f32 0.0, %v1775
    %v1778 = vmul.f32 %v1777, 1.442695
    %v1779 = vpow.pop %v1778
    %v1780 = vadd.f32 %v1779, 1.0
    %v1781 = vrcp.pop %v1780
    %v1782 = vmul.f32 %v1771, %v1690
    %v1783 = vmul.f32 %v1763, %v1774
    %v1784 = vadd.f32 %v1782, %v1783
    %v1785 = vtanh.pop %v1784
    %v1786 = vmul.f32 %v1781, %v1785
    %v1787 = vld [vmem:[%s431] sm:$0xff]
    %v1788 = vpack.c.bf16 %v1786, %v1786
    %1789 = vmatpush.bf16.msra.mxu0 %v716
    %1790 = vmatpush.bf16.msra.mxu0 %v712
    %1791 = vmatpush.bf16.msra.mxu0 %v708
    %1792 = vmatpush.bf16.msra.mxu0 %v704
    %1793 = vmatpush.bf16.msra.mxu0 %v700
    %1794 = vmatpush.bf16.msra.mxu0 %v696
    %1795 = vmatpush.bf16.msra.mxu0 %v692
    %1796 = vmatpush.bf16.msra.mxu0 %v688
    %1797 = vmatmul.bf16.gmra.mxu0 %v1788
    %v1798 = vpop.f32.mrf.mxu0
    %v1799 = vadd.f32 0.0, %v1798
    %v1800 = vpop.f32.mrf.mxu0
    %1801 = vdwg.mxu0
    %1802 = vmatpush.bf16.msra.mxu0 %v717
    %1803 = vmatpush.bf16.msra.mxu0 %v713
    %1804 = vmatpush.bf16.msra.mxu0 %v709
    %1805 = vmatpush.bf16.msra.mxu0 %v705
    %1806 = vmatpush.bf16.msra.mxu0 %v701
    %1807 = vmatpush.bf16.msra.mxu0 %v697
    %1808 = vmatpush.bf16.msra.mxu0 %v693
    %1809 = vmatpush.bf16.msra.mxu0 %v689
    %1810 = vmatmul.bf16.gmra.mxu0 %v1788
    %v1811 = vpop.f32.mrf.mxu0
    %v1812 = vadd.f32 0.0, %v1811
    %v1813 = vpop.f32.mrf.mxu0
    %1814 = vdwg.mxu0
    %1815 = vmatpush.bf16.msra.mxu0 %v718
    %1816 = vmatpush.bf16.msra.mxu0 %v714
    %1817 = vmatpush.bf16.msra.mxu0 %v710
    %1818 = vmatpush.bf16.msra.mxu0 %v706
    %1819 = vmatpush.bf16.msra.mxu0 %v702
    %1820 = vmatpush.bf16.msra.mxu0 %v698
    %1821 = vmatpush.bf16.msra.mxu0 %v694
    %1822 = vmatpush.bf16.msra.mxu0 %v690
    %1823 = vmatmul.bf16.gmra.mxu0 %v1788
    %v1824 = vpop.f32.mrf.mxu0
    %v1825 = vadd.f32 0.0, %v1824
    %v1826 = vpop.f32.mrf.mxu0
    %1827 = vdwg.mxu0
    %1828 = vmatpush.bf16.msra.mxu0 %v719
    %1829 = vmatpush.bf16.msra.mxu0 %v715
    %1830 = vmatpush.bf16.msra.mxu0 %v711
    %1831 = vmatpush.bf16.msra.mxu0 %v707
    %1832 = vmatpush.bf16.msra.mxu0 %v703
    %1833 = vmatpush.bf16.msra.mxu0 %v699
    %1834 = vmatpush.bf16.msra.mxu0 %v695
    %1835 = vmatpush.bf16.msra.mxu0 %v691
    %1836 = vmatmul.bf16.gmra.mxu0 %v1788
    %v1837 = vpop.f32.mrf.mxu0
    %v1838 = vadd.f32 0.0, %v1837
    %v1839 = vpop.f32.mrf.mxu0
    %1840 = vdwg.mxu0
    %v1845 = vrot.slane %v1812, 6
    %v1846 = vrot.slane %v1825, 4
    %v1847 = vrot.slane %v1838, 2
    %v1848 = vsel %vm811, %v1799, %v1845
    %v1849 = vsel %vm813, %v1846, %v1847
    %v1850 = vsel %vm815, %v1848, %v1849
    %v1852 = vadd.f32 %v1787, %v1850
    %v1853 = vsub.f32 0.0, %v1852
    %v1854 = vmul.f32 %v1853, 1.442695
    %v1855 = vpow.pop %v1854
    %v1856 = vadd.f32 %v1855, 1.0
    %v1857 = vrcp.pop %v1856
    %v1859 = vrot.slane %v1852, 2
    %v1861 = vsub.f32 0.0, %v1859
    %v1862 = vmul.f32 %v1861, 1.442695
    %v1863 = vpow.pop %v1862
    %v1864 = vadd.f32 %v1863, 1.0
    %v1865 = vrcp.pop %v1864
    %v1866 = vrot.slane %v1852, 4
    %v1868 = vtanh.pop %v1866
    %v1869 = vrot.slane %v1852, 6
    %v1871 = vsub.f32 0.0, %v1869
    %v1872 = vmul.f32 %v1871, 1.442695
    %v1873 = vpow.pop %v1872
    %v1874 = vadd.f32 %v1873, 1.0
    %v1875 = vrcp.pop %v1874
    %v1876 = vmul.f32 %v1865, %v1784
    %v1877 = vmul.f32 %v1857, %v1868
    %v1878 = vadd.f32 %v1876, %v1877
    %v1879 = vtanh.pop %v1878
    %v1880 = vmul.f32 %v1875, %v1879
    %v1881 = vld [vmem:[%s459] sm:$0xff]
    %v1882 = vpack.c.bf16 %v1880, %v1880
    %1883 = vmatpush.bf16.msra.mxu0 %v716
    %1884 = vmatpush.bf16.msra.mxu0 %v712
    %1885 = vmatpush.bf16.msra.mxu0 %v708
    %1886 = vmatpush.bf16.msra.mxu0 %v704
    %1887 = vmatpush.bf16.msra.mxu0 %v700
    %1888 = vmatpush.bf16.msra.mxu0 %v696
    %1889 = vmatpush.bf16.msra.mxu0 %v692
    %1890 = vmatpush.bf16.msra.mxu0 %v688
    %1891 = vmatmul.bf16.gmra.mxu0 %v1882
    %v1892 = vpop.f32.mrf.mxu0
    %v1893 = vadd.f32 0.0, %v1892
    %v1894 = vpop.f32.mrf.mxu0
    %1895 = vdwg.mxu0
    %1896 = vmatpush.bf16.msra.mxu0 %v717
    %1897 = vmatpush.bf16.msra.mxu0 %v713
    %1898 = vmatpush.bf16.msra.mxu0 %v709
    %1899 = vmatpush.bf16.msra.mxu0 %v705
    %1900 = vmatpush.bf16.msra.mxu0 %v701
    %1901 = vmatpush.bf16.msra.mxu0 %v697
    %1902 = vmatpush.bf16.msra.mxu0 %v693
    %1903 = vmatpush.bf16.msra.mxu0 %v689
    %1904 = vmatmul.bf16.gmra.mxu0 %v1882
    %v1905 = vpop.f32.mrf.mxu0
    %v1906 = vadd.f32 0.0, %v1905
    %v1907 = vpop.f32.mrf.mxu0
    %1908 = vdwg.mxu0
    %1909 = vmatpush.bf16.msra.mxu0 %v718
    %1910 = vmatpush.bf16.msra.mxu0 %v714
    %1911 = vmatpush.bf16.msra.mxu0 %v710
    %1912 = vmatpush.bf16.msra.mxu0 %v706
    %1913 = vmatpush.bf16.msra.mxu0 %v702
    %1914 = vmatpush.bf16.msra.mxu0 %v698
    %1915 = vmatpush.bf16.msra.mxu0 %v694
    %1916 = vmatpush.bf16.msra.mxu0 %v690
    %1917 = vmatmul.bf16.gmra.mxu0 %v1882
    %v1918 = vpop.f32.mrf.mxu0
    %v1919 = vadd.f32 0.0, %v1918
    %v1920 = vpop.f32.mrf.mxu0
    %1921 = vdwg.mxu0
    %1922 = vmatpush.bf16.msra.mxu0 %v719
    %1923 = vmatpush.bf16.msra.mxu0 %v715
    %1924 = vmatpush.bf16.msra.mxu0 %v711
    %1925 = vmatpush.bf16.msra.mxu0 %v707
    %1926 = vmatpush.bf16.msra.mxu0 %v703
    %1927 = vmatpush.bf16.msra.mxu0 %v699
    %1928 = vmatpush.bf16.msra.mxu0 %v695
    %1929 = vmatpush.bf16.msra.mxu0 %v691
    %1930 = vmatmul.bf16.gmra.mxu0 %v1882
    %v1931 = vpop.f32.mrf.mxu0
    %v1932 = vadd.f32 0.0, %v1931
    %v1933 = vpop.f32.mrf.mxu0
    %1934 = vdwg.mxu0
    %v1939 = vrot.slane %v1906, 6
    %v1940 = vrot.slane %v1919, 4
    %v1941 = vrot.slane %v1932, 2
    %v1942 = vsel %vm811, %v1893, %v1939
    %v1943 = vsel %vm813, %v1940, %v1941
    %v1944 = vsel %vm815, %v1942, %v1943
    %v1946 = vadd.f32 %v1881, %v1944
    %v1947 = vsub.f32 0.0, %v1946
    %v1948 = vmul.f32 %v1947, 1.442695
    %v1949 = vpow.pop %v1948
    %v1950 = vadd.f32 %v1949, 1.0
    %v1951 = vrcp.pop %v1950
    %v1953 = vrot.slane %v1946, 2
    %v1955 = vsub.f32 0.0, %v1953
    %v1956 = vmul.f32 %v1955, 1.442695
    %v1957 = vpow.pop %v1956
    %v1958 = vadd.f32 %v1957, 1.0
    %v1959 = vrcp.pop %v1958
    %v1960 = vrot.slane %v1946, 4
    %v1962 = vtanh.pop %v1960
    %v1963 = vrot.slane %v1946, 6
    %v1965 = vsub.f32 0.0, %v1963
    %v1966 = vmul.f32 %v1965, 1.442695
    %v1967 = vpow.pop %v1966
    %v1968 = vadd.f32 %v1967, 1.0
    %v1969 = vrcp.pop %v1968
    %v1970 = vmul.f32 %v1959, %v1878
    %v1971 = vmul.f32 %v1951, %v1962
    %v1972 = vadd.f32 %v1970, %v1971
    %v1973 = vtanh.pop %v1972
    %v1974 = vmul.f32 %v1969, %v1973
    %v1975 = vld [vmem:[%s487] sm:$0xff]
    %v1976 = vpack.c.bf16 %v1974, %v1974
    %1977 = vmatpush.bf16.msra.mxu0 %v716
    %1978 = vmatpush.bf16.msra.mxu0 %v712
    %1979 = vmatpush.bf16.msra.mxu0 %v708
    %1980 = vmatpush.bf16.msra.mxu0 %v704
    %1981 = vmatpush.bf16.msra.mxu0 %v700
    %1982 = vmatpush.bf16.msra.mxu0 %v696
    %1983 = vmatpush.bf16.msra.mxu0 %v692
    %1984 = vmatpush.bf16.msra.mxu0 %v688
    %1985 = vmatmul.bf16.gmra.mxu0 %v1976
    %v1986 = vpop.f32.mrf.mxu0
    %v1987 = vadd.f32 0.0, %v1986
    %v1988 = vpop.f32.mrf.mxu0
    %1989 = vdwg.mxu0
    %1990 = vmatpush.bf16.msra.mxu0 %v717
    %1991 = vmatpush.bf16.msra.mxu0 %v713
    %1992 = vmatpush.bf16.msra.mxu0 %v709
    %1993 = vmatpush.bf16.msra.mxu0 %v705
    %1994 = vmatpush.bf16.msra.mxu0 %v701
    %1995 = vmatpush.bf16.msra.mxu0 %v697
    %1996 = vmatpush.bf16.msra.mxu0 %v693
    %1997 = vmatpush.bf16.msra.mxu0 %v689
    %1998 = vmatmul.bf16.gmra.mxu0 %v1976
    %v1999 = vpop.f32.mrf.mxu0
    %v2000 = vadd.f32 0.0, %v1999
    %v2001 = vpop.f32.mrf.mxu0
    %2002 = vdwg.mxu0
    %2003 = vmatpush.bf16.msra.mxu0 %v718
    %2004 = vmatpush.bf16.msra.mxu0 %v714
    %2005 = vmatpush.bf16.msra.mxu0 %v710
    %2006 = vmatpush.bf16.msra.mxu0 %v706
    %2007 = vmatpush.bf16.msra.mxu0 %v702
    %2008 = vmatpush.bf16.msra.mxu0 %v698
    %2009 = vmatpush.bf16.msra.mxu0 %v694
    %2010 = vmatpush.bf16.msra.mxu0 %v690
    %2011 = vmatmul.bf16.gmra.mxu0 %v1976
    %v2012 = vpop.f32.mrf.mxu0
    %v2013 = vadd.f32 0.0, %v2012
    %v2014 = vpop.f32.mrf.mxu0
    %2015 = vdwg.mxu0
    %2016 = vmatpush.bf16.msra.mxu0 %v719
    %2017 = vmatpush.bf16.msra.mxu0 %v715
    %2018 = vmatpush.bf16.msra.mxu0 %v711
    %2019 = vmatpush.bf16.msra.mxu0 %v707
    %2020 = vmatpush.bf16.msra.mxu0 %v703
    %2021 = vmatpush.bf16.msra.mxu0 %v699
    %2022 = vmatpush.bf16.msra.mxu0 %v695
    %2023 = vmatpush.bf16.msra.mxu0 %v691
    %2024 = vmatmul.bf16.gmra.mxu0 %v1976
    %v2025 = vpop.f32.mrf.mxu0
    %v2026 = vadd.f32 0.0, %v2025
    %v2027 = vpop.f32.mrf.mxu0
    %2028 = vdwg.mxu0
    %v2033 = vrot.slane %v2000, 6
    %v2034 = vrot.slane %v2013, 4
    %v2035 = vrot.slane %v2026, 2
    %v2036 = vsel %vm811, %v1987, %v2033
    %v2037 = vsel %vm813, %v2034, %v2035
    %v2038 = vsel %vm815, %v2036, %v2037
    %v2040 = vadd.f32 %v1975, %v2038
    %v2041 = vsub.f32 0.0, %v2040
    %v2042 = vmul.f32 %v2041, 1.442695
    %v2043 = vpow.pop %v2042
    %v2044 = vadd.f32 %v2043, 1.0
    %v2045 = vrcp.pop %v2044
    %v2047 = vrot.slane %v2040, 2
    %v2049 = vsub.f32 0.0, %v2047
    %v2050 = vmul.f32 %v2049, 1.442695
    %v2051 = vpow.pop %v2050
    %v2052 = vadd.f32 %v2051, 1.0
    %v2053 = vrcp.pop %v2052
    %v2054 = vrot.slane %v2040, 4
    %v2056 = vtanh.pop %v2054
    %v2057 = vrot.slane %v2040, 6
    %v2059 = vsub.f32 0.0, %v2057
    %v2060 = vmul.f32 %v2059, 1.442695
    %v2061 = vpow.pop %v2060
    %v2062 = vadd.f32 %v2061, 1.0
    %v2063 = vrcp.pop %v2062
    %v2064 = vmul.f32 %v2053, %v1972
    %v2065 = vmul.f32 %v2045, %v2056
    %v2066 = vadd.f32 %v2064, %v2065
    %v2067 = vtanh.pop %v2066
    %v2068 = vmul.f32 %v2063, %v2067
    %v2069 = vld [vmem:[%s515] sm:$0xff]
    %v2070 = vpack.c.bf16 %v2068, %v2068
    %2071 = vmatpush.bf16.msra.mxu0 %v716
    %2072 = vmatpush.bf16.msra.mxu0 %v712
    %2073 = vmatpush.bf16.msra.mxu0 %v708
    %2074 = vmatpush.bf16.msra.mxu0 %v704
    %2075 = vmatpush.bf16.msra.mxu0 %v700
    %2076 = vmatpush.bf16.msra.mxu0 %v696
    %2077 = vmatpush.bf16.msra.mxu0 %v692
    %2078 = vmatpush.bf16.msra.mxu0 %v688
    %2079 = vmatmul.bf16.gmra.mxu0 %v2070
    %v2080 = vpop.f32.mrf.mxu0
    %v2081 = vadd.f32 0.0, %v2080
    %v2082 = vpop.f32.mrf.mxu0
    %2083 = vdwg.mxu0
    %2084 = vmatpush.bf16.msra.mxu0 %v717
    %2085 = vmatpush.bf16.msra.mxu0 %v713
    %2086 = vmatpush.bf16.msra.mxu0 %v709
    %2087 = vmatpush.bf16.msra.mxu0 %v705
    %2088 = vmatpush.bf16.msra.mxu0 %v701
    %2089 = vmatpush.bf16.msra.mxu0 %v697
    %2090 = vmatpush.bf16.msra.mxu0 %v693
    %2091 = vmatpush.bf16.msra.mxu0 %v689
    %2092 = vmatmul.bf16.gmra.mxu0 %v2070
    %v2093 = vpop.f32.mrf.mxu0
    %v2094 = vadd.f32 0.0, %v2093
    %v2095 = vpop.f32.mrf.mxu0
    %2096 = vdwg.mxu0
    %2097 = vmatpush.bf16.msra.mxu0 %v718
    %2098 = vmatpush.bf16.msra.mxu0 %v714
    %2099 = vmatpush.bf16.msra.mxu0 %v710
    %2100 = vmatpush.bf16.msra.mxu0 %v706
    %2101 = vmatpush.bf16.msra.mxu0 %v702
    %2102 = vmatpush.bf16.msra.mxu0 %v698
    %2103 = vmatpush.bf16.msra.mxu0 %v694
    %2104 = vmatpush.bf16.msra.mxu0 %v690
    %2105 = vmatmul.bf16.gmra.mxu0 %v2070
    %v2106 = vpop.f32.mrf.mxu0
    %v2107 = vadd.f32 0.0, %v2106
    %v2108 = vpop.f32.mrf.mxu0
    %2109 = vdwg.mxu0
    %2110 = vmatpush.bf16.msra.mxu0 %v719
    %2111 = vmatpush.bf16.msra.mxu0 %v715
    %2112 = vmatpush.bf16.msra.mxu0 %v711
    %2113 = vmatpush.bf16.msra.mxu0 %v707
    %2114 = vmatpush.bf16.msra.mxu0 %v703
    %2115 = vmatpush.bf16.msra.mxu0 %v699
    %2116 = vmatpush.bf16.msra.mxu0 %v695
    %2117 = vmatpush.bf16.msra.mxu0 %v691
    %2118 = vmatmul.bf16.gmra.mxu0 %v2070
    %v2119 = vpop.f32.mrf.mxu0
    %v2120 = vadd.f32 0.0, %v2119
    %v2121 = vpop.f32.mrf.mxu0
    %2122 = vdwg.mxu0
    %v2127 = vrot.slane %v2094, 6
    %v2128 = vrot.slane %v2107, 4
    %v2129 = vrot.slane %v2120, 2
    %v2130 = vsel %vm811, %v2081, %v2127
    %v2131 = vsel %vm813, %v2128, %v2129
    %v2132 = vsel %vm815, %v2130, %v2131
    %v2134 = vadd.f32 %v2069, %v2132
    %v2135 = vsub.f32 0.0, %v2134
    %v2136 = vmul.f32 %v2135, 1.442695
    %v2137 = vpow.pop %v2136
    %v2138 = vadd.f32 %v2137, 1.0
    %v2139 = vrcp.pop %v2138
    %v2141 = vrot.slane %v2134, 2
    %v2143 = vsub.f32 0.0, %v2141
    %v2144 = vmul.f32 %v2143, 1.442695
    %v2145 = vpow.pop %v2144
    %v2146 = vadd.f32 %v2145, 1.0
    %v2147 = vrcp.pop %v2146
    %v2148 = vrot.slane %v2134, 4
    %v2150 = vtanh.pop %v2148
    %v2151 = vrot.slane %v2134, 6
    %v2153 = vsub.f32 0.0, %v2151
    %v2154 = vmul.f32 %v2153, 1.442695
    %v2155 = vpow.pop %v2154
    %v2156 = vadd.f32 %v2155, 1.0
    %v2157 = vrcp.pop %v2156
    %v2158 = vmul.f32 %v2147, %v2066
    %v2159 = vmul.f32 %v2139, %v2150
    %v2160 = vadd.f32 %v2158, %v2159
    %v2161 = vtanh.pop %v2160
    %v2162 = vmul.f32 %v2157, %v2161
    %v2163 = vld [vmem:[%s543] sm:$0xff]
    %v2164 = vpack.c.bf16 %v2162, %v2162
    %2165 = vmatpush.bf16.msra.mxu0 %v716
    %2166 = vmatpush.bf16.msra.mxu0 %v712
    %2167 = vmatpush.bf16.msra.mxu0 %v708
    %2168 = vmatpush.bf16.msra.mxu0 %v704
    %2169 = vmatpush.bf16.msra.mxu0 %v700
    %2170 = vmatpush.bf16.msra.mxu0 %v696
    %2171 = vmatpush.bf16.msra.mxu0 %v692
    %2172 = vmatpush.bf16.msra.mxu0 %v688
    %2173 = vmatmul.bf16.gmra.mxu0 %v2164
    %v2174 = vpop.f32.mrf.mxu0
    %v2175 = vadd.f32 0.0, %v2174
    %v2176 = vpop.f32.mrf.mxu0
    %2177 = vdwg.mxu0
    %2178 = vmatpush.bf16.msra.mxu0 %v717
    %2179 = vmatpush.bf16.msra.mxu0 %v713
    %2180 = vmatpush.bf16.msra.mxu0 %v709
    %2181 = vmatpush.bf16.msra.mxu0 %v705
    %2182 = vmatpush.bf16.msra.mxu0 %v701
    %2183 = vmatpush.bf16.msra.mxu0 %v697
    %2184 = vmatpush.bf16.msra.mxu0 %v693
    %2185 = vmatpush.bf16.msra.mxu0 %v689
    %2186 = vmatmul.bf16.gmra.mxu0 %v2164
    %v2187 = vpop.f32.mrf.mxu0
    %v2188 = vadd.f32 0.0, %v2187
    %v2189 = vpop.f32.mrf.mxu0
    %2190 = vdwg.mxu0
    %2191 = vmatpush.bf16.msra.mxu0 %v718
    %2192 = vmatpush.bf16.msra.mxu0 %v714
    %2193 = vmatpush.bf16.msra.mxu0 %v710
    %2194 = vmatpush.bf16.msra.mxu0 %v706
    %2195 = vmatpush.bf16.msra.mxu0 %v702
    %2196 = vmatpush.bf16.msra.mxu0 %v698
    %2197 = vmatpush.bf16.msra.mxu0 %v694
    %2198 = vmatpush.bf16.msra.mxu0 %v690
    %2199 = vmatmul.bf16.gmra.mxu0 %v2164
    %v2200 = vpop.f32.mrf.mxu0
    %v2201 = vadd.f32 0.0, %v2200
    %v2202 = vpop.f32.mrf.mxu0
    %2203 = vdwg.mxu0
    %2204 = vmatpush.bf16.msra.mxu0 %v719
    %2205 = vmatpush.bf16.msra.mxu0 %v715
    %2206 = vmatpush.bf16.msra.mxu0 %v711
    %2207 = vmatpush.bf16.msra.mxu0 %v707
    %2208 = vmatpush.bf16.msra.mxu0 %v703
    %2209 = vmatpush.bf16.msra.mxu0 %v699
    %2210 = vmatpush.bf16.msra.mxu0 %v695
    %2211 = vmatpush.bf16.msra.mxu0 %v691
    %2212 = vmatmul.bf16.gmra.mxu0 %v2164
    %v2213 = vpop.f32.mrf.mxu0
    %v2214 = vadd.f32 0.0, %v2213
    %v2215 = vpop.f32.mrf.mxu0
    %2216 = vdwg.mxu0
    %v2221 = vrot.slane %v2188, 6
    %v2222 = vrot.slane %v2201, 4
    %v2223 = vrot.slane %v2214, 2
    %v2224 = vsel %vm811, %v2175, %v2221
    %v2225 = vsel %vm813, %v2222, %v2223
    %v2226 = vsel %vm815, %v2224, %v2225
    %v2228 = vadd.f32 %v2163, %v2226
    %v2229 = vsub.f32 0.0, %v2228
    %v2230 = vmul.f32 %v2229, 1.442695
    %v2231 = vpow.pop %v2230
    %v2232 = vadd.f32 %v2231, 1.0
    %v2233 = vrcp.pop %v2232
    %v2235 = vrot.slane %v2228, 2
    %v2237 = vsub.f32 0.0, %v2235
    %v2238 = vmul.f32 %v2237, 1.442695
    %v2239 = vpow.pop %v2238
    %v2240 = vadd.f32 %v2239, 1.0
    %v2241 = vrcp.pop %v2240
    %v2242 = vrot.slane %v2228, 4
    %v2244 = vtanh.pop %v2242
    %v2245 = vrot.slane %v2228, 6
    %v2247 = vsub.f32 0.0, %v2245
    %v2248 = vmul.f32 %v2247, 1.442695
    %v2249 = vpow.pop %v2248
    %v2250 = vadd.f32 %v2249, 1.0
    %v2251 = vrcp.pop %v2250
    %v2252 = vmul.f32 %v2241, %v2160
    %v2253 = vmul.f32 %v2233, %v2244
    %v2254 = vadd.f32 %v2252, %v2253
    %v2255 = vtanh.pop %v2254
    %v2256 = vmul.f32 %v2251, %v2255
    %v2257 = vpack.c.bf16 %v2256, %v2256
    %v2258 = vld [vmem:[#allocation11] sm:$0xf]
    %v2259 = vld [vmem:[#allocation11 + $0x4] sm:$0xf]
    %v2260 = vld [vmem:[#allocation11 + $0x8] sm:$0xf]
    %v2261 = vld [vmem:[#allocation11 + $0xc] sm:$0xf]
    %v2262 = vld [vmem:[#allocation11 + $0x10] sm:$0xf]
    %v2263 = vld [vmem:[#allocation11 + $0x14] sm:$0xf]
    %v2264 = vld [vmem:[#allocation11 + $0x18] sm:$0xf]
    %v2265 = vld [vmem:[#allocation11 + $0x1c] sm:$0xf]
    %v2266 = vld [vmem:[#allocation11 + $0x20] sm:$0xf]
    %v2267 = vld [vmem:[#allocation11 + $0x24] sm:$0xf]
    %v2268 = vld [vmem:[#allocation11 + $0x28] sm:$0xf]
    %v2269 = vld [vmem:[#allocation11 + $0x2c] sm:$0xf]
    %v2270 = vld [vmem:[#allocation11 + $0x30] sm:$0xf]
    %v2271 = vld [vmem:[#allocation11 + $0x34] sm:$0xf]
    %v2272 = vld [vmem:[#allocation11 + $0x38] sm:$0xf]
    %v2273 = vld [vmem:[#allocation11 + $0x3c] sm:$0xf]
    %v2274 = vld [vmem:[#allocation13] sm:$0x1]
    %v2276 = vperm.slane %v2274, 0
    %v2294 = vunpack.c.l.b16 %v2258
    %v2295 = vunpack.c.l.b16 %v2259
    %v2296 = vunpack.c.l.b16 %v2260
    %v2297 = vunpack.c.l.b16 %v2261
    %v2298 = vunpack.c.l.b16 %v2262
    %v2299 = vunpack.c.l.b16 %v2263
    %v2300 = vunpack.c.l.b16 %v2264
    %v2301 = vunpack.c.l.b16 %v2265
    %v2302 = vunpack.c.l.b16 %v2266
    %v2303 = vunpack.c.l.b16 %v2267
    %v2304 = vunpack.c.l.b16 %v2268
    %v2305 = vunpack.c.l.b16 %v2269
    %v2306 = vunpack.c.l.b16 %v2270
    %v2307 = vunpack.c.l.b16 %v2271
    %v2308 = vunpack.c.l.b16 %v2272
    %v2309 = vunpack.c.l.b16 %v2273
    %v2310 = vpack.c.b16 %v2295, %v2294
    %v2311 = vpack.c.b16 %v2297, %v2296
    %v2312 = vpack.c.b16 %v2299, %v2298
    %v2313 = vpack.c.b16 %v2301, %v2300
    %v2314 = vpack.c.b16 %v2303, %v2302
    %v2315 = vpack.c.b16 %v2305, %v2304
    %v2316 = vpack.c.b16 %v2307, %v2306
    %v2317 = vpack.c.b16 %v2309, %v2308
    %2326 = vmatpush.bf16.msra.mxu0 %v2317
    %2327 = vmatpush.bf16.msra.mxu0 %v2316
    %2328 = vmatpush.bf16.msra.mxu0 %v2315
    %2329 = vmatpush.bf16.msra.mxu0 %v2314
    %2330 = vmatpush.bf16.msra.mxu0 %v2313
    %2331 = vmatpush.bf16.msra.mxu0 %v2312
    %2332 = vmatpush.bf16.msra.mxu0 %v2311
    %2333 = vmatpush.bf16.msra.mxu0 %v2310
    %2334 = vmatmul.bf16.gmra.mxu0 %v2257
    %v2335 = vpop.f32.mrf.mxu0
    %v2336 = vadd.f32 %v2276, %v2335
    %v2337 = vpop.f32.mrf.mxu0
    %2338 = vdwg.mxu0
    %v2339 = vlaneseq
    %v2340 = vand.u32 %v2339, 127
    %vm2341 = vcmp.lt.s32.totalorder %v2340, 4
    %v2342 = vsel %vm2341, %v2336, -1e+30
    %v2343 = vsel %vm811, %v2342, -inf
    %2344 = vmax.xlane.f32.xlu0 %v2343
    %v2345 = vpop.xlane.xlu0 %2344
    %v2346 = vsub.f32 %v2342, %v2345
    %v2347 = vmul.f32 %v2346, 1.442695
    %v2348 = vpow.pop %v2347
    %v2349 = vsel %vm811, %v2348, 0.0
    %2350 = vadd.xlane.f32.xlu0 %v2349
    %v2351 = vpop.xlane.xlu0 %2350
    %v2352 = vlog2.pop %v2351
    %v2353 = vmul.f32 %v2352, 0.6931472
    %v2354 = vsub.f32 %v2346, %v2353
    %2355 = vst [vmem:[#allocation14] sm:$0x3] %v2354
    // Predicated region
    $region42: #{smallchar_rnn_forward.1} parent=1 // pred_check
      _
    $region43: #{smallchar_rnn_forward.1} parent=1 // pred_check_branch
      %2357 = sbr.rel (0) target = $region45
    $region44: #{smallchar_rnn_forward.1} parent=1 // pred_region
      %2359 = vsyncadd [#allocation7], 0
      %s2361 = sshll.u32 [#allocation14], 4
      %s2362 = int_to_ptr.vmem [resolvable:$true] %s2361
      %s2363 = sshll.u32 %s6, 4
      %s2364 = int_to_ptr.hbm [resolvable:$true] %s2363
      %2366 = dma.vmem_to_hbm [thread:$0]  %s2362, 32, %s2364, [#allocation7]
    $region45: #{smallchar_rnn_forward.1} parent=1 // pred_fallthru
      _
    // Predicated region
    $region46: #{smallchar_rnn_forward.1} parent=1 // pred_check
      _
    $region47: #{smallchar_rnn_forward.1} parent=1 // pred_check_branch
      %2368 = sbr.rel (0) target = $region49
    $region48: #{smallchar_rnn_forward.1} parent=1 // pred_region
      %2370 = dma.done [#allocation7], 32
    $region49: #{smallchar_rnn_forward.1} parent=1 // pred_fallthru
      _
    %2371 = vsyncpa [#allocation6], 1
    %2372 = vsyncpa [#allocation9], 1
    %2373 = vsyncpa [#allocation12], 1
    %2374 = vsyncpa [#allocation7], 1

</llo_original>
